<compile_context>
chip_gen: v6e
topology: v6e:2x2x1
jax: 0.10.0
libtpu: 0.0.40
codegen_flags: <defaults>
</compile_context>

<pallas_src>
import jax
import jax.numpy as jnp
import numpy as np
from jax.experimental import pallas as pl
from jax.experimental.pallas import tpu as pltpu

EMBED_DIM = 300              # cin=300 is hard-coded in CNNClassifier.convLayer
KERNELS = (2, 3, 4)
COUTS = (100, 100, 100)
CPAD = 128                   # per-branch conv cout padded to a lane multiple
LANE = 128


def _round_up(x, m):
    return ((x + m - 1) // m) * m


def _choose_batch_tile(B, L):
    """Largest per-branch f32 intermediate is (TB, L, CPAD); keep it ~4 MiB so the
    full working set (x2 pipeline buffers + weights) fits v7x's 64 MiB VMEM."""
    budget_rows = max(8, (4 * 1024 * 1024) // (max(L, 1) * CPAD * 4))
    tb = min(128, budget_rows)
    tb = max(8, (tb // 8) * 8)
    return B if B <= tb else tb


def _cnn_kernel(emb_ref,
                w2_ref, b2_ref, w3_ref, b3_ref, w4_ref, b4_ref,
                wfc2_ref, wfc3_ref, wfc4_ref, bfc_ref,
                out_ref):
    """One batch tile:
       per branch: Conv1d (sum of k shifted matmuls) -> global max-pool -> +bias -> ReLU
       then: accumulate per-branch fc matmuls into the (padded) logits."""
    L = emb_ref.shape[1]
    branches = ((w2_ref, b2_ref, wfc2_ref),
                (w3_ref, b3_ref, wfc3_ref),
                (w4_ref, b4_ref, wfc4_ref))

    logits = None
    for w_ref, b_ref, wfc_ref in branches:
        k = w_ref.shape[0]
        T = L - k + 1
        s = None
        for dk in range(k):                       # Conv1d == sum over taps of shifted matmuls
            x = emb_ref[:, dk:dk + T, :]          # (TB, T, D) bf16
            contrib = jax.lax.dot_general(
                x, w_ref[dk],                     # (D, CPAD) bf16
                (((2,), (0,)), ((), ())),
                preferred_element_type=jnp.float32)   # (TB, T, CPAD) f32 accumulation
            s = contrib if s is None else s + contrib
        # bias is constant over T, so it commutes with AdaptiveMaxPool1d(1)
        p = jnp.max(s, axis=1) + b_ref[...]       # (TB, CPAD)
        p = jnp.maximum(p, 0.0)                   # branch ReLU (fc ReLU is then redundant)
        part = jnp.dot(p, wfc_ref[...], preferred_element_type=jnp.float32)
        logits = part if logits is None else logits + part

    out_ref[...] = (logits + bfc_ref[...]).astype(out_ref.dtype)


def cnn_classifier_forward(x, params, compute_dtype=jnp.bfloat16):
    """x: (B, L) int32 token ids.  Returns logits (B, num_class) float32."""
    emb_table = params["embeddings"].astype(compute_dtype)     # cast before gather: half HBM
    emb = jnp.take(emb_table, x, axis=0)                       # (B, L, D) bf16 -- gather glue
    B, L, D = emb.shape
    assert D == EMBED_DIM

    num_class = params["fc_b"].shape[0]
    ncpad = _round_up(num_class, LANE)

    # ---- weight prep (one-time XLA glue) ----
    conv_w, conv_b = [], []
    for k, cout in zip(KERNELS, COUTS):
        Wc = params[f"conv{k}_w"]                              # torch layout (cout, cin, k)
        Wt = jnp.transpose(Wc, (2, 1, 0))                      # (k, cin, cout): W[dk, ci, co]
        Wt = jnp.pad(Wt, ((0, 0), (0, 0), (0, CPAD - cout)))   # pad cout 100 -> 128
        conv_w.append(Wt.astype(compute_dtype))
        conv_b.append(jnp.pad(params[f"conv{k}_b"], (0, CPAD - cout))
                      .reshape(1, CPAD).astype(jnp.float32))

    # fc = Dropout -> ReLU -> Linear ; dropout is identity at inference.
    # TODO(synk): training-time dropout (random masking) not implemented in-kernel.
    fc_w = params["fc_w"]                                      # (num_class, sum(couts))
    wfc_slabs, off = [], 0
    for cout in COUTS:                                         # split fc into per-branch slabs
        slab = fc_w[:, off:off + cout].T                       # (cout, num_class)
        slab = jnp.pad(slab, ((0, CPAD - cout), (0, ncpad - num_class)))
        wfc_slabs.append(slab.astype(jnp.float32))
        off += cout
    bfc = jnp.pad(params["fc_b"], (0, ncpad - num_class)).reshape(1, ncpad).astype(jnp.float32)

    # ---- batch tiling ----
    tb = _choose_batch_tile(B, L)
    b_pad = _round_up(B, tb)
    if b_pad != B:
        emb = jnp.pad(emb, ((0, b_pad - B), (0, 0), (0, 0)))
    grid = (b_pad // tb,)

    def full(shape):
        return pl.BlockSpec(shape, lambda i, _s=len(shape): (0,) * _s)

    out = pl.pallas_call(
        _cnn_kernel,
        out_shape=jax.ShapeDtypeStruct((b_pad, ncpad), jnp.float32),
        grid=grid,
        in_specs=[
            pl.BlockSpec((tb, L, D), lambda i: (i, 0, 0)),     # emb batch tile (pipelined)
            full((2, D, CPAD)), full((1, CPAD)),               # conv k=2
            full((3, D, CPAD)), full((1, CPAD)),               # conv k=3
            full((4, D, CPAD)), full((1, CPAD)),               # conv k=4
            full((CPAD, ncpad)), full((CPAD, ncpad)), full((CPAD, ncpad)),  # fc slabs
            full((1, ncpad)),                                   # fc bias
        ],
        out_specs=pl.BlockSpec((tb, ncpad), lambda i: (i, 0)),  # lane-dense output block
        compiler_params=pltpu.CompilerParams(
            dimension_semantics=("parallel",),                  # shard batch across TCs (v7x)
            vmem_limit_bytes=48 * 1024 * 1024,                  # headroom under v7x's 64 MiB
        ),
    )(emb,
      conv_w[0], conv_b[0], conv_w[1], conv_b[1], conv_w[2], conv_b[2],
      wfc_slabs[0], wfc_slabs[1], wfc_slabs[2], bfc)

    return out[:B, :num_class]


def _reference_forward(x, params, compute_dtype=jnp.bfloat16):
    """Pure-JAX replica of the PyTorch forward (NCW conv), mirroring the kernel's
    bf16 rounding of embeddings / conv weights (f32 accumulation)."""
    emb = jnp.take(params["embeddings"], x, axis=0)
    emb = emb.astype(compute_dtype).astype(jnp.float32)        # mirror kernel input rounding
    embT = jnp.transpose(emb, (0, 2, 1))                       # (B, D, L) == permute(0,2,1)
    outs = []
    for k in KERNELS:
        W = params[f"conv{k}_w"].astype(compute_dtype).astype(jnp.float32)
        b = params[f"conv{k}_b"]
        y = jax.lax.conv_general_dilated(
            embT, W, window_strides=(1,), padding="VALID",
            dimension_numbers=("NCH", "OIH", "NCH"),
            precision=jax.lax.Precision.HIGHEST)               # (B, cout, L-k+1)
        y = y + b[None, :, None]
        y = jnp.max(y, axis=-1)                                # AdaptiveMaxPool1d(1).squeeze
        outs.append(jnp.maximum(y, 0.0))                       # branch ReLU
    feat = jnp.concatenate(outs, axis=1)                       # (B, 300)
    feat = jnp.maximum(feat, 0.0)                              # fc ReLU (dropout = identity)
    return jnp.dot(feat, params["fc_w"].T,
                   precision=jax.lax.Precision.HIGHEST) + params["fc_b"]


def make_params(key, vocab, num_class):
    keys = jax.random.split(key, 16)
    params = {"embeddings": jax.random.normal(keys[0], (vocab, EMBED_DIM), jnp.float32)}
    for i, (k, cout) in enumerate(zip(KERNELS, COUTS)):
        params[f"conv{k}_w"] = 0.05 * jax.random.normal(
            keys[1 + 2 * i], (cout, EMBED_DIM, k), jnp.float32)
        params[f"conv{k}_b"] = 0.05 * jax.random.normal(
            keys[2 + 2 * i], (cout,), jnp.float32)
    params["fc_w"] = 0.05 * jax.random.normal(keys[10], (num_class, sum(COUTS)), jnp.float32)
    params["fc_b"] = 0.05 * jax.random.normal(keys[11], (num_class,), jnp.float32)
    return params


if __name__ == "__main__":
    B, L, VOCAB, NUM_CLASS = 2, 8, 50, 5
    key = jax.random.PRNGKey(0)
    k_par, k_x = jax.random.split(key)
    params = make_params(k_par, VOCAB, NUM_CLASS)
    x = jax.random.randint(k_x, (B, L), 0, VOCAB, dtype=jnp.int32)

    logits = jax.block_until_ready(cnn_classifier_forward(x, params))
    ref = jax.block_until_ready(_reference_forward(x, params))

    assert logits.shape == (B, NUM_CLASS)
    np.testing.assert_allclose(np.asarray(logits), np.asarray(ref), rtol=1e-3, atol=1e-3)
    print("KERNEL_OK")
</pallas_src>

<mosaic_0001>
module attributes {stable_mosaic.version = 11 : i64} {
  func.func @_cnn_kernel(%arg0: i32, %arg1: memref<2x8x300xbf16, #tpu.memory_space<vmem>>, %arg2: memref<2x300x128xbf16, #tpu.memory_space<vmem>>, %arg3: memref<1x128xf32, #tpu.memory_space<vmem>>, %arg4: memref<3x300x128xbf16, #tpu.memory_space<vmem>>, %arg5: memref<1x128xf32, #tpu.memory_space<vmem>>, %arg6: memref<4x300x128xbf16, #tpu.memory_space<vmem>>, %arg7: memref<1x128xf32, #tpu.memory_space<vmem>>, %arg8: memref<128x128xf32, #tpu.memory_space<vmem>>, %arg9: memref<128x128xf32, #tpu.memory_space<vmem>>, %arg10: memref<128x128xf32, #tpu.memory_space<vmem>>, %arg11: memref<1x128xf32, #tpu.memory_space<vmem>>, %arg12: memref<2x128xf32, #tpu.memory_space<vmem>>) attributes {dimension_semantics = [#tpu.dimension_semantics<parallel>], iteration_bounds = array<i64: 1>, scalar_prefetch = 0 : i64, scratch_operands = 0 : i64, tpu.core_type = #tpu.core_type<tc>, window_params = [{transform_indices = @transform_0, window_bounds = array<i64: 2, 8, 300>}, {pipeline_mode = #tpu.pipeline_mode<synchronous>, transform_indices = @transform_1, window_bounds = array<i64: 2, 300, 128>}, {pipeline_mode = #tpu.pipeline_mode<synchronous>, transform_indices = @transform_2, window_bounds = array<i64: 1, 128>}, {pipeline_mode = #tpu.pipeline_mode<synchronous>, transform_indices = @transform_3, window_bounds = array<i64: 3, 300, 128>}, {pipeline_mode = #tpu.pipeline_mode<synchronous>, transform_indices = @transform_4, window_bounds = array<i64: 1, 128>}, {pipeline_mode = #tpu.pipeline_mode<synchronous>, transform_indices = @transform_5, window_bounds = array<i64: 4, 300, 128>}, {pipeline_mode = #tpu.pipeline_mode<synchronous>, transform_indices = @transform_6, window_bounds = array<i64: 1, 128>}, {pipeline_mode = #tpu.pipeline_mode<synchronous>, transform_indices = @transform_7, window_bounds = array<i64: 128, 128>}, {pipeline_mode = #tpu.pipeline_mode<synchronous>, transform_indices = @transform_8, window_bounds = array<i64: 128, 128>}, {pipeline_mode = #tpu.pipeline_mode<synchronous>, transform_indices = @transform_9, window_bounds = array<i64: 128, 128>}, {pipeline_mode = #tpu.pipeline_mode<synchronous>, transform_indices = @transform_10, window_bounds = array<i64: 1, 128>}, {transform_indices = @transform_11, window_bounds = array<i64: 2, 128>}]} {
    %c0 = arith.constant 0 : index
    %c0_0 = arith.constant 0 : index
    %c0_1 = arith.constant 0 : index
    %0 = vector.load %arg1[%c0, %c0_0, %c0_1] : memref<2x8x300xbf16, #tpu.memory_space<vmem>>, vector<2x7x300xbf16>
    %c0_2 = arith.constant 0 : index
    %c0_3 = arith.constant 0 : index
    %c0_4 = arith.constant 0 : index
    %1 = vector.load %arg2[%c0_2, %c0_3, %c0_4] : memref<2x300x128xbf16, #tpu.memory_space<vmem>>, vector<1x300x128xbf16>
    %2 = vector.shape_cast %1 : vector<1x300x128xbf16> to vector<300x128xbf16>
    %cst = arith.constant dense<0.000000e+00> : vector<2x7x128xf32>
    %3 = tpu.matmul %0, %2, %cst {dimension_numbers = #tpu.dot_dimension_numbers<[2], [0], [0, 1], [1], [0, 0, 0, 1, 1, 1], [], []>} : vector<2x7x300xbf16>, vector<300x128xbf16>, vector<2x7x128xf32> -> vector<2x7x128xf32>
    %c0_5 = arith.constant 0 : index
    %c1 = arith.constant 1 : index
    %c0_6 = arith.constant 0 : index
    %4 = vector.load %arg1[%c0_5, %c1, %c0_6] : memref<2x8x300xbf16, #tpu.memory_space<vmem>>, vector<2x7x300xbf16>
    %c1_7 = arith.constant 1 : index
    %c0_8 = arith.constant 0 : index
    %c0_9 = arith.constant 0 : index
    %5 = vector.load %arg2[%c1_7, %c0_8, %c0_9] : memref<2x300x128xbf16, #tpu.memory_space<vmem>>, vector<1x300x128xbf16>
    %6 = vector.shape_cast %5 : vector<1x300x128xbf16> to vector<300x128xbf16>
    %cst_10 = arith.constant dense<0.000000e+00> : vector<2x7x128xf32>
    %7 = tpu.matmul %4, %6, %cst_10 {dimension_numbers = #tpu.dot_dimension_numbers<[2], [0], [0, 1], [1], [0, 0, 0, 1, 1, 1], [], []>} : vector<2x7x300xbf16>, vector<300x128xbf16>, vector<2x7x128xf32> -> vector<2x7x128xf32>
    %8 = arith.addf %3, %7 : vector<2x7x128xf32>
    %cst_11 = arith.constant dense<0xFF800000> : vector<2x128xf32>
    %9 = vector.multi_reduction <maximumf>, %8, %cst_11 [1] : vector<2x7x128xf32> to vector<2x128xf32>
    %c0_12 = arith.constant 0 : index
    %c0_13 = arith.constant 0 : index
    %10 = vector.load %arg3[%c0_12, %c0_13] : memref<1x128xf32, #tpu.memory_space<vmem>>, vector<1x128xf32>
    %11 = vector.broadcast %10 : vector<1x128xf32> to vector<2x128xf32>
    %12 = arith.addf %9, %11 : vector<2x128xf32>
    %cst_14 = arith.constant 0.000000e+00 : f32
    %13 = vector.broadcast %cst_14 : f32 to vector<2x128xf32>
    %14 = arith.maximumf %12, %13 : vector<2x128xf32>
    %c0_15 = arith.constant 0 : index
    %c0_16 = arith.constant 0 : index
    %15 = vector.load %arg8[%c0_15, %c0_16] : memref<128x128xf32, #tpu.memory_space<vmem>>, vector<128x128xf32>
    %cst_17 = arith.constant dense<0.000000e+00> : vector<2x128xf32>
    %16 = tpu.matmul %14, %15, %cst_17 {dimension_numbers = #tpu.dot_dimension_numbers<[1], [0], [0], [1], [0, 0, 1, 1], [], []>} : vector<2x128xf32>, vector<128x128xf32>, vector<2x128xf32> -> vector<2x128xf32>
    %c0_18 = arith.constant 0 : index
    %c0_19 = arith.constant 0 : index
    %c0_20 = arith.constant 0 : index
    %17 = vector.load %arg1[%c0_18, %c0_19, %c0_20] : memref<2x8x300xbf16, #tpu.memory_space<vmem>>, vector<2x6x300xbf16>
    %c0_21 = arith.constant 0 : index
    %c0_22 = arith.constant 0 : index
    %c0_23 = arith.constant 0 : index
    %18 = vector.load %arg4[%c0_21, %c0_22, %c0_23] : memref<3x300x128xbf16, #tpu.memory_space<vmem>>, vector<1x300x128xbf16>
    %19 = vector.shape_cast %18 : vector<1x300x128xbf16> to vector<300x128xbf16>
    %cst_24 = arith.constant dense<0.000000e+00> : vector<2x6x128xf32>
    %20 = tpu.matmul %17, %19, %cst_24 {dimension_numbers = #tpu.dot_dimension_numbers<[2], [0], [0, 1], [1], [0, 0, 0, 1, 1, 1], [], []>} : vector<2x6x300xbf16>, vector<300x128xbf16>, vector<2x6x128xf32> -> vector<2x6x128xf32>
    %c0_25 = arith.constant 0 : index
    %c1_26 = arith.constant 1 : index
    %c0_27 = arith.constant 0 : index
    %21 = vector.load %arg1[%c0_25, %c1_26, %c0_27] : memref<2x8x300xbf16, #tpu.memory_space<vmem>>, vector<2x6x300xbf16>
    %c1_28 = arith.constant 1 : index
    %c0_29 = arith.constant 0 : index
    %c0_30 = arith.constant 0 : index
    %22 = vector.load %arg4[%c1_28, %c0_29, %c0_30] : memref<3x300x128xbf16, #tpu.memory_space<vmem>>, vector<1x300x128xbf16>
    %23 = vector.shape_cast %22 : vector<1x300x128xbf16> to vector<300x128xbf16>
    %cst_31 = arith.constant dense<0.000000e+00> : vector<2x6x128xf32>
    %24 = tpu.matmul %21, %23, %cst_31 {dimension_numbers = #tpu.dot_dimension_numbers<[2], [0], [0, 1], [1], [0, 0, 0, 1, 1, 1], [], []>} : vector<2x6x300xbf16>, vector<300x128xbf16>, vector<2x6x128xf32> -> vector<2x6x128xf32>
    %25 = arith.addf %20, %24 : vector<2x6x128xf32>
    %c0_32 = arith.constant 0 : index
    %c2 = arith.constant 2 : index
    %c0_33 = arith.constant 0 : index
    %26 = vector.load %arg1[%c0_32, %c2, %c0_33] : memref<2x8x300xbf16, #tpu.memory_space<vmem>>, vector<2x6x300xbf16>
    %c2_34 = arith.constant 2 : index
    %c0_35 = arith.constant 0 : index
    %c0_36 = arith.constant 0 : index
    %27 = vector.load %arg4[%c2_34, %c0_35, %c0_36] : memref<3x300x128xbf16, #tpu.memory_space<vmem>>, vector<1x300x128xbf16>
    %28 = vector.shape_cast %27 : vector<1x300x128xbf16> to vector<300x128xbf16>
    %cst_37 = arith.constant dense<0.000000e+00> : vector<2x6x128xf32>
    %29 = tpu.matmul %26, %28, %cst_37 {dimension_numbers = #tpu.dot_dimension_numbers<[2], [0], [0, 1], [1], [0, 0, 0, 1, 1, 1], [], []>} : vector<2x6x300xbf16>, vector<300x128xbf16>, vector<2x6x128xf32> -> vector<2x6x128xf32>
    %30 = arith.addf %25, %29 : vector<2x6x128xf32>
    %cst_38 = arith.constant dense<0xFF800000> : vector<2x128xf32>
    %31 = vector.multi_reduction <maximumf>, %30, %cst_38 [1] : vector<2x6x128xf32> to vector<2x128xf32>
    %c0_39 = arith.constant 0 : index
    %c0_40 = arith.constant 0 : index
    %32 = vector.load %arg5[%c0_39, %c0_40] : memref<1x128xf32, #tpu.memory_space<vmem>>, vector<1x128xf32>
    %33 = vector.broadcast %32 : vector<1x128xf32> to vector<2x128xf32>
    %34 = arith.addf %31, %33 : vector<2x128xf32>
    %cst_41 = arith.constant 0.000000e+00 : f32
    %35 = vector.broadcast %cst_41 : f32 to vector<2x128xf32>
    %36 = arith.maximumf %34, %35 : vector<2x128xf32>
    %c0_42 = arith.constant 0 : index
    %c0_43 = arith.constant 0 : index
    %37 = vector.load %arg9[%c0_42, %c0_43] : memref<128x128xf32, #tpu.memory_space<vmem>>, vector<128x128xf32>
    %cst_44 = arith.constant dense<0.000000e+00> : vector<2x128xf32>
    %38 = tpu.matmul %36, %37, %cst_44 {dimension_numbers = #tpu.dot_dimension_numbers<[1], [0], [0], [1], [0, 0, 1, 1], [], []>} : vector<2x128xf32>, vector<128x128xf32>, vector<2x128xf32> -> vector<2x128xf32>
    %39 = arith.addf %16, %38 : vector<2x128xf32>
    %c0_45 = arith.constant 0 : index
    %c0_46 = arith.constant 0 : index
    %c0_47 = arith.constant 0 : index
    %40 = vector.load %arg1[%c0_45, %c0_46, %c0_47] : memref<2x8x300xbf16, #tpu.memory_space<vmem>>, vector<2x5x300xbf16>
    %c0_48 = arith.constant 0 : index
    %c0_49 = arith.constant 0 : index
    %c0_50 = arith.constant 0 : index
    %41 = vector.load %arg6[%c0_48, %c0_49, %c0_50] : memref<4x300x128xbf16, #tpu.memory_space<vmem>>, vector<1x300x128xbf16>
    %42 = vector.shape_cast %41 : vector<1x300x128xbf16> to vector<300x128xbf16>
    %cst_51 = arith.constant dense<0.000000e+00> : vector<2x5x128xf32>
    %43 = tpu.matmul %40, %42, %cst_51 {dimension_numbers = #tpu.dot_dimension_numbers<[2], [0], [0, 1], [1], [0, 0, 0, 1, 1, 1], [], []>} : vector<2x5x300xbf16>, vector<300x128xbf16>, vector<2x5x128xf32> -> vector<2x5x128xf32>
    %c0_52 = arith.constant 0 : index
    %c1_53 = arith.constant 1 : index
    %c0_54 = arith.constant 0 : index
    %44 = vector.load %arg1[%c0_52, %c1_53, %c0_54] : memref<2x8x300xbf16, #tpu.memory_space<vmem>>, vector<2x5x300xbf16>
    %c1_55 = arith.constant 1 : index
    %c0_56 = arith.constant 0 : index
    %c0_57 = arith.constant 0 : index
    %45 = vector.load %arg6[%c1_55, %c0_56, %c0_57] : memref<4x300x128xbf16, #tpu.memory_space<vmem>>, vector<1x300x128xbf16>
    %46 = vector.shape_cast %45 : vector<1x300x128xbf16> to vector<300x128xbf16>
    %cst_58 = arith.constant dense<0.000000e+00> : vector<2x5x128xf32>
    %47 = tpu.matmul %44, %46, %cst_58 {dimension_numbers = #tpu.dot_dimension_numbers<[2], [0], [0, 1], [1], [0, 0, 0, 1, 1, 1], [], []>} : vector<2x5x300xbf16>, vector<300x128xbf16>, vector<2x5x128xf32> -> vector<2x5x128xf32>
    %48 = arith.addf %43, %47 : vector<2x5x128xf32>
    %c0_59 = arith.constant 0 : index
    %c2_60 = arith.constant 2 : index
    %c0_61 = arith.constant 0 : index
    %49 = vector.load %arg1[%c0_59, %c2_60, %c0_61] : memref<2x8x300xbf16, #tpu.memory_space<vmem>>, vector<2x5x300xbf16>
    %c2_62 = arith.constant 2 : index
    %c0_63 = arith.constant 0 : index
    %c0_64 = arith.constant 0 : index
    %50 = vector.load %arg6[%c2_62, %c0_63, %c0_64] : memref<4x300x128xbf16, #tpu.memory_space<vmem>>, vector<1x300x128xbf16>
    %51 = vector.shape_cast %50 : vector<1x300x128xbf16> to vector<300x128xbf16>
    %cst_65 = arith.constant dense<0.000000e+00> : vector<2x5x128xf32>
    %52 = tpu.matmul %49, %51, %cst_65 {dimension_numbers = #tpu.dot_dimension_numbers<[2], [0], [0, 1], [1], [0, 0, 0, 1, 1, 1], [], []>} : vector<2x5x300xbf16>, vector<300x128xbf16>, vector<2x5x128xf32> -> vector<2x5x128xf32>
    %53 = arith.addf %48, %52 : vector<2x5x128xf32>
    %c0_66 = arith.constant 0 : index
    %c3 = arith.constant 3 : index
    %c0_67 = arith.constant 0 : index
    %54 = vector.load %arg1[%c0_66, %c3, %c0_67] : memref<2x8x300xbf16, #tpu.memory_space<vmem>>, vector<2x5x300xbf16>
    %c3_68 = arith.constant 3 : index
    %c0_69 = arith.constant 0 : index
    %c0_70 = arith.constant 0 : index
    %55 = vector.load %arg6[%c3_68, %c0_69, %c0_70] : memref<4x300x128xbf16, #tpu.memory_space<vmem>>, vector<1x300x128xbf16>
    %56 = vector.shape_cast %55 : vector<1x300x128xbf16> to vector<300x128xbf16>
    %cst_71 = arith.constant dense<0.000000e+00> : vector<2x5x128xf32>
    %57 = tpu.matmul %54, %56, %cst_71 {dimension_numbers = #tpu.dot_dimension_numbers<[2], [0], [0, 1], [1], [0, 0, 0, 1, 1, 1], [], []>} : vector<2x5x300xbf16>, vector<300x128xbf16>, vector<2x5x128xf32> -> vector<2x5x128xf32>
    %58 = arith.addf %53, %57 : vector<2x5x128xf32>
    %cst_72 = arith.constant dense<0xFF800000> : vector<2x128xf32>
    %59 = vector.multi_reduction <maximumf>, %58, %cst_72 [1] : vector<2x5x128xf32> to vector<2x128xf32>
    %c0_73 = arith.constant 0 : index
    %c0_74 = arith.constant 0 : index
    %60 = vector.load %arg7[%c0_73, %c0_74] : memref<1x128xf32, #tpu.memory_space<vmem>>, vector<1x128xf32>
    %61 = vector.broadcast %60 : vector<1x128xf32> to vector<2x128xf32>
    %62 = arith.addf %59, %61 : vector<2x128xf32>
    %cst_75 = arith.constant 0.000000e+00 : f32
    %63 = vector.broadcast %cst_75 : f32 to vector<2x128xf32>
    %64 = arith.maximumf %62, %63 : vector<2x128xf32>
    %c0_76 = arith.constant 0 : index
    %c0_77 = arith.constant 0 : index
    %65 = vector.load %arg10[%c0_76, %c0_77] : memref<128x128xf32, #tpu.memory_space<vmem>>, vector<128x128xf32>
    %cst_78 = arith.constant dense<0.000000e+00> : vector<2x128xf32>
    %66 = tpu.matmul %64, %65, %cst_78 {dimension_numbers = #tpu.dot_dimension_numbers<[1], [0], [0], [1], [0, 0, 1, 1], [], []>} : vector<2x128xf32>, vector<128x128xf32>, vector<2x128xf32> -> vector<2x128xf32>
    %67 = arith.addf %39, %66 : vector<2x128xf32>
    %c0_79 = arith.constant 0 : index
    %c0_80 = arith.constant 0 : index
    %68 = vector.load %arg11[%c0_79, %c0_80] : memref<1x128xf32, #tpu.memory_space<vmem>>, vector<1x128xf32>
    %69 = vector.broadcast %68 : vector<1x128xf32> to vector<2x128xf32>
    %70 = arith.addf %67, %69 : vector<2x128xf32>
    %c0_81 = arith.constant 0 : index
    %c0_82 = arith.constant 0 : index
    %71 = vector.load %arg12[%c0_81, %c0_82] : memref<2x128xf32, #tpu.memory_space<vmem>>, vector<2x128xf32>
    tpu.vector_store %arg12[%c0_81, %c0_82], %70 {strides = array<i32>} : memref<2x128xf32, #tpu.memory_space<vmem>>, vector<2x128xf32>,
    return
  }
  func.func @transform_0(%arg0: i32) -> (i32, i32, i32) {
    %c0_i32 = arith.constant 0 : i32
    %c0_i32_0 = arith.constant 0 : i32
    %c0_i32_1 = arith.constant 0 : i32
    return %arg0, %c0_i32, %c0_i32_0 : i32, i32, i32
  }
  func.func @transform_1(%arg0: i32) -> (i32, i32, i32) {
    %c0_i32 = arith.constant 0 : i32
    %c0_i32_0 = arith.constant 0 : i32
    %c0_i32_1 = arith.constant 0 : i32
    %c0_i32_2 = arith.constant 0 : i32
    return %c0_i32, %c0_i32_0, %c0_i32_1 : i32, i32, i32
  }
  func.func @transform_2(%arg0: i32) -> (i32, i32) {
    %c0_i32 = arith.constant 0 : i32
    %c0_i32_0 = arith.constant 0 : i32
    %c0_i32_1 = arith.constant 0 : i32
    return %c0_i32, %c0_i32_0 : i32, i32
  }
  func.func @transform_3(%arg0: i32) -> (i32, i32, i32) {
    %c0_i32 = arith.constant 0 : i32
    %c0_i32_0 = arith.constant 0 : i32
    %c0_i32_1 = arith.constant 0 : i32
    %c0_i32_2 = arith.constant 0 : i32
    return %c0_i32, %c0_i32_0, %c0_i32_1 : i32, i32, i32
  }
  func.func @transform_4(%arg0: i32) -> (i32, i32) {
    %c0_i32 = arith.constant 0 : i32
    %c0_i32_0 = arith.constant 0 : i32
    %c0_i32_1 = arith.constant 0 : i32
    return %c0_i32, %c0_i32_0 : i32, i32
  }
  func.func @transform_5(%arg0: i32) -> (i32, i32, i32) {
    %c0_i32 = arith.constant 0 : i32
    %c0_i32_0 = arith.constant 0 : i32
    %c0_i32_1 = arith.constant 0 : i32
    %c0_i32_2 = arith.constant 0 : i32
    return %c0_i32, %c0_i32_0, %c0_i32_1 : i32, i32, i32
  }
  func.func @transform_6(%arg0: i32) -> (i32, i32) {
    %c0_i32 = arith.constant 0 : i32
    %c0_i32_0 = arith.constant 0 : i32
    %c0_i32_1 = arith.constant 0 : i32
    return %c0_i32, %c0_i32_0 : i32, i32
  }
  func.func @transform_7(%arg0: i32) -> (i32, i32) {
    %c0_i32 = arith.constant 0 : i32
    %c0_i32_0 = arith.constant 0 : i32
    %c0_i32_1 = arith.constant 0 : i32
    return %c0_i32, %c0_i32_0 : i32, i32
  }
  func.func @transform_8(%arg0: i32) -> (i32, i32) {
    %c0_i32 = arith.constant 0 : i32
    %c0_i32_0 = arith.constant 0 : i32
    %c0_i32_1 = arith.constant 0 : i32
    return %c0_i32, %c0_i32_0 : i32, i32
  }
  func.func @transform_9(%arg0: i32) -> (i32, i32) {
    %c0_i32 = arith.constant 0 : i32
    %c0_i32_0 = arith.constant 0 : i32
    %c0_i32_1 = arith.constant 0 : i32
    return %c0_i32, %c0_i32_0 : i32, i32
  }
  func.func @transform_10(%arg0: i32) -> (i32, i32) {
    %c0_i32 = arith.constant 0 : i32
    %c0_i32_0 = arith.constant 0 : i32
    %c0_i32_1 = arith.constant 0 : i32
    return %c0_i32, %c0_i32_0 : i32, i32
  }
  func.func @transform_11(%arg0: i32) -> (i32, i32) {
    %c0_i32 = arith.constant 0 : i32
    %c0_i32_0 = arith.constant 0 : i32
    return %arg0, %c0_i32 : i32, i32
  }
}

</mosaic_0001>

<llo_original>
// kernel: tpu_custom_call.1
$region0: #{tpu_custom_call.1}
  #allocation0 [shape = 'u32[]', space=smem, size = 0x4, offset = 0x4, fixed_abs, tag = 'smem constant byte address 0x4 - core index']
  #allocation1 [shape = 'u32[144,128]{1,0:T(1,128)}', space=vmem, size = 0x12000, scoped, tag = 'internal scratch']
  %s0 = inlined_call_operand.vmem [shape: bf16[2,8,300], index: 0, kind: input, shape index: {}]
  %s1 = inlined_call_operand.vmem [shape: bf16[2,300,128], index: 1, kind: input, shape index: {}]
  %s2 = inlined_call_operand.vmem [shape: f32[1,128], index: 2, kind: input, shape index: {}]
  %s3 = inlined_call_operand.vmem [shape: bf16[3,300,128], index: 3, kind: input, shape index: {}]
  %s4 = inlined_call_operand.vmem [shape: f32[1,128], index: 4, kind: input, shape index: {}]
  %s5 = inlined_call_operand.vmem [shape: bf16[4,300,128], index: 5, kind: input, shape index: {}]
  %s6 = inlined_call_operand.vmem [shape: f32[1,128], index: 6, kind: input, shape index: {}]
  %s7 = inlined_call_operand.vmem [shape: f32[128,128], index: 7, kind: input, shape index: {}]
  %s8 = inlined_call_operand.vmem [shape: f32[128,128], index: 8, kind: input, shape index: {}]
  %s9 = inlined_call_operand.vmem [shape: f32[128,128], index: 9, kind: input, shape index: {}]
  %s10 = inlined_call_operand.vmem [shape: f32[1,128], index: 10, kind: input, shape index: {}]
  %s11 = inlined_call_operand.hbm [shape: f32[2,128], index: 11, kind: output, shape index: {}]
  %s12 = sld [smem:[#allocation0]]
  $region54: #{tpu_custom_call.1} parent=0
    _
  %s14 = ssub.s32 1, %s12
  %s15 = scalar_select 0, %s14, %s12
  $region1: #{tpu_custom_call.1} parent=0
    #allocation2 [shape = 'u8[1024]{0}', space=vmem, size = 0x400, scoped, tag = 'output window, operand 0, single buffered']
    #allocation3 [shape = 's32[1]{0}', space=sflag, size = 0x4, scoped, tag = 'scoped memory for tpu_custom_call.1']
    %16 = vsyncpa [#allocation3], 0
    // Predicated region
    $region2: #{tpu_custom_call.1} parent=1 // pred_check
      _
    $region3: #{tpu_custom_call.1} parent=1 // pred_check_branch
      %18 = sbr.rel (0) target = $region5
    $region4: #{tpu_custom_call.1} parent=1 // pred_region
      _
    $region5: #{tpu_custom_call.1} parent=1 // pred_fallthru
      _
    // Predicated region
    $region6: #{tpu_custom_call.1} parent=1 // pred_check
      _
    $region7: #{tpu_custom_call.1} parent=1 // pred_check_branch
      %20 = sbr.rel (0) target = $region9
    $region8: #{tpu_custom_call.1} parent=1 // pred_region
      _
    $region9: #{tpu_custom_call.1} parent=1 // pred_fallthru
      _
    // Predicated region
    $region10: #{tpu_custom_call.1} parent=1 // pred_check
      _
    $region11: #{tpu_custom_call.1} parent=1 // pred_check_branch
      %22 = sbr.rel (0) target = $region13
    $region12: #{tpu_custom_call.1} parent=1 // pred_region
      _
    $region13: #{tpu_custom_call.1} parent=1 // pred_fallthru
      _
    // Predicated region
    $region14: #{tpu_custom_call.1} parent=1 // pred_check
      _
    $region15: #{tpu_custom_call.1} parent=1 // pred_check_branch
      %24 = sbr.rel (0) target = $region17
    $region16: #{tpu_custom_call.1} parent=1 // pred_region
      _
    $region17: #{tpu_custom_call.1} parent=1 // pred_fallthru
      _
    // Predicated region
    $region18: #{tpu_custom_call.1} parent=1 // pred_check
      _
    $region19: #{tpu_custom_call.1} parent=1 // pred_check_branch
      %26 = sbr.rel (0) target = $region21
    $region20: #{tpu_custom_call.1} parent=1 // pred_region
      _
    $region21: #{tpu_custom_call.1} parent=1 // pred_fallthru
      _
    // Predicated region
    $region22: #{tpu_custom_call.1} parent=1 // pred_check
      _
    $region23: #{tpu_custom_call.1} parent=1 // pred_check_branch
      %28 = sbr.rel (0) target = $region25
    $region24: #{tpu_custom_call.1} parent=1 // pred_region
      _
    $region25: #{tpu_custom_call.1} parent=1 // pred_fallthru
      _
    // Predicated region
    $region26: #{tpu_custom_call.1} parent=1 // pred_check
      _
    $region27: #{tpu_custom_call.1} parent=1 // pred_check_branch
      %30 = sbr.rel (0) target = $region29
    $region28: #{tpu_custom_call.1} parent=1 // pred_region
      _
    $region29: #{tpu_custom_call.1} parent=1 // pred_fallthru
      _
    // Predicated region
    $region30: #{tpu_custom_call.1} parent=1 // pred_check
      _
    $region31: #{tpu_custom_call.1} parent=1 // pred_check_branch
      %32 = sbr.rel (0) target = $region33
    $region32: #{tpu_custom_call.1} parent=1 // pred_region
      _
    $region33: #{tpu_custom_call.1} parent=1 // pred_fallthru
      _
    // Predicated region
    $region34: #{tpu_custom_call.1} parent=1 // pred_check
      _
    $region35: #{tpu_custom_call.1} parent=1 // pred_check_branch
      %34 = sbr.rel (0) target = $region37
    $region36: #{tpu_custom_call.1} parent=1 // pred_region
      _
    $region37: #{tpu_custom_call.1} parent=1 // pred_fallthru
      _
    // Predicated region
    $region38: #{tpu_custom_call.1} parent=1 // pred_check
      _
    $region39: #{tpu_custom_call.1} parent=1 // pred_check_branch
      %36 = sbr.rel (0) target = $region41
    $region40: #{tpu_custom_call.1} parent=1 // pred_region
      _
    $region41: #{tpu_custom_call.1} parent=1 // pred_fallthru
      _
    // Predicated region
    $region42: #{tpu_custom_call.1} parent=1 // pred_check
      _
    $region43: #{tpu_custom_call.1} parent=1 // pred_check_branch
      %38 = sbr.rel (0) target = $region45
    $region44: #{tpu_custom_call.1} parent=1 // pred_region
      _
    $region45: #{tpu_custom_call.1} parent=1 // pred_fallthru
      _
    %v40 = vld [vmem:[%s0] sm:$0xff]
    %v41 = vld [vmem:[%s0 + $0x8] sm:$0xf]
    %v42 = vld [vmem:[%s0 + $0xc] sm:$0xff]
    %v43 = vld [vmem:[%s0 + $0x14] sm:$0xf]
    %v44 = vld [vmem:[%s1] sm:$0xf]
    %v45 = vld [vmem:[%s1 + $0x4] sm:$0xf]
    %v46 = vld [vmem:[%s1 + $0x8] sm:$0xf]
    %v47 = vld [vmem:[%s1 + $0xc] sm:$0xf]
    %v48 = vld [vmem:[%s1 + $0x10] sm:$0xf]
    %v49 = vld [vmem:[%s1 + $0x14] sm:$0xf]
    %v50 = vld [vmem:[%s1 + $0x18] sm:$0xf]
    %v51 = vld [vmem:[%s1 + $0x1c] sm:$0xf]
    %v52 = vld [vmem:[%s1 + $0x20] sm:$0xf]
    %v53 = vld [vmem:[%s1 + $0x24] sm:$0xf]
    %v54 = vld [vmem:[%s1 + $0x28] sm:$0xf]
    %v55 = vld [vmem:[%s1 + $0x2c] sm:$0xf]
    %v56 = vld [vmem:[%s1 + $0x30] sm:$0xf]
    %v57 = vld [vmem:[%s1 + $0x34] sm:$0xf]
    %v58 = vld [vmem:[%s1 + $0x38] sm:$0xf]
    %v59 = vld [vmem:[%s1 + $0x3c] sm:$0xf]
    %v60 = vld [vmem:[%s1 + $0x40] sm:$0xf]
    %v61 = vld [vmem:[%s1 + $0x44] sm:$0xf]
    %v62 = vld [vmem:[%s1 + $0x48] sm:$0xf]
    %v63 = vld [vmem:[%s1 + $0x4c] sm:$0xf]
    %v64 = vld [vmem:[%s1 + $0x50] sm:$0xf]
    %v65 = vld [vmem:[%s1 + $0x54] sm:$0xf]
    %v66 = vld [vmem:[%s1 + $0x58] sm:$0xf]
    %v67 = vld [vmem:[%s1 + $0x5c] sm:$0xf]
    %v68 = vld [vmem:[%s1 + $0x60] sm:$0xf]
    %v69 = vld [vmem:[%s1 + $0x64] sm:$0xf]
    %v70 = vld [vmem:[%s1 + $0x68] sm:$0xf]
    %v71 = vld [vmem:[%s1 + $0x6c] sm:$0xf]
    %v72 = vld [vmem:[%s1 + $0x70] sm:$0xf]
    %v73 = vld [vmem:[%s1 + $0x74] sm:$0xf]
    %v74 = vld [vmem:[%s1 + $0x78] sm:$0xf]
    %v75 = vld [vmem:[%s1 + $0x7c] sm:$0xf]
    %v76 = vld [vmem:[%s1 + $0x80] sm:$0xf]
    %v77 = vld [vmem:[%s1 + $0x84] sm:$0xf]
    %v78 = vld [vmem:[%s1 + $0x88] sm:$0xf]
    %v79 = vld [vmem:[%s1 + $0x8c] sm:$0xf]
    %v80 = vld [vmem:[%s1 + $0x90] sm:$0xf]
    %v81 = vld [vmem:[%s1 + $0x94] sm:$0x3]
    %s82 = scalar_lea.vmem %s1, 152
    %v83 = vld [vmem:[%s82] sm:$0xf]
    %v84 = vld [vmem:[%s82 + $0x4] sm:$0xf]
    %v85 = vld [vmem:[%s82 + $0x8] sm:$0xf]
    %v86 = vld [vmem:[%s82 + $0xc] sm:$0xf]
    %v87 = vld [vmem:[%s82 + $0x10] sm:$0xf]
    %v88 = vld [vmem:[%s82 + $0x14] sm:$0xf]
    %v89 = vld [vmem:[%s82 + $0x18] sm:$0xf]
    %v90 = vld [vmem:[%s82 + $0x1c] sm:$0xf]
    %v91 = vld [vmem:[%s82 + $0x20] sm:$0xf]
    %v92 = vld [vmem:[%s82 + $0x24] sm:$0xf]
    %v93 = vld [vmem:[%s82 + $0x28] sm:$0xf]
    %v94 = vld [vmem:[%s82 + $0x2c] sm:$0xf]
    %v95 = vld [vmem:[%s82 + $0x30] sm:$0xf]
    %v96 = vld [vmem:[%s82 + $0x34] sm:$0xf]
    %v97 = vld [vmem:[%s82 + $0x38] sm:$0xf]
    %v98 = vld [vmem:[%s82 + $0x3c] sm:$0xf]
    %v99 = vld [vmem:[%s82 + $0x40] sm:$0xf]
    %v100 = vld [vmem:[%s82 + $0x44] sm:$0xf]
    %v101 = vld [vmem:[%s82 + $0x48] sm:$0xf]
    %v102 = vld [vmem:[%s82 + $0x4c] sm:$0xf]
    %v103 = vld [vmem:[%s82 + $0x50] sm:$0xf]
    %v104 = vld [vmem:[%s82 + $0x54] sm:$0xf]
    %v105 = vld [vmem:[%s82 + $0x58] sm:$0xf]
    %v106 = vld [vmem:[%s82 + $0x5c] sm:$0xf]
    %v107 = vld [vmem:[%s82 + $0x60] sm:$0xf]
    %v108 = vld [vmem:[%s82 + $0x64] sm:$0xf]
    %v109 = vld [vmem:[%s82 + $0x68] sm:$0xf]
    %v110 = vld [vmem:[%s82 + $0x6c] sm:$0xf]
    %v111 = vld [vmem:[%s82 + $0x70] sm:$0xf]
    %v112 = vld [vmem:[%s82 + $0x74] sm:$0xf]
    %v113 = vld [vmem:[%s82 + $0x78] sm:$0xf]
    %v114 = vld [vmem:[%s82 + $0x7c] sm:$0xf]
    %v115 = vld [vmem:[%s82 + $0x80] sm:$0xf]
    %v116 = vld [vmem:[%s82 + $0x84] sm:$0xf]
    %v117 = vld [vmem:[%s82 + $0x88] sm:$0xf]
    %v118 = vld [vmem:[%s82 + $0x8c] sm:$0xf]
    %v119 = vld [vmem:[%s82 + $0x90] sm:$0xf]
    %v120 = vld [vmem:[%s82 + $0x94] sm:$0x3]
    %v126 = vunpack.c.l.s4 1966171168
    %v127 = vunpack.c.0.s8 %v126
    %v128 = vlaneseq
    %v129 = vshrl.u32 %v128, 7
    %v130 = vsub.s32 %v127, %v129
    %v131 = vrot.slane %v40, %v130
    %v133 = vunpack.c.l.s4 1966171168
    %v134 = vunpack.c.0.s8 %v133
    %v135 = vlaneseq
    %v136 = vshrl.u32 %v135, 7
    %v137 = vsub.s32 %v134, %v136
    %v138 = vrot.slane %v41, %v137
    %v139 = vcombine.low %v131, %v138
    %v140 = vcombine.high %v131, %v138
    %v142 = vunpack.c.l.s4 1966171168
    %v143 = vunpack.c.0.s8 %v142
    %v144 = vlaneseq
    %v145 = vshrl.u32 %v144, 7
    %v146 = vsub.s32 %v143, %v145
    %v147 = vrot.slane %v139, %v146
    %v149 = vunpack.c.l.s4 1966171168
    %v150 = vunpack.c.0.s8 %v149
    %v151 = vlaneseq
    %v152 = vshrl.u32 %v151, 7
    %v153 = vsub.s32 %v150, %v152
    %v154 = vrot.slane %v140, %v153
    %v155 = vcombine.high %v147, %v147
    %v156 = vcombine.high %v154, %v154
    %v158 = vunpack.c.l.s4 1966171168
    %v159 = vunpack.c.0.s8 %v158
    %v160 = vlaneseq
    %v161 = vshrl.u32 %v160, 7
    %v162 = vsub.s32 %v159, %v161
    %v163 = vrot.slane %v42, %v162
    %v165 = vunpack.c.l.s4 1966171168
    %v166 = vunpack.c.0.s8 %v165
    %v167 = vlaneseq
    %v168 = vshrl.u32 %v167, 7
    %v169 = vsub.s32 %v166, %v168
    %v170 = vrot.slane %v43, %v169
    %v171 = vcombine.low %v163, %v170
    %v172 = vcombine.high %v163, %v170
    %v174 = vunpack.c.l.s4 1966171168
    %v175 = vunpack.c.0.s8 %v174
    %v176 = vlaneseq
    %v177 = vshrl.u32 %v176, 7
    %v178 = vsub.s32 %v175, %v177
    %v179 = vrot.slane %v171, %v178
    %v181 = vunpack.c.l.s4 1966171168
    %v182 = vunpack.c.0.s8 %v181
    %v183 = vlaneseq
    %v184 = vshrl.u32 %v183, 7
    %v185 = vsub.s32 %v182, %v184
    %v186 = vrot.slane %v172, %v185
    %v187 = vcombine.high %v179, %v179
    %v188 = vcombine.high %v186, %v186
    %v189 = vunpack.i.h.s16 %v147
    %v190 = vunpack.i.l.s16 %v154
    %v191 = vunpack.i.h.s16 %v154
    %v192 = vunpack.i.l.s16 %v155
    %v193 = vunpack.i.h.s16 %v155
    %v194 = vunpack.i.l.s16 %v156
    %v195 = vunpack.i.h.s16 %v156
    %v196 = vunpack.i.h.s16 %v179
    %v197 = vunpack.i.l.s16 %v186
    %v198 = vunpack.i.h.s16 %v186
    %v199 = vunpack.i.l.s16 %v187
    %v200 = vunpack.i.h.s16 %v187
    %v201 = vunpack.i.l.s16 %v188
    %v202 = vunpack.i.h.s16 %v188
    %v203 = vpack.i.b16 %v190, %v189
    %v204 = vpack.i.b16 %v192, %v191
    %v205 = vpack.i.b16 %v194, %v193
    %v206 = vpack.i.b16 %v196, %v195
    %v207 = vpack.i.b16 %v198, %v197
    %v208 = vpack.i.b16 %v200, %v199
    %v209 = vpack.i.b16 %v202, %v201
    %v210 = vcombine.low %v203, %v204
    %v211 = vcombine.low %v205, %v206
    %v212 = vcombine.low %v207, %v208
    %v214 = vunpack.c.l.s4 1966171168
    %v215 = vunpack.c.0.s8 %v214
    %v216 = vlaneseq
    %v217 = vshrl.u32 %v216, 7
    %v218 = vsub.s32 %v215, %v217
    %v219 = vrot.slane %v210, %v218
    %v221 = vunpack.c.l.s4 1966171168
    %v222 = vunpack.c.0.s8 %v221
    %v223 = vlaneseq
    %v224 = vshrl.u32 %v223, 7
    %v225 = vsub.s32 %v222, %v224
    %v226 = vrot.slane %v211, %v225
    %v228 = vunpack.c.l.s4 1966171168
    %v229 = vunpack.c.0.s8 %v228
    %v230 = vlaneseq
    %v231 = vshrl.u32 %v230, 7
    %v232 = vsub.s32 %v229, %v231
    %v233 = vrot.slane %v212, %v232
    %v235 = vunpack.c.l.s4 1966171168
    %v236 = vunpack.c.0.s8 %v235
    %v237 = vlaneseq
    %v238 = vshrl.u32 %v237, 7
    %v239 = vsub.s32 %v236, %v238
    %v240 = vrot.slane %v209, %v239
    %v241 = vcombine.low %v219, %v226
    %v242 = vcombine.high %v219, %v226
    %v243 = vcombine.low %v233, %v240
    %v244 = vcombine.high %v233, %v240
    %v246 = vunpack.c.l.s4 1966171168
    %v247 = vunpack.c.0.s8 %v246
    %v248 = vlaneseq
    %v249 = vshrl.u32 %v248, 7
    %v250 = vsub.s32 %v247, %v249
    %v251 = vrot.slane %v241, %v250
    %v253 = vunpack.c.l.s4 1966171168
    %v254 = vunpack.c.0.s8 %v253
    %v255 = vlaneseq
    %v256 = vshrl.u32 %v255, 7
    %v257 = vsub.s32 %v254, %v256
    %v258 = vrot.slane %v242, %v257
    %v260 = vunpack.c.l.s4 1966171168
    %v261 = vunpack.c.0.s8 %v260
    %v262 = vlaneseq
    %v263 = vshrl.u32 %v262, 7
    %v264 = vsub.s32 %v261, %v263
    %v265 = vrot.slane %v243, %v264
    %v267 = vunpack.c.l.s4 1966171168
    %v268 = vunpack.c.0.s8 %v267
    %v269 = vlaneseq
    %v270 = vshrl.u32 %v269, 7
    %v271 = vsub.s32 %v268, %v270
    %v272 = vrot.slane %v244, %v271
    %v273 = vcombine.low %v251, %v265
    %v274 = vcombine.high %v251, %v265
    %v275 = vcombine.low %v258, %v272
    %v316 = vunpack.c.l.b16 %v83
    %v317 = vunpack.c.l.b16 %v84
    %v318 = vunpack.c.l.b16 %v85
    %v319 = vunpack.c.l.b16 %v86
    %v320 = vunpack.c.l.b16 %v87
    %v321 = vunpack.c.l.b16 %v88
    %v322 = vunpack.c.l.b16 %v89
    %v323 = vunpack.c.l.b16 %v90
    %v324 = vunpack.c.l.b16 %v91
    %v325 = vunpack.c.l.b16 %v92
    %v326 = vunpack.c.l.b16 %v93
    %v327 = vunpack.c.l.b16 %v94
    %v328 = vunpack.c.l.b16 %v95
    %v329 = vunpack.c.l.b16 %v96
    %v330 = vunpack.c.l.b16 %v97
    %v331 = vunpack.c.l.b16 %v98
    %v332 = vunpack.c.l.b16 %v99
    %v333 = vunpack.c.l.b16 %v100
    %v334 = vunpack.c.l.b16 %v101
    %v335 = vunpack.c.l.b16 %v102
    %v336 = vunpack.c.l.b16 %v103
    %v337 = vunpack.c.l.b16 %v104
    %v338 = vunpack.c.l.b16 %v105
    %v339 = vunpack.c.l.b16 %v106
    %v340 = vunpack.c.l.b16 %v107
    %v341 = vunpack.c.l.b16 %v108
    %v342 = vunpack.c.l.b16 %v109
    %v343 = vunpack.c.l.b16 %v110
    %v344 = vunpack.c.l.b16 %v111
    %v345 = vunpack.c.l.b16 %v112
    %v346 = vunpack.c.l.b16 %v113
    %v347 = vunpack.c.l.b16 %v114
    %v348 = vunpack.c.l.b16 %v115
    %v349 = vunpack.c.l.b16 %v116
    %v350 = vunpack.c.l.b16 %v117
    %v351 = vunpack.c.l.b16 %v118
    %v352 = vunpack.c.l.b16 %v119
    %v353 = vunpack.c.l.b16 %v120
    %v354 = vpack.c.b16 %v317, %v316
    %v355 = vpack.c.b16 %v319, %v318
    %v356 = vpack.c.b16 %v321, %v320
    %v357 = vpack.c.b16 %v323, %v322
    %v358 = vpack.c.b16 %v325, %v324
    %v359 = vpack.c.b16 %v327, %v326
    %v360 = vpack.c.b16 %v329, %v328
    %v361 = vpack.c.b16 %v331, %v330
    %v362 = vpack.c.b16 %v333, %v332
    %v363 = vpack.c.b16 %v335, %v334
    %v364 = vpack.c.b16 %v337, %v336
    %v365 = vpack.c.b16 %v339, %v338
    %v366 = vpack.c.b16 %v341, %v340
    %v367 = vpack.c.b16 %v343, %v342
    %v368 = vpack.c.b16 %v345, %v344
    %v369 = vpack.c.b16 %v347, %v346
    %v370 = vpack.c.b16 %v349, %v348
    %v371 = vpack.c.b16 %v351, %v350
    %v372 = vpack.c.b16 %v353, %v352
    %vm391 = vcmask 359424
    %v393 = vsel %vm391, %v274, 0
    %vm395 = vcmask 1045504
    %v397 = vsel %vm395, %v372, 0
    %399 = vmatprep.subr.bf16.mxu0 0
    %400 = vmatpush1.bf16.msra.mxu0 %v361
    %401 = vmatprep.subr.bf16.mxu0 0
    %402 = vmatpush1.bf16.msra.mxu0 %v360
    %403 = vmatprep.subr.bf16.mxu0 0
    %404 = vmatpush1.bf16.msra.mxu0 %v359
    %405 = vmatprep.subr.bf16.mxu0 0
    %406 = vmatpush1.bf16.msra.mxu0 %v358
    %407 = vmatprep.subr.bf16.mxu0 0
    %408 = vmatpush1.bf16.msra.mxu0 %v357
    %409 = vmatprep.subr.bf16.mxu0 0
    %410 = vmatpush1.bf16.msra.mxu0 %v356
    %411 = vmatprep.subr.bf16.mxu0 0
    %412 = vmatpush1.bf16.msra.mxu0 %v355
    %413 = vmatprep.subr.bf16.mxu0 0
    %414 = vmatpush1.bf16.msra.mxu0 %v354
    %415 = vmatprep.subr.bf16.mxu0 0
    %416 = vmatpush2.bf16.msra.mxu0 %v369
    %417 = vmatprep.subr.bf16.mxu0 0
    %418 = vmatpush2.bf16.msra.mxu0 %v368
    %419 = vmatprep.subr.bf16.mxu0 0
    %420 = vmatpush2.bf16.msra.mxu0 %v367
    %421 = vmatprep.subr.bf16.mxu0 0
    %422 = vmatpush2.bf16.msra.mxu0 %v366
    %423 = vmatprep.subr.bf16.mxu0 0
    %424 = vmatpush2.bf16.msra.mxu0 %v365
    %425 = vmatprep.subr.bf16.mxu0 0
    %426 = vmatpush2.bf16.msra.mxu0 %v364
    %427 = vmatprep.subr.bf16.mxu0 0
    %428 = vmatpush2.bf16.msra.mxu0 %v363
    %429 = vmatprep.subr.bf16.mxu0 0
    %430 = vmatpush2.bf16.msra.mxu0 %v362
    %431 = vmatprep.mubr.bf16.mxu0 %v275
    %432 = vmatmul.mubr.bf16.gmra.mxu0 %v273
    %v433 = vpop.f32.mrf.mxu0
    %v434 = vadd.f32 0.0, %v433
    %v435 = vpop.f32.mrf.mxu0
    %v436 = vpop.f32.mrf.mxu0
    %v437 = vadd.f32 0.0, %v436
    %v438 = vpop.f32.mrf.mxu0
    %439 = vdwg.mxu0
    %440 = vmatprep.subr.bf16.mxu0 0
    %441 = vmatpush1.bf16.msra.mxu0 0
    %442 = vmatprep.subr.bf16.mxu0 0
    %443 = vmatpush1.bf16.msra.mxu0 0
    %444 = vmatprep.subr.bf16.mxu0 0
    %445 = vmatpush1.bf16.msra.mxu0 0
    %446 = vmatprep.subr.bf16.mxu0 0
    %447 = vmatpush1.bf16.msra.mxu0 0
    %448 = vmatprep.subr.bf16.mxu0 0
    %449 = vmatpush1.bf16.msra.mxu0 0
    %450 = vmatprep.subr.bf16.mxu0 0
    %451 = vmatpush1.bf16.msra.mxu0 %v397
    %452 = vmatprep.subr.bf16.mxu0 0
    %453 = vmatpush1.bf16.msra.mxu0 %v371
    %454 = vmatprep.subr.bf16.mxu0 0
    %455 = vmatpush1.bf16.msra.mxu0 %v370
    %456 = vmatprep.subr.bf16.mxu0 0
    %457 = vmatpush2.bf16.msra.mxu0 0
    %458 = vmatprep.subr.bf16.mxu0 0
    %459 = vmatpush2.bf16.msra.mxu0 0
    %460 = vmatprep.subr.bf16.mxu0 0
    %461 = vmatpush2.bf16.msra.mxu0 0
    %462 = vmatprep.subr.bf16.mxu0 0
    %463 = vmatpush2.bf16.msra.mxu0 0
    %464 = vmatprep.subr.bf16.mxu0 0
    %465 = vmatpush2.bf16.msra.mxu0 0
    %466 = vmatprep.subr.bf16.mxu0 0
    %467 = vmatpush2.bf16.msra.mxu0 0
    %468 = vmatprep.subr.bf16.mxu0 0
    %469 = vmatpush2.bf16.msra.mxu0 0
    %470 = vmatprep.subr.bf16.mxu0 0
    %471 = vmatpush2.bf16.msra.mxu0 0
    %472 = vmatprep.mubr.bf16.mxu0 0
    %473 = vmatmul.mubr.bf16.gmra.mxu0 %v393
    %v474 = vpop.f32.mrf.mxu0
    %v475 = vadd.f32 %v434, %v474
    %v476 = vpop.f32.mrf.mxu0
    %v477 = vpop.f32.mrf.mxu0
    %v478 = vadd.f32 %v437, %v477
    %v479 = vpop.f32.mrf.mxu0
    %480 = vdwg.mxu0
    %v481 = vunpack.i.l.s16 %v147
    %v482 = vunpack.i.l.s16 %v179
    %v483 = vpack.i.b16 %v189, %v481
    %v484 = vpack.i.b16 %v191, %v190
    %v485 = vpack.i.b16 %v193, %v192
    %v486 = vpack.i.b16 %v482, %v194
    %v487 = vpack.i.b16 %v197, %v196
    %v488 = vpack.i.b16 %v199, %v198
    %v489 = vpack.i.b16 %v201, %v200
    %v490 = vcombine.low %v483, %v484
    %v491 = vcombine.low %v485, %v486
    %v492 = vcombine.low %v487, %v488
    %v494 = vunpack.c.l.s4 1966171168
    %v495 = vunpack.c.0.s8 %v494
    %v496 = vlaneseq
    %v497 = vshrl.u32 %v496, 7
    %v498 = vsub.s32 %v495, %v497
    %v499 = vrot.slane %v490, %v498
    %v501 = vunpack.c.l.s4 1966171168
    %v502 = vunpack.c.0.s8 %v501
    %v503 = vlaneseq
    %v504 = vshrl.u32 %v503, 7
    %v505 = vsub.s32 %v502, %v504
    %v506 = vrot.slane %v491, %v505
    %v508 = vunpack.c.l.s4 1966171168
    %v509 = vunpack.c.0.s8 %v508
    %v510 = vlaneseq
    %v511 = vshrl.u32 %v510, 7
    %v512 = vsub.s32 %v509, %v511
    %v513 = vrot.slane %v492, %v512
    %v515 = vunpack.c.l.s4 1966171168
    %v516 = vunpack.c.0.s8 %v515
    %v517 = vlaneseq
    %v518 = vshrl.u32 %v517, 7
    %v519 = vsub.s32 %v516, %v518
    %v520 = vrot.slane %v489, %v519
    %v521 = vcombine.low %v499, %v506
    %v522 = vcombine.high %v499, %v506
    %v523 = vcombine.low %v513, %v520
    %v524 = vcombine.high %v513, %v520
    %v526 = vunpack.c.l.s4 1966171168
    %v527 = vunpack.c.0.s8 %v526
    %v528 = vlaneseq
    %v529 = vshrl.u32 %v528, 7
    %v530 = vsub.s32 %v527, %v529
    %v531 = vrot.slane %v521, %v530
    %v533 = vunpack.c.l.s4 1966171168
    %v534 = vunpack.c.0.s8 %v533
    %v535 = vlaneseq
    %v536 = vshrl.u32 %v535, 7
    %v537 = vsub.s32 %v534, %v536
    %v538 = vrot.slane %v522, %v537
    %v540 = vunpack.c.l.s4 1966171168
    %v541 = vunpack.c.0.s8 %v540
    %v542 = vlaneseq
    %v543 = vshrl.u32 %v542, 7
    %v544 = vsub.s32 %v541, %v543
    %v545 = vrot.slane %v523, %v544
    %v547 = vunpack.c.l.s4 1966171168
    %v548 = vunpack.c.0.s8 %v547
    %v549 = vlaneseq
    %v550 = vshrl.u32 %v549, 7
    %v551 = vsub.s32 %v548, %v550
    %v552 = vrot.slane %v524, %v551
    %v553 = vcombine.low %v531, %v545
    %v554 = vcombine.high %v531, %v545
    %v555 = vcombine.low %v538, %v552
    %v596 = vunpack.c.l.b16 %v44
    %v597 = vunpack.c.l.b16 %v45
    %v598 = vunpack.c.l.b16 %v46
    %v599 = vunpack.c.l.b16 %v47
    %v600 = vunpack.c.l.b16 %v48
    %v601 = vunpack.c.l.b16 %v49
    %v602 = vunpack.c.l.b16 %v50
    %v603 = vunpack.c.l.b16 %v51
    %v604 = vunpack.c.l.b16 %v52
    %v605 = vunpack.c.l.b16 %v53
    %v606 = vunpack.c.l.b16 %v54
    %v607 = vunpack.c.l.b16 %v55
    %v608 = vunpack.c.l.b16 %v56
    %v609 = vunpack.c.l.b16 %v57
    %v610 = vunpack.c.l.b16 %v58
    %v611 = vunpack.c.l.b16 %v59
    %v612 = vunpack.c.l.b16 %v60
    %v613 = vunpack.c.l.b16 %v61
    %v614 = vunpack.c.l.b16 %v62
    %v615 = vunpack.c.l.b16 %v63
    %v616 = vunpack.c.l.b16 %v64
    %v617 = vunpack.c.l.b16 %v65
    %v618 = vunpack.c.l.b16 %v66
    %v619 = vunpack.c.l.b16 %v67
    %v620 = vunpack.c.l.b16 %v68
    %v621 = vunpack.c.l.b16 %v69
    %v622 = vunpack.c.l.b16 %v70
    %v623 = vunpack.c.l.b16 %v71
    %v624 = vunpack.c.l.b16 %v72
    %v625 = vunpack.c.l.b16 %v73
    %v626 = vunpack.c.l.b16 %v74
    %v627 = vunpack.c.l.b16 %v75
    %v628 = vunpack.c.l.b16 %v76
    %v629 = vunpack.c.l.b16 %v77
    %v630 = vunpack.c.l.b16 %v78
    %v631 = vunpack.c.l.b16 %v79
    %v632 = vunpack.c.l.b16 %v80
    %v633 = vunpack.c.l.b16 %v81
    %v634 = vpack.c.b16 %v597, %v596
    %v635 = vpack.c.b16 %v599, %v598
    %v636 = vpack.c.b16 %v601, %v600
    %v637 = vpack.c.b16 %v603, %v602
    %v638 = vpack.c.b16 %v605, %v604
    %v639 = vpack.c.b16 %v607, %v606
    %v640 = vpack.c.b16 %v609, %v608
    %v641 = vpack.c.b16 %v611, %v610
    %v642 = vpack.c.b16 %v613, %v612
    %v643 = vpack.c.b16 %v615, %v614
    %v644 = vpack.c.b16 %v617, %v616
    %v645 = vpack.c.b16 %v619, %v618
    %v646 = vpack.c.b16 %v621, %v620
    %v647 = vpack.c.b16 %v623, %v622
    %v648 = vpack.c.b16 %v625, %v624
    %v649 = vpack.c.b16 %v627, %v626
    %v650 = vpack.c.b16 %v629, %v628
    %v651 = vpack.c.b16 %v631, %v630
    %v652 = vpack.c.b16 %v633, %v632
    %v672 = vsel %vm391, %v554, 0
    %v675 = vsel %vm395, %v652, 0
    %677 = vmatprep.subr.bf16.mxu0 0
    %678 = vmatpush1.bf16.msra.mxu0 %v641
    %679 = vmatprep.subr.bf16.mxu0 0
    %680 = vmatpush1.bf16.msra.mxu0 %v640
    %681 = vmatprep.subr.bf16.mxu0 0
    %682 = vmatpush1.bf16.msra.mxu0 %v639
    %683 = vmatprep.subr.bf16.mxu0 0
    %684 = vmatpush1.bf16.msra.mxu0 %v638
    %685 = vmatprep.subr.bf16.mxu0 0
    %686 = vmatpush1.bf16.msra.mxu0 %v637
    %687 = vmatprep.subr.bf16.mxu0 0
    %688 = vmatpush1.bf16.msra.mxu0 %v636
    %689 = vmatprep.subr.bf16.mxu0 0
    %690 = vmatpush1.bf16.msra.mxu0 %v635
    %691 = vmatprep.subr.bf16.mxu0 0
    %692 = vmatpush1.bf16.msra.mxu0 %v634
    %693 = vmatprep.subr.bf16.mxu0 0
    %694 = vmatpush2.bf16.msra.mxu0 %v649
    %695 = vmatprep.subr.bf16.mxu0 0
    %696 = vmatpush2.bf16.msra.mxu0 %v648
    %697 = vmatprep.subr.bf16.mxu0 0
    %698 = vmatpush2.bf16.msra.mxu0 %v647
    %699 = vmatprep.subr.bf16.mxu0 0
    %700 = vmatpush2.bf16.msra.mxu0 %v646
    %701 = vmatprep.subr.bf16.mxu0 0
    %702 = vmatpush2.bf16.msra.mxu0 %v645
    %703 = vmatprep.subr.bf16.mxu0 0
    %704 = vmatpush2.bf16.msra.mxu0 %v644
    %705 = vmatprep.subr.bf16.mxu0 0
    %706 = vmatpush2.bf16.msra.mxu0 %v643
    %707 = vmatprep.subr.bf16.mxu0 0
    %708 = vmatpush2.bf16.msra.mxu0 %v642
    %709 = vmatprep.mubr.bf16.mxu0 %v555
    %710 = vmatmul.mubr.bf16.gmra.mxu0 %v553
    %v711 = vpop.f32.mrf.mxu0
    %v712 = vadd.f32 %v475, %v711
    %v713 = vpop.f32.mrf.mxu0
    %v714 = vpop.f32.mrf.mxu0
    %v715 = vadd.f32 %v478, %v714
    %v716 = vpop.f32.mrf.mxu0
    %717 = vdwg.mxu0
    %718 = vmatprep.subr.bf16.mxu0 0
    %719 = vmatpush1.bf16.msra.mxu0 0
    %720 = vmatprep.subr.bf16.mxu0 0
    %721 = vmatpush1.bf16.msra.mxu0 0
    %722 = vmatprep.subr.bf16.mxu0 0
    %723 = vmatpush1.bf16.msra.mxu0 0
    %724 = vmatprep.subr.bf16.mxu0 0
    %725 = vmatpush1.bf16.msra.mxu0 0
    %726 = vmatprep.subr.bf16.mxu0 0
    %727 = vmatpush1.bf16.msra.mxu0 0
    %728 = vmatprep.subr.bf16.mxu0 0
    %729 = vmatpush1.bf16.msra.mxu0 %v675
    %730 = vmatprep.subr.bf16.mxu0 0
    %731 = vmatpush1.bf16.msra.mxu0 %v651
    %732 = vmatprep.subr.bf16.mxu0 0
    %733 = vmatpush1.bf16.msra.mxu0 %v650
    %734 = vmatprep.subr.bf16.mxu0 0
    %735 = vmatpush2.bf16.msra.mxu0 0
    %736 = vmatprep.subr.bf16.mxu0 0
    %737 = vmatpush2.bf16.msra.mxu0 0
    %738 = vmatprep.subr.bf16.mxu0 0
    %739 = vmatpush2.bf16.msra.mxu0 0
    %740 = vmatprep.subr.bf16.mxu0 0
    %741 = vmatpush2.bf16.msra.mxu0 0
    %742 = vmatprep.subr.bf16.mxu0 0
    %743 = vmatpush2.bf16.msra.mxu0 0
    %744 = vmatprep.subr.bf16.mxu0 0
    %745 = vmatpush2.bf16.msra.mxu0 0
    %746 = vmatprep.subr.bf16.mxu0 0
    %747 = vmatpush2.bf16.msra.mxu0 0
    %748 = vmatprep.subr.bf16.mxu0 0
    %749 = vmatpush2.bf16.msra.mxu0 0
    %750 = vmatprep.mubr.bf16.mxu0 0
    %751 = vmatmul.mubr.bf16.gmra.mxu0 %v672
    %v752 = vpop.f32.mrf.mxu0
    %v753 = vadd.f32 %v712, %v752
    %v754 = vpop.f32.mrf.mxu0
    %v755 = vpop.f32.mrf.mxu0
    %v756 = vadd.f32 %v715, %v755
    %v757 = vpop.f32.mrf.mxu0
    %758 = vdwg.mxu0
    %v761 = vcombine.high %v753, %v753
    %v763 = vunpack.c.l.s4 1966171168
    %v764 = vunpack.c.0.s8 %v763
    %v765 = vlaneseq
    %v766 = vshrl.u32 %v765, 7
    %v767 = vsub.s32 %v764, %v766
    %v768 = vrot.slane %v753, %v767
    %v770 = vunpack.c.l.s4 1966171168
    %v771 = vunpack.c.0.s8 %v770
    %v772 = vlaneseq
    %v773 = vshrl.u32 %v772, 7
    %v774 = vsub.s32 %v771, %v773
    %v775 = vrot.slane %v761, %v774
    %v776 = vcombine.high %v768, %v768
    %v777 = vcombine.high %v775, %v775
    %v779 = vunpack.c.l.s4 1966171168
    %v780 = vunpack.c.0.s8 %v779
    %v781 = vlaneseq
    %v782 = vshrl.u32 %v781, 7
    %v783 = vsub.s32 %v780, %v782
    %v784 = vrot.slane %v768, %v783
    %v786 = vunpack.c.l.s4 1966171168
    %v787 = vunpack.c.0.s8 %v786
    %v788 = vlaneseq
    %v789 = vshrl.u32 %v788, 7
    %v790 = vsub.s32 %v787, %v789
    %v791 = vrot.slane %v775, %v790
    %v793 = vunpack.c.l.s4 1966171168
    %v794 = vunpack.c.0.s8 %v793
    %v795 = vlaneseq
    %v796 = vshrl.u32 %v795, 7
    %v797 = vsub.s32 %v794, %v796
    %v798 = vrot.slane %v776, %v797
    %v800 = vunpack.c.l.s4 1966171168
    %v801 = vunpack.c.0.s8 %v800
    %v802 = vlaneseq
    %v803 = vshrl.u32 %v802, 7
    %v804 = vsub.s32 %v801, %v803
    %v805 = vrot.slane %v777, %v804
    %v806 = vcombine.high %v784, %v784
    %v807 = vcombine.high %v791, %v791
    %v808 = vcombine.high %v798, %v798
    %v809 = vcombine.high %v805, %v805
    %v810 = vcombine.high %v756, %v756
    %v812 = vunpack.c.l.s4 1966171168
    %v813 = vunpack.c.0.s8 %v812
    %v814 = vlaneseq
    %v815 = vshrl.u32 %v814, 7
    %v816 = vsub.s32 %v813, %v815
    %v817 = vrot.slane %v756, %v816
    %v819 = vunpack.c.l.s4 1966171168
    %v820 = vunpack.c.0.s8 %v819
    %v821 = vlaneseq
    %v822 = vshrl.u32 %v821, 7
    %v823 = vsub.s32 %v820, %v822
    %v824 = vrot.slane %v810, %v823
    %v825 = vcombine.high %v817, %v817
    %v826 = vcombine.high %v824, %v824
    %v828 = vunpack.c.l.s4 1966171168
    %v829 = vunpack.c.0.s8 %v828
    %v830 = vlaneseq
    %v831 = vshrl.u32 %v830, 7
    %v832 = vsub.s32 %v829, %v831
    %v833 = vrot.slane %v817, %v832
    %v835 = vunpack.c.l.s4 1966171168
    %v836 = vunpack.c.0.s8 %v835
    %v837 = vlaneseq
    %v838 = vshrl.u32 %v837, 7
    %v839 = vsub.s32 %v836, %v838
    %v840 = vrot.slane %v824, %v839
    %v842 = vunpack.c.l.s4 1966171168
    %v843 = vunpack.c.0.s8 %v842
    %v844 = vlaneseq
    %v845 = vshrl.u32 %v844, 7
    %v846 = vsub.s32 %v843, %v845
    %v847 = vrot.slane %v825, %v846
    %v849 = vunpack.c.l.s4 1966171168
    %v850 = vunpack.c.0.s8 %v849
    %v851 = vlaneseq
    %v852 = vshrl.u32 %v851, 7
    %v853 = vsub.s32 %v850, %v852
    %v854 = vrot.slane %v826, %v853
    %v855 = vcombine.high %v833, %v833
    %v856 = vcombine.high %v847, %v847
    %v857 = vcombine.low %v784, %v798
    %v858 = vcombine.low %v806, %v808
    %v859 = vcombine.low %v791, %v805
    %v861 = vunpack.c.l.s4 1966171168
    %v862 = vunpack.c.0.s8 %v861
    %v863 = vlaneseq
    %v864 = vshrl.u32 %v863, 7
    %v865 = vsub.s32 %v862, %v864
    %v866 = vrot.slane %v857, %v865
    %v868 = vunpack.c.l.s4 1966171168
    %v869 = vunpack.c.0.s8 %v868
    %v870 = vlaneseq
    %v871 = vshrl.u32 %v870, 7
    %v872 = vsub.s32 %v869, %v871
    %v873 = vrot.slane %v858, %v872
    %v875 = vunpack.c.l.s4 1966171168
    %v876 = vunpack.c.0.s8 %v875
    %v877 = vlaneseq
    %v878 = vshrl.u32 %v877, 7
    %v879 = vsub.s32 %v876, %v878
    %v880 = vrot.slane %v859, %v879
    %v882 = vunpack.c.l.s4 1966171168
    %v883 = vunpack.c.0.s8 %v882
    %v884 = vlaneseq
    %v885 = vshrl.u32 %v884, 7
    %v886 = vsub.s32 %v883, %v885
    %v887 = vrot.slane %v807, %v886
    %v888 = vcombine.low %v866, %v873
    %v889 = vcombine.low %v880, %v887
    %v891 = vunpack.c.l.s4 1966171168
    %v892 = vunpack.c.0.s8 %v891
    %v893 = vlaneseq
    %v894 = vshrl.u32 %v893, 7
    %v895 = vsub.s32 %v892, %v894
    %v896 = vrot.slane %v888, %v895
    %v898 = vunpack.c.l.s4 1966171168
    %v899 = vunpack.c.0.s8 %v898
    %v900 = vlaneseq
    %v901 = vshrl.u32 %v900, 7
    %v902 = vsub.s32 %v899, %v901
    %v903 = vrot.slane %v889, %v902
    %v904 = vcombine.low %v896, %v903
    %v905 = vcombine.low %v809, %v833
    %v906 = vcombine.low %v847, %v855
    %v907 = vcombine.low %v856, %v840
    %v909 = vunpack.c.l.s4 1966171168
    %v910 = vunpack.c.0.s8 %v909
    %v911 = vlaneseq
    %v912 = vshrl.u32 %v911, 7
    %v913 = vsub.s32 %v910, %v912
    %v914 = vrot.slane %v905, %v913
    %v916 = vunpack.c.l.s4 1966171168
    %v917 = vunpack.c.0.s8 %v916
    %v918 = vlaneseq
    %v919 = vshrl.u32 %v918, 7
    %v920 = vsub.s32 %v917, %v919
    %v921 = vrot.slane %v906, %v920
    %v923 = vunpack.c.l.s4 1966171168
    %v924 = vunpack.c.0.s8 %v923
    %v925 = vlaneseq
    %v926 = vshrl.u32 %v925, 7
    %v927 = vsub.s32 %v924, %v926
    %v928 = vrot.slane %v907, %v927
    %v930 = vunpack.c.l.s4 1966171168
    %v931 = vunpack.c.0.s8 %v930
    %v932 = vlaneseq
    %v933 = vshrl.u32 %v932, 7
    %v934 = vsub.s32 %v931, %v933
    %v935 = vrot.slane %v854, %v934
    %v936 = vcombine.low %v914, %v921
    %v937 = vcombine.low %v928, %v935
    %v939 = vunpack.c.l.s4 1966171168
    %v940 = vunpack.c.0.s8 %v939
    %v941 = vlaneseq
    %v942 = vshrl.u32 %v941, 7
    %v943 = vsub.s32 %v940, %v942
    %v944 = vrot.slane %v936, %v943
    %v946 = vunpack.c.l.s4 1966171168
    %v947 = vunpack.c.0.s8 %v946
    %v948 = vlaneseq
    %v949 = vshrl.u32 %v948, 7
    %v950 = vsub.s32 %v947, %v949
    %v951 = vrot.slane %v937, %v950
    %v952 = vcombine.low %v944, %v951
    %vm955 = vcmask 1046528
    %v956 = vsel %vm955, %v904, -inf
    %v957 = vrot.slane %v956, 4
    %v958 = vmax.f32 %v956, %v957
    %v959 = vrot.slane %v958, 2
    %v960 = vmax.f32 %v958, %v959
    %v961 = vrot.slane %v960, 1
    %v962 = vmax.f32 %v960, %v961
    %v963 = vsel %vm955, %v952, -inf
    %v964 = vrot.slane %v963, 4
    %v965 = vmax.f32 %v963, %v964
    %v966 = vrot.slane %v965, 2
    %v967 = vmax.f32 %v965, %v966
    %v968 = vrot.slane %v967, 1
    %v969 = vmax.f32 %v967, %v968
    %v970 = vld [vmem:[%s2] sm:$0x1]
    %v972 = vlaneseq
    %v973 = vshrl.u32 %v972, 7
    %v974 = vsub.s32 0, %v973
    %v975 = vrot.slane %v970, %v974
    %v977 = vadd.f32 %v962, %v975
    %v978 = vadd.f32 %v969, %v975
    %v979 = vmax.f32 %v977, 0.0
    %v980 = vmax.f32 %v978, 0.0
    %v981 = vld [vmem:[%s7] sm:$0xff]
    %v982 = vld [vmem:[%s7 + $0x8] sm:$0xff]
    %v983 = vld [vmem:[%s7 + $0x10] sm:$0xff]
    %v984 = vld [vmem:[%s7 + $0x18] sm:$0xff]
    %v985 = vld [vmem:[%s7 + $0x20] sm:$0xff]
    %v986 = vld [vmem:[%s7 + $0x28] sm:$0xff]
    %v987 = vld [vmem:[%s7 + $0x30] sm:$0xff]
    %v988 = vld [vmem:[%s7 + $0x38] sm:$0xff]
    %v989 = vld [vmem:[%s7 + $0x40] sm:$0xff]
    %v990 = vld [vmem:[%s7 + $0x48] sm:$0xff]
    %v991 = vld [vmem:[%s7 + $0x50] sm:$0xff]
    %v992 = vld [vmem:[%s7 + $0x58] sm:$0xff]
    %v993 = vld [vmem:[%s7 + $0x60] sm:$0xff]
    %v994 = vld [vmem:[%s7 + $0x68] sm:$0xff]
    %v995 = vld [vmem:[%s7 + $0x70] sm:$0xff]
    %v996 = vld [vmem:[%s7 + $0x78] sm:$0xff]
    %v997 = vld [vmem:[%s0] sm:$0x77]
    %v998 = vld [vmem:[%s0 + $0x8] sm:$0x7]
    %v999 = vld [vmem:[%s0 + $0xc] sm:$0x77]
    %v1000 = vld [vmem:[%s0 + $0x14] sm:$0x7]
    %v1001 = vld [vmem:[%s3] sm:$0xf]
    %v1002 = vld [vmem:[%s3 + $0x4] sm:$0xf]
    %v1003 = vld [vmem:[%s3 + $0x8] sm:$0xf]
    %v1004 = vld [vmem:[%s3 + $0xc] sm:$0xf]
    %v1005 = vld [vmem:[%s3 + $0x10] sm:$0xf]
    %v1006 = vld [vmem:[%s3 + $0x14] sm:$0xf]
    %v1007 = vld [vmem:[%s3 + $0x18] sm:$0xf]
    %v1008 = vld [vmem:[%s3 + $0x1c] sm:$0xf]
    %v1009 = vld [vmem:[%s3 + $0x20] sm:$0xf]
    %v1010 = vld [vmem:[%s3 + $0x24] sm:$0xf]
    %v1011 = vld [vmem:[%s3 + $0x28] sm:$0xf]
    %v1012 = vld [vmem:[%s3 + $0x2c] sm:$0xf]
    %v1013 = vld [vmem:[%s3 + $0x30] sm:$0xf]
    %v1014 = vld [vmem:[%s3 + $0x34] sm:$0xf]
    %v1015 = vld [vmem:[%s3 + $0x38] sm:$0xf]
    %v1016 = vld [vmem:[%s3 + $0x3c] sm:$0xf]
    %v1017 = vld [vmem:[%s3 + $0x40] sm:$0xf]
    %v1018 = vld [vmem:[%s3 + $0x44] sm:$0xf]
    %v1019 = vld [vmem:[%s3 + $0x48] sm:$0xf]
    %v1020 = vld [vmem:[%s3 + $0x4c] sm:$0xf]
    %v1021 = vld [vmem:[%s3 + $0x50] sm:$0xf]
    %v1022 = vld [vmem:[%s3 + $0x54] sm:$0xf]
    %v1023 = vld [vmem:[%s3 + $0x58] sm:$0xf]
    %v1024 = vld [vmem:[%s3 + $0x5c] sm:$0xf]
    %v1025 = vld [vmem:[%s3 + $0x60] sm:$0xf]
    %v1026 = vld [vmem:[%s3 + $0x64] sm:$0xf]
    %v1027 = vld [vmem:[%s3 + $0x68] sm:$0xf]
    %v1028 = vld [vmem:[%s3 + $0x6c] sm:$0xf]
    %v1029 = vld [vmem:[%s3 + $0x70] sm:$0xf]
    %v1030 = vld [vmem:[%s3 + $0x74] sm:$0xf]
    %v1031 = vld [vmem:[%s3 + $0x78] sm:$0xf]
    %v1032 = vld [vmem:[%s3 + $0x7c] sm:$0xf]
    %v1033 = vld [vmem:[%s3 + $0x80] sm:$0xf]
    %v1034 = vld [vmem:[%s3 + $0x84] sm:$0xf]
    %v1035 = vld [vmem:[%s3 + $0x88] sm:$0xf]
    %v1036 = vld [vmem:[%s3 + $0x8c] sm:$0xf]
    %v1037 = vld [vmem:[%s3 + $0x90] sm:$0xf]
    %v1038 = vld [vmem:[%s3 + $0x94] sm:$0x3]
    %v1039 = vld [vmem:[%s0] sm:$0xff]
    %v1040 = vld [vmem:[%s0 + $0x8] sm:$0xf]
    %v1041 = vld [vmem:[%s0 + $0xc] sm:$0xff]
    %v1042 = vld [vmem:[%s0 + $0x14] sm:$0xf]
    %s1043 = scalar_lea.vmem %s3, 152
    %v1044 = vld [vmem:[%s1043] sm:$0xf]
    %v1045 = vld [vmem:[%s1043 + $0x4] sm:$0xf]
    %v1046 = vld [vmem:[%s1043 + $0x8] sm:$0xf]
    %v1047 = vld [vmem:[%s1043 + $0xc] sm:$0xf]
    %v1048 = vld [vmem:[%s1043 + $0x10] sm:$0xf]
    %v1049 = vld [vmem:[%s1043 + $0x14] sm:$0xf]
    %v1050 = vld [vmem:[%s1043 + $0x18] sm:$0xf]
    %v1051 = vld [vmem:[%s1043 + $0x1c] sm:$0xf]
    %v1052 = vld [vmem:[%s1043 + $0x20] sm:$0xf]
    %v1053 = vld [vmem:[%s1043 + $0x24] sm:$0xf]
    %v1054 = vld [vmem:[%s1043 + $0x28] sm:$0xf]
    %v1055 = vld [vmem:[%s1043 + $0x2c] sm:$0xf]
    %v1056 = vld [vmem:[%s1043 + $0x30] sm:$0xf]
    %v1057 = vld [vmem:[%s1043 + $0x34] sm:$0xf]
    %v1058 = vld [vmem:[%s1043 + $0x38] sm:$0xf]
    %v1059 = vld [vmem:[%s1043 + $0x3c] sm:$0xf]
    %v1060 = vld [vmem:[%s1043 + $0x40] sm:$0xf]
    %v1061 = vld [vmem:[%s1043 + $0x44] sm:$0xf]
    %v1062 = vld [vmem:[%s1043 + $0x48] sm:$0xf]
    %v1063 = vld [vmem:[%s1043 + $0x4c] sm:$0xf]
    %v1064 = vld [vmem:[%s1043 + $0x50] sm:$0xf]
    %v1065 = vld [vmem:[%s1043 + $0x54] sm:$0xf]
    %v1066 = vld [vmem:[%s1043 + $0x58] sm:$0xf]
    %v1067 = vld [vmem:[%s1043 + $0x5c] sm:$0xf]
    %v1068 = vld [vmem:[%s1043 + $0x60] sm:$0xf]
    %v1069 = vld [vmem:[%s1043 + $0x64] sm:$0xf]
    %v1070 = vld [vmem:[%s1043 + $0x68] sm:$0xf]
    %v1071 = vld [vmem:[%s1043 + $0x6c] sm:$0xf]
    %v1072 = vld [vmem:[%s1043 + $0x70] sm:$0xf]
    %v1073 = vld [vmem:[%s1043 + $0x74] sm:$0xf]
    %v1074 = vld [vmem:[%s1043 + $0x78] sm:$0xf]
    %v1075 = vld [vmem:[%s1043 + $0x7c] sm:$0xf]
    %v1076 = vld [vmem:[%s1043 + $0x80] sm:$0xf]
    %v1077 = vld [vmem:[%s1043 + $0x84] sm:$0xf]
    %v1078 = vld [vmem:[%s1043 + $0x88] sm:$0xf]
    %v1079 = vld [vmem:[%s1043 + $0x8c] sm:$0xf]
    %v1080 = vld [vmem:[%s1043 + $0x90] sm:$0xf]
    %v1081 = vld [vmem:[%s1043 + $0x94] sm:$0x3]
    %v1087 = vunpack.c.l.s4 1966171168
    %v1088 = vunpack.c.0.s8 %v1087
    %v1089 = vlaneseq
    %v1090 = vshrl.u32 %v1089, 7
    %v1091 = vsub.s32 %v1088, %v1090
    %v1092 = vrot.slane %v1039, %v1091
    %v1094 = vunpack.c.l.s4 1966171168
    %v1095 = vunpack.c.0.s8 %v1094
    %v1096 = vlaneseq
    %v1097 = vshrl.u32 %v1096, 7
    %v1098 = vsub.s32 %v1095, %v1097
    %v1099 = vrot.slane %v1040, %v1098
    %v1100 = vcombine.low %v1092, %v1099
    %v1101 = vcombine.high %v1092, %v1099
    %v1103 = vunpack.c.l.s4 1966171168
    %v1104 = vunpack.c.0.s8 %v1103
    %v1105 = vlaneseq
    %v1106 = vshrl.u32 %v1105, 7
    %v1107 = vsub.s32 %v1104, %v1106
    %v1108 = vrot.slane %v1100, %v1107
    %v1110 = vunpack.c.l.s4 1966171168
    %v1111 = vunpack.c.0.s8 %v1110
    %v1112 = vlaneseq
    %v1113 = vshrl.u32 %v1112, 7
    %v1114 = vsub.s32 %v1111, %v1113
    %v1115 = vrot.slane %v1101, %v1114
    %v1116 = vcombine.high %v1108, %v1108
    %v1117 = vcombine.high %v1115, %v1115
    %v1119 = vunpack.c.l.s4 1966171168
    %v1120 = vunpack.c.0.s8 %v1119
    %v1121 = vlaneseq
    %v1122 = vshrl.u32 %v1121, 7
    %v1123 = vsub.s32 %v1120, %v1122
    %v1124 = vrot.slane %v1041, %v1123
    %v1126 = vunpack.c.l.s4 1966171168
    %v1127 = vunpack.c.0.s8 %v1126
    %v1128 = vlaneseq
    %v1129 = vshrl.u32 %v1128, 7
    %v1130 = vsub.s32 %v1127, %v1129
    %v1131 = vrot.slane %v1042, %v1130
    %v1132 = vcombine.low %v1124, %v1131
    %v1133 = vcombine.high %v1124, %v1131
    %v1135 = vunpack.c.l.s4 1966171168
    %v1136 = vunpack.c.0.s8 %v1135
    %v1137 = vlaneseq
    %v1138 = vshrl.u32 %v1137, 7
    %v1139 = vsub.s32 %v1136, %v1138
    %v1140 = vrot.slane %v1132, %v1139
    %v1142 = vunpack.c.l.s4 1966171168
    %v1143 = vunpack.c.0.s8 %v1142
    %v1144 = vlaneseq
    %v1145 = vshrl.u32 %v1144, 7
    %v1146 = vsub.s32 %v1143, %v1145
    %v1147 = vrot.slane %v1133, %v1146
    %v1148 = vcombine.high %v1140, %v1140
    %v1149 = vcombine.high %v1147, %v1147
    %vm1150 = vsmask.f32 256
    %vm1151 = vsmask.f32 1284
    %vm1152 = vmor %vm1150, %vm1151
    %vm1153 = vsmask.f32 2312
    %vm1154 = vmor %vm1152, %vm1153
    %vm1155 = vsmask.f32 3340
    %vm1156 = vmor %vm1154, %vm1155
    %vm1157 = vsmask.f32 4368
    %vm1158 = vmor %vm1156, %vm1157
    %vm1159 = vsmask.f32 5396
    %vm1160 = vmor %vm1158, %vm1159
    %vm1161 = vsmask.f32 6424
    %vm1162 = vmor %vm1160, %vm1161
    %vm1163 = vsmask.f32 7452
    %vm1164 = vmor %vm1162, %vm1163
    %v1166 = vshrl.u32 %v1108, 16
    %v1168 = vrot.slane %v1166, 7
    %v1169 = vrot.slane %v1168, 1
    %v1171 = vshll.u32 %v1115, 16
    %v1173 = vsel %vm1164, %v1169, %v1171
    %v1174 = vshrl.u32 %v1115, 16
    %v1176 = vrot.slane %v1174, 7
    %v1177 = vrot.slane %v1176, 1
    %v1179 = vshll.u32 %v1116, 16
    %v1181 = vsel %vm1164, %v1177, %v1179
    %v1182 = vshrl.u32 %v1116, 16
    %v1184 = vrot.slane %v1182, 7
    %v1185 = vrot.slane %v1184, 1
    %v1187 = vshll.u32 %v1117, 16
    %v1189 = vsel %vm1164, %v1185, %v1187
    %v1191 = vshrl.u32 %v1140, 16
    %v1193 = vrot.slane %v1191, 7
    %v1194 = vrot.slane %v1193, 1
    %v1196 = vshll.u32 %v1147, 16
    %v1198 = vsel %vm1164, %v1194, %v1196
    %v1199 = vshrl.u32 %v1147, 16
    %v1201 = vrot.slane %v1199, 7
    %v1202 = vrot.slane %v1201, 1
    %v1204 = vshll.u32 %v1148, 16
    %v1206 = vsel %vm1164, %v1202, %v1204
    %v1207 = vshrl.u32 %v1148, 16
    %v1209 = vrot.slane %v1207, 7
    %v1210 = vrot.slane %v1209, 1
    %v1212 = vshll.u32 %v1149, 16
    %v1214 = vsel %vm1164, %v1210, %v1212
    %v1215 = vcombine.low %v1173, %v1181
    %v1216 = vcombine.low %v1189, %v1198
    %v1217 = vcombine.low %v1206, %v1214
    %v1219 = vunpack.c.l.s4 1966171168
    %v1220 = vunpack.c.0.s8 %v1219
    %v1221 = vlaneseq
    %v1222 = vshrl.u32 %v1221, 7
    %v1223 = vsub.s32 %v1220, %v1222
    %v1224 = vrot.slane %v1215, %v1223
    %v1226 = vunpack.c.l.s4 1966171168
    %v1227 = vunpack.c.0.s8 %v1226
    %v1228 = vlaneseq
    %v1229 = vshrl.u32 %v1228, 7
    %v1230 = vsub.s32 %v1227, %v1229
    %v1231 = vrot.slane %v1216, %v1230
    %v1233 = vunpack.c.l.s4 1966171168
    %v1234 = vunpack.c.0.s8 %v1233
    %v1235 = vlaneseq
    %v1236 = vshrl.u32 %v1235, 7
    %v1237 = vsub.s32 %v1234, %v1236
    %v1238 = vrot.slane %v1217, %v1237
    %v1239 = vcombine.low %v1224, %v1231
    %v1240 = vcombine.high %v1224, %v1231
    %v1241 = vcombine.high %v1238, %v1238
    %v1243 = vunpack.c.l.s4 1966171168
    %v1244 = vunpack.c.0.s8 %v1243
    %v1245 = vlaneseq
    %v1246 = vshrl.u32 %v1245, 7
    %v1247 = vsub.s32 %v1244, %v1246
    %v1248 = vrot.slane %v1239, %v1247
    %v1250 = vunpack.c.l.s4 1966171168
    %v1251 = vunpack.c.0.s8 %v1250
    %v1252 = vlaneseq
    %v1253 = vshrl.u32 %v1252, 7
    %v1254 = vsub.s32 %v1251, %v1253
    %v1255 = vrot.slane %v1240, %v1254
    %v1257 = vunpack.c.l.s4 1966171168
    %v1258 = vunpack.c.0.s8 %v1257
    %v1259 = vlaneseq
    %v1260 = vshrl.u32 %v1259, 7
    %v1261 = vsub.s32 %v1258, %v1260
    %v1262 = vrot.slane %v1238, %v1261
    %v1264 = vunpack.c.l.s4 1966171168
    %v1265 = vunpack.c.0.s8 %v1264
    %v1266 = vlaneseq
    %v1267 = vshrl.u32 %v1266, 7
    %v1268 = vsub.s32 %v1265, %v1267
    %v1269 = vrot.slane %v1241, %v1268
    %v1270 = vcombine.low %v1248, %v1262
    %v1271 = vcombine.high %v1248, %v1262
    %v1272 = vcombine.low %v1255, %v1269
    %v1313 = vunpack.c.l.b16 %v1044
    %v1314 = vunpack.c.l.b16 %v1045
    %v1315 = vunpack.c.l.b16 %v1046
    %v1316 = vunpack.c.l.b16 %v1047
    %v1317 = vunpack.c.l.b16 %v1048
    %v1318 = vunpack.c.l.b16 %v1049
    %v1319 = vunpack.c.l.b16 %v1050
    %v1320 = vunpack.c.l.b16 %v1051
    %v1321 = vunpack.c.l.b16 %v1052
    %v1322 = vunpack.c.l.b16 %v1053
    %v1323 = vunpack.c.l.b16 %v1054
    %v1324 = vunpack.c.l.b16 %v1055
    %v1325 = vunpack.c.l.b16 %v1056
    %v1326 = vunpack.c.l.b16 %v1057
    %v1327 = vunpack.c.l.b16 %v1058
    %v1328 = vunpack.c.l.b16 %v1059
    %v1329 = vunpack.c.l.b16 %v1060
    %v1330 = vunpack.c.l.b16 %v1061
    %v1331 = vunpack.c.l.b16 %v1062
    %v1332 = vunpack.c.l.b16 %v1063
    %v1333 = vunpack.c.l.b16 %v1064
    %v1334 = vunpack.c.l.b16 %v1065
    %v1335 = vunpack.c.l.b16 %v1066
    %v1336 = vunpack.c.l.b16 %v1067
    %v1337 = vunpack.c.l.b16 %v1068
    %v1338 = vunpack.c.l.b16 %v1069
    %v1339 = vunpack.c.l.b16 %v1070
    %v1340 = vunpack.c.l.b16 %v1071
    %v1341 = vunpack.c.l.b16 %v1072
    %v1342 = vunpack.c.l.b16 %v1073
    %v1343 = vunpack.c.l.b16 %v1074
    %v1344 = vunpack.c.l.b16 %v1075
    %v1345 = vunpack.c.l.b16 %v1076
    %v1346 = vunpack.c.l.b16 %v1077
    %v1347 = vunpack.c.l.b16 %v1078
    %v1348 = vunpack.c.l.b16 %v1079
    %v1349 = vunpack.c.l.b16 %v1080
    %v1350 = vunpack.c.l.b16 %v1081
    %v1351 = vpack.c.b16 %v1314, %v1313
    %v1352 = vpack.c.b16 %v1316, %v1315
    %v1353 = vpack.c.b16 %v1318, %v1317
    %v1354 = vpack.c.b16 %v1320, %v1319
    %v1355 = vpack.c.b16 %v1322, %v1321
    %v1356 = vpack.c.b16 %v1324, %v1323
    %v1357 = vpack.c.b16 %v1326, %v1325
    %v1358 = vpack.c.b16 %v1328, %v1327
    %v1359 = vpack.c.b16 %v1330, %v1329
    %v1360 = vpack.c.b16 %v1332, %v1331
    %v1361 = vpack.c.b16 %v1334, %v1333
    %v1362 = vpack.c.b16 %v1336, %v1335
    %v1363 = vpack.c.b16 %v1338, %v1337
    %v1364 = vpack.c.b16 %v1340, %v1339
    %v1365 = vpack.c.b16 %v1342, %v1341
    %v1366 = vpack.c.b16 %v1344, %v1343
    %v1367 = vpack.c.b16 %v1346, %v1345
    %v1368 = vpack.c.b16 %v1348, %v1347
    %v1369 = vpack.c.b16 %v1350, %v1349
    %v1389 = vsel %vm391, %v1271, 0
    %v1392 = vsel %vm395, %v1369, 0
    %1394 = vmatprep.subr.bf16.mxu0 0
    %1395 = vmatpush1.bf16.msra.mxu0 %v1358
    %1396 = vmatprep.subr.bf16.mxu0 0
    %1397 = vmatpush1.bf16.msra.mxu0 %v1357
    %1398 = vmatprep.subr.bf16.mxu0 0
    %1399 = vmatpush1.bf16.msra.mxu0 %v1356
    %1400 = vmatprep.subr.bf16.mxu0 0
    %1401 = vmatpush1.bf16.msra.mxu0 %v1355
    %1402 = vmatprep.subr.bf16.mxu0 0
    %1403 = vmatpush1.bf16.msra.mxu0 %v1354
    %1404 = vmatprep.subr.bf16.mxu0 0
    %1405 = vmatpush1.bf16.msra.mxu0 %v1353
    %1406 = vmatprep.subr.bf16.mxu0 0
    %1407 = vmatpush1.bf16.msra.mxu0 %v1352
    %1408 = vmatprep.subr.bf16.mxu0 0
    %1409 = vmatpush1.bf16.msra.mxu0 %v1351
    %1410 = vmatprep.subr.bf16.mxu0 0
    %1411 = vmatpush2.bf16.msra.mxu0 %v1366
    %1412 = vmatprep.subr.bf16.mxu0 0
    %1413 = vmatpush2.bf16.msra.mxu0 %v1365
    %1414 = vmatprep.subr.bf16.mxu0 0
    %1415 = vmatpush2.bf16.msra.mxu0 %v1364
    %1416 = vmatprep.subr.bf16.mxu0 0
    %1417 = vmatpush2.bf16.msra.mxu0 %v1363
    %1418 = vmatprep.subr.bf16.mxu0 0
    %1419 = vmatpush2.bf16.msra.mxu0 %v1362
    %1420 = vmatprep.subr.bf16.mxu0 0
    %1421 = vmatpush2.bf16.msra.mxu0 %v1361
    %1422 = vmatprep.subr.bf16.mxu0 0
    %1423 = vmatpush2.bf16.msra.mxu0 %v1360
    %1424 = vmatprep.subr.bf16.mxu0 0
    %1425 = vmatpush2.bf16.msra.mxu0 %v1359
    %1426 = vmatprep.mubr.bf16.mxu0 %v1272
    %1427 = vmatmul.mubr.bf16.gmra.mxu0 %v1270
    %v1428 = vpop.f32.mrf.mxu0
    %v1429 = vadd.f32 0.0, %v1428
    %v1430 = vpop.f32.mrf.mxu0
    %v1431 = vpop.f32.mrf.mxu0
    %v1432 = vadd.f32 0.0, %v1431
    %v1433 = vpop.f32.mrf.mxu0
    %1434 = vdwg.mxu0
    %1435 = vmatprep.subr.bf16.mxu0 0
    %1436 = vmatpush1.bf16.msra.mxu0 0
    %1437 = vmatprep.subr.bf16.mxu0 0
    %1438 = vmatpush1.bf16.msra.mxu0 0
    %1439 = vmatprep.subr.bf16.mxu0 0
    %1440 = vmatpush1.bf16.msra.mxu0 0
    %1441 = vmatprep.subr.bf16.mxu0 0
    %1442 = vmatpush1.bf16.msra.mxu0 0
    %1443 = vmatprep.subr.bf16.mxu0 0
    %1444 = vmatpush1.bf16.msra.mxu0 0
    %1445 = vmatprep.subr.bf16.mxu0 0
    %1446 = vmatpush1.bf16.msra.mxu0 %v1392
    %1447 = vmatprep.subr.bf16.mxu0 0
    %1448 = vmatpush1.bf16.msra.mxu0 %v1368
    %1449 = vmatprep.subr.bf16.mxu0 0
    %1450 = vmatpush1.bf16.msra.mxu0 %v1367
    %1451 = vmatprep.subr.bf16.mxu0 0
    %1452 = vmatpush2.bf16.msra.mxu0 0
    %1453 = vmatprep.subr.bf16.mxu0 0
    %1454 = vmatpush2.bf16.msra.mxu0 0
    %1455 = vmatprep.subr.bf16.mxu0 0
    %1456 = vmatpush2.bf16.msra.mxu0 0
    %1457 = vmatprep.subr.bf16.mxu0 0
    %1458 = vmatpush2.bf16.msra.mxu0 0
    %1459 = vmatprep.subr.bf16.mxu0 0
    %1460 = vmatpush2.bf16.msra.mxu0 0
    %1461 = vmatprep.subr.bf16.mxu0 0
    %1462 = vmatpush2.bf16.msra.mxu0 0
    %1463 = vmatprep.subr.bf16.mxu0 0
    %1464 = vmatpush2.bf16.msra.mxu0 0
    %1465 = vmatprep.subr.bf16.mxu0 0
    %1466 = vmatpush2.bf16.msra.mxu0 0
    %1467 = vmatprep.mubr.bf16.mxu0 0
    %1468 = vmatmul.mubr.bf16.gmra.mxu0 %v1389
    %v1469 = vpop.f32.mrf.mxu0
    %v1470 = vadd.f32 %v1429, %v1469
    %v1471 = vpop.f32.mrf.mxu0
    %v1472 = vpop.f32.mrf.mxu0
    %v1473 = vadd.f32 %v1432, %v1472
    %v1474 = vpop.f32.mrf.mxu0
    %1475 = vdwg.mxu0
    %v1481 = vunpack.c.l.s4 1966171168
    %v1482 = vunpack.c.0.s8 %v1481
    %v1483 = vlaneseq
    %v1484 = vshrl.u32 %v1483, 7
    %v1485 = vsub.s32 %v1482, %v1484
    %v1486 = vrot.slane %v997, %v1485
    %v1488 = vunpack.c.l.s4 1966171168
    %v1489 = vunpack.c.0.s8 %v1488
    %v1490 = vlaneseq
    %v1491 = vshrl.u32 %v1490, 7
    %v1492 = vsub.s32 %v1489, %v1491
    %v1493 = vrot.slane %v998, %v1492
    %v1494 = vcombine.low %v1486, %v1493
    %v1495 = vcombine.high %v1486, %v1493
    %v1497 = vunpack.c.l.s4 1966171168
    %v1498 = vunpack.c.0.s8 %v1497
    %v1499 = vlaneseq
    %v1500 = vshrl.u32 %v1499, 7
    %v1501 = vsub.s32 %v1498, %v1500
    %v1502 = vrot.slane %v1494, %v1501
    %v1504 = vunpack.c.l.s4 1966171168
    %v1505 = vunpack.c.0.s8 %v1504
    %v1506 = vlaneseq
    %v1507 = vshrl.u32 %v1506, 7
    %v1508 = vsub.s32 %v1505, %v1507
    %v1509 = vrot.slane %v1495, %v1508
    %v1510 = vcombine.high %v1502, %v1502
    %v1512 = vunpack.c.l.s4 1966171168
    %v1513 = vunpack.c.0.s8 %v1512
    %v1514 = vlaneseq
    %v1515 = vshrl.u32 %v1514, 7
    %v1516 = vsub.s32 %v1513, %v1515
    %v1517 = vrot.slane %v999, %v1516
    %v1519 = vunpack.c.l.s4 1966171168
    %v1520 = vunpack.c.0.s8 %v1519
    %v1521 = vlaneseq
    %v1522 = vshrl.u32 %v1521, 7
    %v1523 = vsub.s32 %v1520, %v1522
    %v1524 = vrot.slane %v1000, %v1523
    %v1525 = vcombine.low %v1517, %v1524
    %v1526 = vcombine.high %v1517, %v1524
    %v1528 = vunpack.c.l.s4 1966171168
    %v1529 = vunpack.c.0.s8 %v1528
    %v1530 = vlaneseq
    %v1531 = vshrl.u32 %v1530, 7
    %v1532 = vsub.s32 %v1529, %v1531
    %v1533 = vrot.slane %v1525, %v1532
    %v1535 = vunpack.c.l.s4 1966171168
    %v1536 = vunpack.c.0.s8 %v1535
    %v1537 = vlaneseq
    %v1538 = vshrl.u32 %v1537, 7
    %v1539 = vsub.s32 %v1536, %v1538
    %v1540 = vrot.slane %v1526, %v1539
    %v1541 = vcombine.high %v1533, %v1533
    %v1542 = vcombine.low %v1502, %v1509
    %v1543 = vcombine.low %v1510, %v1533
    %v1544 = vcombine.low %v1540, %v1541
    %v1546 = vunpack.c.l.s4 1966171168
    %v1547 = vunpack.c.0.s8 %v1546
    %v1548 = vlaneseq
    %v1549 = vshrl.u32 %v1548, 7
    %v1550 = vsub.s32 %v1547, %v1549
    %v1551 = vrot.slane %v1542, %v1550
    %v1553 = vunpack.c.l.s4 1966171168
    %v1554 = vunpack.c.0.s8 %v1553
    %v1555 = vlaneseq
    %v1556 = vshrl.u32 %v1555, 7
    %v1557 = vsub.s32 %v1554, %v1556
    %v1558 = vrot.slane %v1543, %v1557
    %v1560 = vunpack.c.l.s4 1966171168
    %v1561 = vunpack.c.0.s8 %v1560
    %v1562 = vlaneseq
    %v1563 = vshrl.u32 %v1562, 7
    %v1564 = vsub.s32 %v1561, %v1563
    %v1565 = vrot.slane %v1544, %v1564
    %v1566 = vcombine.low %v1551, %v1558
    %v1567 = vcombine.high %v1551, %v1558
    %v1568 = vcombine.high %v1565, %v1565
    %v1570 = vunpack.c.l.s4 1966171168
    %v1571 = vunpack.c.0.s8 %v1570
    %v1572 = vlaneseq
    %v1573 = vshrl.u32 %v1572, 7
    %v1574 = vsub.s32 %v1571, %v1573
    %v1575 = vrot.slane %v1566, %v1574
    %v1577 = vunpack.c.l.s4 1966171168
    %v1578 = vunpack.c.0.s8 %v1577
    %v1579 = vlaneseq
    %v1580 = vshrl.u32 %v1579, 7
    %v1581 = vsub.s32 %v1578, %v1580
    %v1582 = vrot.slane %v1567, %v1581
    %v1584 = vunpack.c.l.s4 1966171168
    %v1585 = vunpack.c.0.s8 %v1584
    %v1586 = vlaneseq
    %v1587 = vshrl.u32 %v1586, 7
    %v1588 = vsub.s32 %v1585, %v1587
    %v1589 = vrot.slane %v1565, %v1588
    %v1591 = vunpack.c.l.s4 1966171168
    %v1592 = vunpack.c.0.s8 %v1591
    %v1593 = vlaneseq
    %v1594 = vshrl.u32 %v1593, 7
    %v1595 = vsub.s32 %v1592, %v1594
    %v1596 = vrot.slane %v1568, %v1595
    %v1597 = vcombine.low %v1575, %v1589
    %v1598 = vcombine.high %v1575, %v1589
    %v1599 = vcombine.low %v1582, %v1596
    %v1640 = vunpack.c.l.b16 %v1001
    %v1641 = vunpack.c.l.b16 %v1002
    %v1642 = vunpack.c.l.b16 %v1003
    %v1643 = vunpack.c.l.b16 %v1004
    %v1644 = vunpack.c.l.b16 %v1005
    %v1645 = vunpack.c.l.b16 %v1006
    %v1646 = vunpack.c.l.b16 %v1007
    %v1647 = vunpack.c.l.b16 %v1008
    %v1648 = vunpack.c.l.b16 %v1009
    %v1649 = vunpack.c.l.b16 %v1010
    %v1650 = vunpack.c.l.b16 %v1011
    %v1651 = vunpack.c.l.b16 %v1012
    %v1652 = vunpack.c.l.b16 %v1013
    %v1653 = vunpack.c.l.b16 %v1014
    %v1654 = vunpack.c.l.b16 %v1015
    %v1655 = vunpack.c.l.b16 %v1016
    %v1656 = vunpack.c.l.b16 %v1017
    %v1657 = vunpack.c.l.b16 %v1018
    %v1658 = vunpack.c.l.b16 %v1019
    %v1659 = vunpack.c.l.b16 %v1020
    %v1660 = vunpack.c.l.b16 %v1021
    %v1661 = vunpack.c.l.b16 %v1022
    %v1662 = vunpack.c.l.b16 %v1023
    %v1663 = vunpack.c.l.b16 %v1024
    %v1664 = vunpack.c.l.b16 %v1025
    %v1665 = vunpack.c.l.b16 %v1026
    %v1666 = vunpack.c.l.b16 %v1027
    %v1667 = vunpack.c.l.b16 %v1028
    %v1668 = vunpack.c.l.b16 %v1029
    %v1669 = vunpack.c.l.b16 %v1030
    %v1670 = vunpack.c.l.b16 %v1031
    %v1671 = vunpack.c.l.b16 %v1032
    %v1672 = vunpack.c.l.b16 %v1033
    %v1673 = vunpack.c.l.b16 %v1034
    %v1674 = vunpack.c.l.b16 %v1035
    %v1675 = vunpack.c.l.b16 %v1036
    %v1676 = vunpack.c.l.b16 %v1037
    %v1677 = vunpack.c.l.b16 %v1038
    %v1678 = vpack.c.b16 %v1641, %v1640
    %v1679 = vpack.c.b16 %v1643, %v1642
    %v1680 = vpack.c.b16 %v1645, %v1644
    %v1681 = vpack.c.b16 %v1647, %v1646
    %v1682 = vpack.c.b16 %v1649, %v1648
    %v1683 = vpack.c.b16 %v1651, %v1650
    %v1684 = vpack.c.b16 %v1653, %v1652
    %v1685 = vpack.c.b16 %v1655, %v1654
    %v1686 = vpack.c.b16 %v1657, %v1656
    %v1687 = vpack.c.b16 %v1659, %v1658
    %v1688 = vpack.c.b16 %v1661, %v1660
    %v1689 = vpack.c.b16 %v1663, %v1662
    %v1690 = vpack.c.b16 %v1665, %v1664
    %v1691 = vpack.c.b16 %v1667, %v1666
    %v1692 = vpack.c.b16 %v1669, %v1668
    %v1693 = vpack.c.b16 %v1671, %v1670
    %v1694 = vpack.c.b16 %v1673, %v1672
    %v1695 = vpack.c.b16 %v1675, %v1674
    %v1696 = vpack.c.b16 %v1677, %v1676
    %v1716 = vsel %vm391, %v1598, 0
    %v1719 = vsel %vm395, %v1696, 0
    %1721 = vmatprep.subr.bf16.mxu0 0
    %1722 = vmatpush1.bf16.msra.mxu0 %v1685
    %1723 = vmatprep.subr.bf16.mxu0 0
    %1724 = vmatpush1.bf16.msra.mxu0 %v1684
    %1725 = vmatprep.subr.bf16.mxu0 0
    %1726 = vmatpush1.bf16.msra.mxu0 %v1683
    %1727 = vmatprep.subr.bf16.mxu0 0
    %1728 = vmatpush1.bf16.msra.mxu0 %v1682
    %1729 = vmatprep.subr.bf16.mxu0 0
    %1730 = vmatpush1.bf16.msra.mxu0 %v1681
    %1731 = vmatprep.subr.bf16.mxu0 0
    %1732 = vmatpush1.bf16.msra.mxu0 %v1680
    %1733 = vmatprep.subr.bf16.mxu0 0
    %1734 = vmatpush1.bf16.msra.mxu0 %v1679
    %1735 = vmatprep.subr.bf16.mxu0 0
    %1736 = vmatpush1.bf16.msra.mxu0 %v1678
    %1737 = vmatprep.subr.bf16.mxu0 0
    %1738 = vmatpush2.bf16.msra.mxu0 %v1693
    %1739 = vmatprep.subr.bf16.mxu0 0
    %1740 = vmatpush2.bf16.msra.mxu0 %v1692
    %1741 = vmatprep.subr.bf16.mxu0 0
    %1742 = vmatpush2.bf16.msra.mxu0 %v1691
    %1743 = vmatprep.subr.bf16.mxu0 0
    %1744 = vmatpush2.bf16.msra.mxu0 %v1690
    %1745 = vmatprep.subr.bf16.mxu0 0
    %1746 = vmatpush2.bf16.msra.mxu0 %v1689
    %1747 = vmatprep.subr.bf16.mxu0 0
    %1748 = vmatpush2.bf16.msra.mxu0 %v1688
    %1749 = vmatprep.subr.bf16.mxu0 0
    %1750 = vmatpush2.bf16.msra.mxu0 %v1687
    %1751 = vmatprep.subr.bf16.mxu0 0
    %1752 = vmatpush2.bf16.msra.mxu0 %v1686
    %1753 = vmatprep.mubr.bf16.mxu0 %v1599
    %1754 = vmatmul.mubr.bf16.gmra.mxu0 %v1597
    %v1755 = vpop.f32.mrf.mxu0
    %v1756 = vadd.f32 %v1470, %v1755
    %v1757 = vpop.f32.mrf.mxu0
    %v1758 = vpop.f32.mrf.mxu0
    %v1759 = vadd.f32 %v1473, %v1758
    %v1760 = vpop.f32.mrf.mxu0
    %1761 = vdwg.mxu0
    %1762 = vmatprep.subr.bf16.mxu0 0
    %1763 = vmatpush1.bf16.msra.mxu0 0
    %1764 = vmatprep.subr.bf16.mxu0 0
    %1765 = vmatpush1.bf16.msra.mxu0 0
    %1766 = vmatprep.subr.bf16.mxu0 0
    %1767 = vmatpush1.bf16.msra.mxu0 0
    %1768 = vmatprep.subr.bf16.mxu0 0
    %1769 = vmatpush1.bf16.msra.mxu0 0
    %1770 = vmatprep.subr.bf16.mxu0 0
    %1771 = vmatpush1.bf16.msra.mxu0 0
    %1772 = vmatprep.subr.bf16.mxu0 0
    %1773 = vmatpush1.bf16.msra.mxu0 %v1719
    %1774 = vmatprep.subr.bf16.mxu0 0
    %1775 = vmatpush1.bf16.msra.mxu0 %v1695
    %1776 = vmatprep.subr.bf16.mxu0 0
    %1777 = vmatpush1.bf16.msra.mxu0 %v1694
    %1778 = vmatprep.subr.bf16.mxu0 0
    %1779 = vmatpush2.bf16.msra.mxu0 0
    %1780 = vmatprep.subr.bf16.mxu0 0
    %1781 = vmatpush2.bf16.msra.mxu0 0
    %1782 = vmatprep.subr.bf16.mxu0 0
    %1783 = vmatpush2.bf16.msra.mxu0 0
    %1784 = vmatprep.subr.bf16.mxu0 0
    %1785 = vmatpush2.bf16.msra.mxu0 0
    %1786 = vmatprep.subr.bf16.mxu0 0
    %1787 = vmatpush2.bf16.msra.mxu0 0
    %1788 = vmatprep.subr.bf16.mxu0 0
    %1789 = vmatpush2.bf16.msra.mxu0 0
    %1790 = vmatprep.subr.bf16.mxu0 0
    %1791 = vmatpush2.bf16.msra.mxu0 0
    %1792 = vmatprep.subr.bf16.mxu0 0
    %1793 = vmatpush2.bf16.msra.mxu0 0
    %1794 = vmatprep.mubr.bf16.mxu0 0
    %1795 = vmatmul.mubr.bf16.gmra.mxu0 %v1716
    %v1796 = vpop.f32.mrf.mxu0
    %v1797 = vadd.f32 %v1756, %v1796
    %v1798 = vpop.f32.mrf.mxu0
    %v1799 = vpop.f32.mrf.mxu0
    %v1800 = vadd.f32 %v1759, %v1799
    %v1801 = vpop.f32.mrf.mxu0
    %1802 = vdwg.mxu0
    %v1805 = vcombine.high %v1797, %v1797
    %v1807 = vunpack.c.l.s4 1983009808
    %v1808 = vunpack.c.0.s8 %v1807
    %v1809 = vlaneseq
    %v1810 = vshrl.u32 %v1809, 7
    %v1811 = vsub.s32 %v1808, %v1810
    %v1812 = vrot.slane %v1797, %v1811
    %v1814 = vunpack.c.l.s4 1983009808
    %v1815 = vunpack.c.0.s8 %v1814
    %v1816 = vlaneseq
    %v1817 = vshrl.u32 %v1816, 7
    %v1818 = vsub.s32 %v1815, %v1817
    %v1819 = vrot.slane %v1805, %v1818
    %v1820 = vcombine.high %v1812, %v1812
    %v1821 = vcombine.high %v1819, %v1819
    %v1823 = vunpack.c.l.s4 1983009808
    %v1824 = vunpack.c.0.s8 %v1823
    %v1825 = vlaneseq
    %v1826 = vshrl.u32 %v1825, 7
    %v1827 = vsub.s32 %v1824, %v1826
    %v1828 = vrot.slane %v1800, %v1827
    %v1829 = vcombine.high %v1828, %v1828
    %v1836 = vld [vmem:[%s0] sm:$0xee]
    %v1837 = vld [vmem:[%s0 + $0x8] sm:$0xe]
    %v1838 = vld [vmem:[%s0 + $0xc] sm:$0xee]
    %v1839 = vld [vmem:[%s0 + $0x14] sm:$0xe]
    %s1840 = scalar_lea.vmem %s3, 304
    %v1841 = vld [vmem:[%s1840] sm:$0xf]
    %v1842 = vld [vmem:[%s1840 + $0x4] sm:$0xf]
    %v1843 = vld [vmem:[%s1840 + $0x8] sm:$0xf]
    %v1844 = vld [vmem:[%s1840 + $0xc] sm:$0xf]
    %v1845 = vld [vmem:[%s1840 + $0x10] sm:$0xf]
    %v1846 = vld [vmem:[%s1840 + $0x14] sm:$0xf]
    %v1847 = vld [vmem:[%s1840 + $0x18] sm:$0xf]
    %v1848 = vld [vmem:[%s1840 + $0x1c] sm:$0xf]
    %v1849 = vld [vmem:[%s1840 + $0x20] sm:$0xf]
    %v1850 = vld [vmem:[%s1840 + $0x24] sm:$0xf]
    %v1851 = vld [vmem:[%s1840 + $0x28] sm:$0xf]
    %v1852 = vld [vmem:[%s1840 + $0x2c] sm:$0xf]
    %v1853 = vld [vmem:[%s1840 + $0x30] sm:$0xf]
    %v1854 = vld [vmem:[%s1840 + $0x34] sm:$0xf]
    %v1855 = vld [vmem:[%s1840 + $0x38] sm:$0xf]
    %v1856 = vld [vmem:[%s1840 + $0x3c] sm:$0xf]
    %v1857 = vld [vmem:[%s1840 + $0x40] sm:$0xf]
    %v1858 = vld [vmem:[%s1840 + $0x44] sm:$0xf]
    %v1859 = vld [vmem:[%s1840 + $0x48] sm:$0xf]
    %v1860 = vld [vmem:[%s1840 + $0x4c] sm:$0xf]
    %v1861 = vld [vmem:[%s1840 + $0x50] sm:$0xf]
    %v1862 = vld [vmem:[%s1840 + $0x54] sm:$0xf]
    %v1863 = vld [vmem:[%s1840 + $0x58] sm:$0xf]
    %v1864 = vld [vmem:[%s1840 + $0x5c] sm:$0xf]
    %v1865 = vld [vmem:[%s1840 + $0x60] sm:$0xf]
    %v1866 = vld [vmem:[%s1840 + $0x64] sm:$0xf]
    %v1867 = vld [vmem:[%s1840 + $0x68] sm:$0xf]
    %v1868 = vld [vmem:[%s1840 + $0x6c] sm:$0xf]
    %v1869 = vld [vmem:[%s1840 + $0x70] sm:$0xf]
    %v1870 = vld [vmem:[%s1840 + $0x74] sm:$0xf]
    %v1871 = vld [vmem:[%s1840 + $0x78] sm:$0xf]
    %v1872 = vld [vmem:[%s1840 + $0x7c] sm:$0xf]
    %v1873 = vld [vmem:[%s1840 + $0x80] sm:$0xf]
    %v1874 = vld [vmem:[%s1840 + $0x84] sm:$0xf]
    %v1875 = vld [vmem:[%s1840 + $0x88] sm:$0xf]
    %v1876 = vld [vmem:[%s1840 + $0x8c] sm:$0xf]
    %v1877 = vld [vmem:[%s1840 + $0x90] sm:$0xf]
    %v1878 = vld [vmem:[%s1840 + $0x94] sm:$0x3]
    %v1884 = vunpack.c.l.s4 1966171168
    %v1885 = vunpack.c.0.s8 %v1884
    %v1886 = vlaneseq
    %v1887 = vshrl.u32 %v1886, 7
    %v1888 = vsub.s32 %v1885, %v1887
    %v1889 = vrot.slane %v1836, %v1888
    %v1891 = vunpack.c.l.s4 1966171168
    %v1892 = vunpack.c.0.s8 %v1891
    %v1893 = vlaneseq
    %v1894 = vshrl.u32 %v1893, 7
    %v1895 = vsub.s32 %v1892, %v1894
    %v1896 = vrot.slane %v1837, %v1895
    %v1897 = vcombine.low %v1889, %v1896
    %v1898 = vcombine.high %v1889, %v1896
    %v1900 = vunpack.c.l.s4 1966171168
    %v1901 = vunpack.c.0.s8 %v1900
    %v1902 = vlaneseq
    %v1903 = vshrl.u32 %v1902, 7
    %v1904 = vsub.s32 %v1901, %v1903
    %v1905 = vrot.slane %v1897, %v1904
    %v1907 = vunpack.c.l.s4 1966171168
    %v1908 = vunpack.c.0.s8 %v1907
    %v1909 = vlaneseq
    %v1910 = vshrl.u32 %v1909, 7
    %v1911 = vsub.s32 %v1908, %v1910
    %v1912 = vrot.slane %v1898, %v1911
    %v1913 = vcombine.high %v1905, %v1905
    %v1914 = vcombine.high %v1912, %v1912
    %v1916 = vunpack.c.l.s4 1966171168
    %v1917 = vunpack.c.0.s8 %v1916
    %v1918 = vlaneseq
    %v1919 = vshrl.u32 %v1918, 7
    %v1920 = vsub.s32 %v1917, %v1919
    %v1921 = vrot.slane %v1838, %v1920
    %v1923 = vunpack.c.l.s4 1966171168
    %v1924 = vunpack.c.0.s8 %v1923
    %v1925 = vlaneseq
    %v1926 = vshrl.u32 %v1925, 7
    %v1927 = vsub.s32 %v1924, %v1926
    %v1928 = vrot.slane %v1839, %v1927
    %v1929 = vcombine.low %v1921, %v1928
    %v1930 = vcombine.high %v1921, %v1928
    %v1932 = vunpack.c.l.s4 1966171168
    %v1933 = vunpack.c.0.s8 %v1932
    %v1934 = vlaneseq
    %v1935 = vshrl.u32 %v1934, 7
    %v1936 = vsub.s32 %v1933, %v1935
    %v1937 = vrot.slane %v1929, %v1936
    %v1939 = vunpack.c.l.s4 1966171168
    %v1940 = vunpack.c.0.s8 %v1939
    %v1941 = vlaneseq
    %v1942 = vshrl.u32 %v1941, 7
    %v1943 = vsub.s32 %v1940, %v1942
    %v1944 = vrot.slane %v1930, %v1943
    %v1945 = vcombine.high %v1937, %v1937
    %v1946 = vcombine.high %v1944, %v1944
    %v1947 = vcombine.low %v1912, %v1913
    %v1948 = vcombine.low %v1914, %v1944
    %v1949 = vcombine.low %v1945, %v1946
    %v1951 = vunpack.c.l.s4 1966171168
    %v1952 = vunpack.c.0.s8 %v1951
    %v1953 = vlaneseq
    %v1954 = vshrl.u32 %v1953, 7
    %v1955 = vsub.s32 %v1952, %v1954
    %v1956 = vrot.slane %v1947, %v1955
    %v1958 = vunpack.c.l.s4 1966171168
    %v1959 = vunpack.c.0.s8 %v1958
    %v1960 = vlaneseq
    %v1961 = vshrl.u32 %v1960, 7
    %v1962 = vsub.s32 %v1959, %v1961
    %v1963 = vrot.slane %v1948, %v1962
    %v1965 = vunpack.c.l.s4 1966171168
    %v1966 = vunpack.c.0.s8 %v1965
    %v1967 = vlaneseq
    %v1968 = vshrl.u32 %v1967, 7
    %v1969 = vsub.s32 %v1966, %v1968
    %v1970 = vrot.slane %v1949, %v1969
    %v1971 = vcombine.low %v1956, %v1963
    %v1972 = vcombine.high %v1956, %v1963
    %v1973 = vcombine.high %v1970, %v1970
    %v1975 = vunpack.c.l.s4 1966171168
    %v1976 = vunpack.c.0.s8 %v1975
    %v1977 = vlaneseq
    %v1978 = vshrl.u32 %v1977, 7
    %v1979 = vsub.s32 %v1976, %v1978
    %v1980 = vrot.slane %v1971, %v1979
    %v1982 = vunpack.c.l.s4 1966171168
    %v1983 = vunpack.c.0.s8 %v1982
    %v1984 = vlaneseq
    %v1985 = vshrl.u32 %v1984, 7
    %v1986 = vsub.s32 %v1983, %v1985
    %v1987 = vrot.slane %v1972, %v1986
    %v1989 = vunpack.c.l.s4 1966171168
    %v1990 = vunpack.c.0.s8 %v1989
    %v1991 = vlaneseq
    %v1992 = vshrl.u32 %v1991, 7
    %v1993 = vsub.s32 %v1990, %v1992
    %v1994 = vrot.slane %v1970, %v1993
    %v1996 = vunpack.c.l.s4 1966171168
    %v1997 = vunpack.c.0.s8 %v1996
    %v1998 = vlaneseq
    %v1999 = vshrl.u32 %v1998, 7
    %v2000 = vsub.s32 %v1997, %v1999
    %v2001 = vrot.slane %v1973, %v2000
    %v2002 = vcombine.low %v1980, %v1994
    %v2003 = vcombine.high %v1980, %v1994
    %v2004 = vcombine.low %v1987, %v2001
    %v2045 = vunpack.c.l.b16 %v1841
    %v2046 = vunpack.c.l.b16 %v1842
    %v2047 = vunpack.c.l.b16 %v1843
    %v2048 = vunpack.c.l.b16 %v1844
    %v2049 = vunpack.c.l.b16 %v1845
    %v2050 = vunpack.c.l.b16 %v1846
    %v2051 = vunpack.c.l.b16 %v1847
    %v2052 = vunpack.c.l.b16 %v1848
    %v2053 = vunpack.c.l.b16 %v1849
    %v2054 = vunpack.c.l.b16 %v1850
    %v2055 = vunpack.c.l.b16 %v1851
    %v2056 = vunpack.c.l.b16 %v1852
    %v2057 = vunpack.c.l.b16 %v1853
    %v2058 = vunpack.c.l.b16 %v1854
    %v2059 = vunpack.c.l.b16 %v1855
    %v2060 = vunpack.c.l.b16 %v1856
    %v2061 = vunpack.c.l.b16 %v1857
    %v2062 = vunpack.c.l.b16 %v1858
    %v2063 = vunpack.c.l.b16 %v1859
    %v2064 = vunpack.c.l.b16 %v1860
    %v2065 = vunpack.c.l.b16 %v1861
    %v2066 = vunpack.c.l.b16 %v1862
    %v2067 = vunpack.c.l.b16 %v1863
    %v2068 = vunpack.c.l.b16 %v1864
    %v2069 = vunpack.c.l.b16 %v1865
    %v2070 = vunpack.c.l.b16 %v1866
    %v2071 = vunpack.c.l.b16 %v1867
    %v2072 = vunpack.c.l.b16 %v1868
    %v2073 = vunpack.c.l.b16 %v1869
    %v2074 = vunpack.c.l.b16 %v1870
    %v2075 = vunpack.c.l.b16 %v1871
    %v2076 = vunpack.c.l.b16 %v1872
    %v2077 = vunpack.c.l.b16 %v1873
    %v2078 = vunpack.c.l.b16 %v1874
    %v2079 = vunpack.c.l.b16 %v1875
    %v2080 = vunpack.c.l.b16 %v1876
    %v2081 = vunpack.c.l.b16 %v1877
    %v2082 = vunpack.c.l.b16 %v1878
    %v2083 = vpack.c.b16 %v2046, %v2045
    %v2084 = vpack.c.b16 %v2048, %v2047
    %v2085 = vpack.c.b16 %v2050, %v2049
    %v2086 = vpack.c.b16 %v2052, %v2051
    %v2087 = vpack.c.b16 %v2054, %v2053
    %v2088 = vpack.c.b16 %v2056, %v2055
    %v2089 = vpack.c.b16 %v2058, %v2057
    %v2090 = vpack.c.b16 %v2060, %v2059
    %v2091 = vpack.c.b16 %v2062, %v2061
    %v2092 = vpack.c.b16 %v2064, %v2063
    %v2093 = vpack.c.b16 %v2066, %v2065
    %v2094 = vpack.c.b16 %v2068, %v2067
    %v2095 = vpack.c.b16 %v2070, %v2069
    %v2096 = vpack.c.b16 %v2072, %v2071
    %v2097 = vpack.c.b16 %v2074, %v2073
    %v2098 = vpack.c.b16 %v2076, %v2075
    %v2099 = vpack.c.b16 %v2078, %v2077
    %v2100 = vpack.c.b16 %v2080, %v2079
    %v2101 = vpack.c.b16 %v2082, %v2081
    %v2121 = vsel %vm391, %v2003, 0
    %v2124 = vsel %vm395, %v2101, 0
    %2126 = vmatprep.subr.bf16.mxu0 0
    %2127 = vmatpush1.bf16.msra.mxu0 %v2090
    %2128 = vmatprep.subr.bf16.mxu0 0
    %2129 = vmatpush1.bf16.msra.mxu0 %v2089
    %2130 = vmatprep.subr.bf16.mxu0 0
    %2131 = vmatpush1.bf16.msra.mxu0 %v2088
    %2132 = vmatprep.subr.bf16.mxu0 0
    %2133 = vmatpush1.bf16.msra.mxu0 %v2087
    %2134 = vmatprep.subr.bf16.mxu0 0
    %2135 = vmatpush1.bf16.msra.mxu0 %v2086
    %2136 = vmatprep.subr.bf16.mxu0 0
    %2137 = vmatpush1.bf16.msra.mxu0 %v2085
    %2138 = vmatprep.subr.bf16.mxu0 0
    %2139 = vmatpush1.bf16.msra.mxu0 %v2084
    %2140 = vmatprep.subr.bf16.mxu0 0
    %2141 = vmatpush1.bf16.msra.mxu0 %v2083
    %2142 = vmatprep.subr.bf16.mxu0 0
    %2143 = vmatpush2.bf16.msra.mxu0 %v2098
    %2144 = vmatprep.subr.bf16.mxu0 0
    %2145 = vmatpush2.bf16.msra.mxu0 %v2097
    %2146 = vmatprep.subr.bf16.mxu0 0
    %2147 = vmatpush2.bf16.msra.mxu0 %v2096
    %2148 = vmatprep.subr.bf16.mxu0 0
    %2149 = vmatpush2.bf16.msra.mxu0 %v2095
    %2150 = vmatprep.subr.bf16.mxu0 0
    %2151 = vmatpush2.bf16.msra.mxu0 %v2094
    %2152 = vmatprep.subr.bf16.mxu0 0
    %2153 = vmatpush2.bf16.msra.mxu0 %v2093
    %2154 = vmatprep.subr.bf16.mxu0 0
    %2155 = vmatpush2.bf16.msra.mxu0 %v2092
    %2156 = vmatprep.subr.bf16.mxu0 0
    %2157 = vmatpush2.bf16.msra.mxu0 %v2091
    %2158 = vmatprep.mubr.bf16.mxu0 %v2004
    %2159 = vmatmul.mubr.bf16.gmra.mxu0 %v2002
    %v2160 = vpop.f32.mrf.mxu0
    %v2161 = vadd.f32 0.0, %v2160
    %v2162 = vpop.f32.mrf.mxu0
    %v2163 = vpop.f32.mrf.mxu0
    %v2164 = vadd.f32 0.0, %v2163
    %v2165 = vpop.f32.mrf.mxu0
    %2166 = vdwg.mxu0
    %2167 = vmatprep.subr.bf16.mxu0 0
    %2168 = vmatpush1.bf16.msra.mxu0 0
    %2169 = vmatprep.subr.bf16.mxu0 0
    %2170 = vmatpush1.bf16.msra.mxu0 0
    %2171 = vmatprep.subr.bf16.mxu0 0
    %2172 = vmatpush1.bf16.msra.mxu0 0
    %2173 = vmatprep.subr.bf16.mxu0 0
    %2174 = vmatpush1.bf16.msra.mxu0 0
    %2175 = vmatprep.subr.bf16.mxu0 0
    %2176 = vmatpush1.bf16.msra.mxu0 0
    %2177 = vmatprep.subr.bf16.mxu0 0
    %2178 = vmatpush1.bf16.msra.mxu0 %v2124
    %2179 = vmatprep.subr.bf16.mxu0 0
    %2180 = vmatpush1.bf16.msra.mxu0 %v2100
    %2181 = vmatprep.subr.bf16.mxu0 0
    %2182 = vmatpush1.bf16.msra.mxu0 %v2099
    %2183 = vmatprep.subr.bf16.mxu0 0
    %2184 = vmatpush2.bf16.msra.mxu0 0
    %2185 = vmatprep.subr.bf16.mxu0 0
    %2186 = vmatpush2.bf16.msra.mxu0 0
    %2187 = vmatprep.subr.bf16.mxu0 0
    %2188 = vmatpush2.bf16.msra.mxu0 0
    %2189 = vmatprep.subr.bf16.mxu0 0
    %2190 = vmatpush2.bf16.msra.mxu0 0
    %2191 = vmatprep.subr.bf16.mxu0 0
    %2192 = vmatpush2.bf16.msra.mxu0 0
    %2193 = vmatprep.subr.bf16.mxu0 0
    %2194 = vmatpush2.bf16.msra.mxu0 0
    %2195 = vmatprep.subr.bf16.mxu0 0
    %2196 = vmatpush2.bf16.msra.mxu0 0
    %2197 = vmatprep.subr.bf16.mxu0 0
    %2198 = vmatpush2.bf16.msra.mxu0 0
    %2199 = vmatprep.mubr.bf16.mxu0 0
    %2200 = vmatmul.mubr.bf16.gmra.mxu0 %v2121
    %v2201 = vpop.f32.mrf.mxu0
    %v2202 = vadd.f32 %v2161, %v2201
    %v2203 = vpop.f32.mrf.mxu0
    %v2204 = vpop.f32.mrf.mxu0
    %v2205 = vadd.f32 %v2164, %v2204
    %v2206 = vpop.f32.mrf.mxu0
    %2207 = vdwg.mxu0
    %v2210 = vcombine.high %v2202, %v2202
    %v2212 = vunpack.c.l.s4 1983009808
    %v2213 = vunpack.c.0.s8 %v2212
    %v2214 = vlaneseq
    %v2215 = vshrl.u32 %v2214, 7
    %v2216 = vsub.s32 %v2213, %v2215
    %v2217 = vrot.slane %v2202, %v2216
    %v2219 = vunpack.c.l.s4 1983009808
    %v2220 = vunpack.c.0.s8 %v2219
    %v2221 = vlaneseq
    %v2222 = vshrl.u32 %v2221, 7
    %v2223 = vsub.s32 %v2220, %v2222
    %v2224 = vrot.slane %v2210, %v2223
    %v2225 = vcombine.high %v2217, %v2217
    %v2226 = vcombine.high %v2224, %v2224
    %v2228 = vunpack.c.l.s4 1983009808
    %v2229 = vunpack.c.0.s8 %v2228
    %v2230 = vlaneseq
    %v2231 = vshrl.u32 %v2230, 7
    %v2232 = vsub.s32 %v2229, %v2231
    %v2233 = vrot.slane %v2205, %v2232
    %v2234 = vcombine.high %v2233, %v2233
    %v2241 = vadd.f32 %v1812, %v2217
    %v2242 = vadd.f32 %v1820, %v2225
    %v2243 = vadd.f32 %v1819, %v2224
    %v2244 = vadd.f32 %v1821, %v2226
    %v2245 = vadd.f32 %v1828, %v2233
    %v2246 = vadd.f32 %v1829, %v2234
    %v2253 = vcombine.low %v2241, %v2242
    %v2255 = vunpack.c.l.s4 1983009808
    %v2256 = vunpack.c.0.s8 %v2255
    %v2257 = vlaneseq
    %v2258 = vshrl.u32 %v2257, 7
    %v2259 = vsub.s32 %v2256, %v2258
    %v2260 = vrot.slane %v2253, %v2259
    %v2262 = vunpack.c.l.s4 1983009808
    %v2263 = vunpack.c.0.s8 %v2262
    %v2264 = vlaneseq
    %v2265 = vshrl.u32 %v2264, 7
    %v2266 = vsub.s32 %v2263, %v2265
    %v2267 = vrot.slane %v2243, %v2266
    %v2268 = vcombine.low %v2260, %v2267
    %v2269 = vcombine.low %v2244, %v2245
    %v2271 = vunpack.c.l.s4 1983009808
    %v2272 = vunpack.c.0.s8 %v2271
    %v2273 = vlaneseq
    %v2274 = vshrl.u32 %v2273, 7
    %v2275 = vsub.s32 %v2272, %v2274
    %v2276 = vrot.slane %v2269, %v2275
    %v2278 = vunpack.c.l.s4 1983009808
    %v2279 = vunpack.c.0.s8 %v2278
    %v2280 = vlaneseq
    %v2281 = vshrl.u32 %v2280, 7
    %v2282 = vsub.s32 %v2279, %v2281
    %v2283 = vrot.slane %v2246, %v2282
    %v2284 = vcombine.low %v2276, %v2283
    %v2287 = vsel %vm395, %v2268, -inf
    %v2288 = vrot.slane %v2287, 4
    %v2289 = vmax.f32 %v2287, %v2288
    %v2290 = vrot.slane %v2289, 2
    %v2291 = vmax.f32 %v2289, %v2290
    %v2292 = vrot.slane %v2291, 1
    %v2293 = vmax.f32 %v2291, %v2292
    %v2294 = vsel %vm395, %v2284, -inf
    %v2295 = vrot.slane %v2294, 4
    %v2296 = vmax.f32 %v2294, %v2295
    %v2297 = vrot.slane %v2296, 2
    %v2298 = vmax.f32 %v2296, %v2297
    %v2299 = vrot.slane %v2298, 1
    %v2300 = vmax.f32 %v2298, %v2299
    %v2301 = vld [vmem:[%s4] sm:$0x1]
    %v2303 = vlaneseq
    %v2304 = vshrl.u32 %v2303, 7
    %v2305 = vsub.s32 0, %v2304
    %v2306 = vrot.slane %v2301, %v2305
    %v2308 = vadd.f32 %v2293, %v2306
    %v2309 = vadd.f32 %v2300, %v2306
    %v2310 = vmax.f32 %v2308, 0.0
    %v2311 = vmax.f32 %v2309, 0.0
    %v2312 = vld [vmem:[%s8] sm:$0xff]
    %v2313 = vld [vmem:[%s8 + $0x8] sm:$0xff]
    %v2314 = vld [vmem:[%s8 + $0x10] sm:$0xff]
    %v2315 = vld [vmem:[%s8 + $0x18] sm:$0xff]
    %v2316 = vld [vmem:[%s8 + $0x20] sm:$0xff]
    %v2317 = vld [vmem:[%s8 + $0x28] sm:$0xff]
    %v2318 = vld [vmem:[%s8 + $0x30] sm:$0xff]
    %v2319 = vld [vmem:[%s8 + $0x38] sm:$0xff]
    %v2320 = vld [vmem:[%s8 + $0x40] sm:$0xff]
    %v2321 = vld [vmem:[%s8 + $0x48] sm:$0xff]
    %v2322 = vld [vmem:[%s8 + $0x50] sm:$0xff]
    %v2323 = vld [vmem:[%s8 + $0x58] sm:$0xff]
    %v2324 = vld [vmem:[%s8 + $0x60] sm:$0xff]
    %v2325 = vld [vmem:[%s8 + $0x68] sm:$0xff]
    %v2326 = vld [vmem:[%s8 + $0x70] sm:$0xff]
    %v2327 = vld [vmem:[%s8 + $0x78] sm:$0xff]
    %v2330 = vrot.slane %v2311, 7
    %vm2331 = vcmask 1041409
    %v2332 = vsel %vm2331, %v2330, %v2310
    %2334 = vmatprep.subr.mxu0 0.0
    %2335 = vmatpush1.msra.mxu0 %v2327
    %2336 = vmatprep.subr.mxu0 0.0
    %2337 = vmatpush1.msra.mxu0 %v2326
    %2338 = vmatprep.subr.mxu0 0.0
    %2339 = vmatpush1.msra.mxu0 %v2325
    %2340 = vmatprep.subr.mxu0 0.0
    %2341 = vmatpush1.msra.mxu0 %v2324
    %2342 = vmatprep.subr.mxu0 0.0
    %2343 = vmatpush1.msra.mxu0 %v2323
    %2344 = vmatprep.subr.mxu0 0.0
    %2345 = vmatpush1.msra.mxu0 %v2322
    %2346 = vmatprep.subr.mxu0 0.0
    %2347 = vmatpush1.msra.mxu0 %v2321
    %2348 = vmatprep.subr.mxu0 0.0
    %2349 = vmatpush1.msra.mxu0 %v2320
    %2350 = vmatprep.subr.mxu0 0.0
    %2351 = vmatpush1.msra.mxu0 %v2319
    %2352 = vmatprep.subr.mxu0 0.0
    %2353 = vmatpush1.msra.mxu0 %v2318
    %2354 = vmatprep.subr.mxu0 0.0
    %2355 = vmatpush1.msra.mxu0 %v2317
    %2356 = vmatprep.subr.mxu0 0.0
    %2357 = vmatpush1.msra.mxu0 %v2316
    %2358 = vmatprep.subr.mxu0 0.0
    %2359 = vmatpush1.msra.mxu0 %v2315
    %2360 = vmatprep.subr.mxu0 0.0
    %2361 = vmatpush1.msra.mxu0 %v2314
    %2362 = vmatprep.subr.mxu0 0.0
    %2363 = vmatpush1.msra.mxu0 %v2313
    %2364 = vmatprep.subr.mxu0 0.0
    %2365 = vmatpush1.msra.mxu0 %v2312
    %2366 = vmatprep.subr.mxu0 0.0
    %2367 = vmatpush2.msra.mxu0 0.0
    %2368 = vmatprep.subr.mxu0 0.0
    %2369 = vmatpush2.msra.mxu0 0.0
    %2370 = vmatprep.subr.mxu0 0.0
    %2371 = vmatpush2.msra.mxu0 0.0
    %2372 = vmatprep.subr.mxu0 0.0
    %2373 = vmatpush2.msra.mxu0 0.0
    %2374 = vmatprep.subr.mxu0 0.0
    %2375 = vmatpush2.msra.mxu0 0.0
    %2376 = vmatprep.subr.mxu0 0.0
    %2377 = vmatpush2.msra.mxu0 0.0
    %2378 = vmatprep.subr.mxu0 0.0
    %2379 = vmatpush2.msra.mxu0 0.0
    %2380 = vmatprep.subr.mxu0 0.0
    %2381 = vmatpush2.msra.mxu0 0.0
    %2382 = vmatprep.subr.mxu0 0.0
    %2383 = vmatpush2.msra.mxu0 0.0
    %2384 = vmatprep.subr.mxu0 0.0
    %2385 = vmatpush2.msra.mxu0 0.0
    %2386 = vmatprep.subr.mxu0 0.0
    %2387 = vmatpush2.msra.mxu0 0.0
    %2388 = vmatprep.subr.mxu0 0.0
    %2389 = vmatpush2.msra.mxu0 0.0
    %2390 = vmatprep.subr.mxu0 0.0
    %2391 = vmatpush2.msra.mxu0 0.0
    %2392 = vmatprep.subr.mxu0 0.0
    %2393 = vmatpush2.msra.mxu0 0.0
    %2394 = vmatprep.subr.mxu0 0.0
    %2395 = vmatpush2.msra.mxu0 0.0
    %2396 = vmatprep.subr.mxu0 0.0
    %2397 = vmatpush2.msra.mxu0 0.0
    %2398 = vmatprep.mubr.f32.mxu0 0.0
    %2399 = vmatmul.mubr.f32.gmra.mxu0 %v2332
    %v2400 = vpop.f32.mrf.mxu0
    %v2401 = vadd.f32 0.0, %v2400
    %v2402 = vpop.f32.mrf.mxu0
    %2403 = vdwg.mxu0
    %v2406 = vrot.slane %v980, 7
    %v2407 = vsel %vm2331, %v2406, %v979
    %2409 = vmatprep.subr.mxu0 0.0
    %2410 = vmatpush1.msra.mxu0 %v996
    %2411 = vmatprep.subr.mxu0 0.0
    %2412 = vmatpush1.msra.mxu0 %v995
    %2413 = vmatprep.subr.mxu0 0.0
    %2414 = vmatpush1.msra.mxu0 %v994
    %2415 = vmatprep.subr.mxu0 0.0
    %2416 = vmatpush1.msra.mxu0 %v993
    %2417 = vmatprep.subr.mxu0 0.0
    %2418 = vmatpush1.msra.mxu0 %v992
    %2419 = vmatprep.subr.mxu0 0.0
    %2420 = vmatpush1.msra.mxu0 %v991
    %2421 = vmatprep.subr.mxu0 0.0
    %2422 = vmatpush1.msra.mxu0 %v990
    %2423 = vmatprep.subr.mxu0 0.0
    %2424 = vmatpush1.msra.mxu0 %v989
    %2425 = vmatprep.subr.mxu0 0.0
    %2426 = vmatpush1.msra.mxu0 %v988
    %2427 = vmatprep.subr.mxu0 0.0
    %2428 = vmatpush1.msra.mxu0 %v987
    %2429 = vmatprep.subr.mxu0 0.0
    %2430 = vmatpush1.msra.mxu0 %v986
    %2431 = vmatprep.subr.mxu0 0.0
    %2432 = vmatpush1.msra.mxu0 %v985
    %2433 = vmatprep.subr.mxu0 0.0
    %2434 = vmatpush1.msra.mxu0 %v984
    %2435 = vmatprep.subr.mxu0 0.0
    %2436 = vmatpush1.msra.mxu0 %v983
    %2437 = vmatprep.subr.mxu0 0.0
    %2438 = vmatpush1.msra.mxu0 %v982
    %2439 = vmatprep.subr.mxu0 0.0
    %2440 = vmatpush1.msra.mxu0 %v981
    %2441 = vmatprep.subr.mxu0 0.0
    %2442 = vmatpush2.msra.mxu0 0.0
    %2443 = vmatprep.subr.mxu0 0.0
    %2444 = vmatpush2.msra.mxu0 0.0
    %2445 = vmatprep.subr.mxu0 0.0
    %2446 = vmatpush2.msra.mxu0 0.0
    %2447 = vmatprep.subr.mxu0 0.0
    %2448 = vmatpush2.msra.mxu0 0.0
    %2449 = vmatprep.subr.mxu0 0.0
    %2450 = vmatpush2.msra.mxu0 0.0
    %2451 = vmatprep.subr.mxu0 0.0
    %2452 = vmatpush2.msra.mxu0 0.0
    %2453 = vmatprep.subr.mxu0 0.0
    %2454 = vmatpush2.msra.mxu0 0.0
    %2455 = vmatprep.subr.mxu0 0.0
    %2456 = vmatpush2.msra.mxu0 0.0
    %2457 = vmatprep.subr.mxu0 0.0
    %2458 = vmatpush2.msra.mxu0 0.0
    %2459 = vmatprep.subr.mxu0 0.0
    %2460 = vmatpush2.msra.mxu0 0.0
    %2461 = vmatprep.subr.mxu0 0.0
    %2462 = vmatpush2.msra.mxu0 0.0
    %2463 = vmatprep.subr.mxu0 0.0
    %2464 = vmatpush2.msra.mxu0 0.0
    %2465 = vmatprep.subr.mxu0 0.0
    %2466 = vmatpush2.msra.mxu0 0.0
    %2467 = vmatprep.subr.mxu0 0.0
    %2468 = vmatpush2.msra.mxu0 0.0
    %2469 = vmatprep.subr.mxu0 0.0
    %2470 = vmatpush2.msra.mxu0 0.0
    %2471 = vmatprep.subr.mxu0 0.0
    %2472 = vmatpush2.msra.mxu0 0.0
    %2473 = vmatprep.mubr.f32.mxu0 0.0
    %2474 = vmatmul.mubr.f32.gmra.mxu0 %v2407
    %v2475 = vpop.f32.mrf.mxu0
    %v2476 = vadd.f32 %v2401, %v2475
    %v2477 = vpop.f32.mrf.mxu0
    %2478 = vdwg.mxu0
    %v2479 = vld [vmem:[%s0] sm:$0x77]
    %v2480 = vld [vmem:[%s0 + $0x8] sm:$0x7]
    %v2481 = vld [vmem:[%s0 + $0xc] sm:$0x77]
    %v2482 = vld [vmem:[%s0 + $0x14] sm:$0x7]
    %v2483 = vld [vmem:[%s5] sm:$0xf]
    %v2484 = vld [vmem:[%s5 + $0x4] sm:$0xf]
    %v2485 = vld [vmem:[%s5 + $0x8] sm:$0xf]
    %v2486 = vld [vmem:[%s5 + $0xc] sm:$0xf]
    %v2487 = vld [vmem:[%s5 + $0x10] sm:$0xf]
    %v2488 = vld [vmem:[%s5 + $0x14] sm:$0xf]
    %v2489 = vld [vmem:[%s5 + $0x18] sm:$0xf]
    %v2490 = vld [vmem:[%s5 + $0x1c] sm:$0xf]
    %v2491 = vld [vmem:[%s5 + $0x20] sm:$0xf]
    %v2492 = vld [vmem:[%s5 + $0x24] sm:$0xf]
    %v2493 = vld [vmem:[%s5 + $0x28] sm:$0xf]
    %v2494 = vld [vmem:[%s5 + $0x2c] sm:$0xf]
    %v2495 = vld [vmem:[%s5 + $0x30] sm:$0xf]
    %v2496 = vld [vmem:[%s5 + $0x34] sm:$0xf]
    %v2497 = vld [vmem:[%s5 + $0x38] sm:$0xf]
    %v2498 = vld [vmem:[%s5 + $0x3c] sm:$0xf]
    %v2499 = vld [vmem:[%s5 + $0x40] sm:$0xf]
    %v2500 = vld [vmem:[%s5 + $0x44] sm:$0xf]
    %v2501 = vld [vmem:[%s5 + $0x48] sm:$0xf]
    %v2502 = vld [vmem:[%s5 + $0x4c] sm:$0xf]
    %v2503 = vld [vmem:[%s5 + $0x50] sm:$0xf]
    %v2504 = vld [vmem:[%s5 + $0x54] sm:$0xf]
    %v2505 = vld [vmem:[%s5 + $0x58] sm:$0xf]
    %v2506 = vld [vmem:[%s5 + $0x5c] sm:$0xf]
    %v2507 = vld [vmem:[%s5 + $0x60] sm:$0xf]
    %v2508 = vld [vmem:[%s5 + $0x64] sm:$0xf]
    %v2509 = vld [vmem:[%s5 + $0x68] sm:$0xf]
    %v2510 = vld [vmem:[%s5 + $0x6c] sm:$0xf]
    %v2511 = vld [vmem:[%s5 + $0x70] sm:$0xf]
    %v2512 = vld [vmem:[%s5 + $0x74] sm:$0xf]
    %v2513 = vld [vmem:[%s5 + $0x78] sm:$0xf]
    %v2514 = vld [vmem:[%s5 + $0x7c] sm:$0xf]
    %v2515 = vld [vmem:[%s5 + $0x80] sm:$0xf]
    %v2516 = vld [vmem:[%s5 + $0x84] sm:$0xf]
    %v2517 = vld [vmem:[%s5 + $0x88] sm:$0xf]
    %v2518 = vld [vmem:[%s5 + $0x8c] sm:$0xf]
    %v2519 = vld [vmem:[%s5 + $0x90] sm:$0xf]
    %v2520 = vld [vmem:[%s5 + $0x94] sm:$0x3]
    %s2521 = scalar_lea.vmem %s5, 152
    %v2522 = vld [vmem:[%s2521] sm:$0xf]
    %v2523 = vld [vmem:[%s2521 + $0x4] sm:$0xf]
    %v2524 = vld [vmem:[%s2521 + $0x8] sm:$0xf]
    %v2525 = vld [vmem:[%s2521 + $0xc] sm:$0xf]
    %v2526 = vld [vmem:[%s2521 + $0x10] sm:$0xf]
    %v2527 = vld [vmem:[%s2521 + $0x14] sm:$0xf]
    %v2528 = vld [vmem:[%s2521 + $0x18] sm:$0xf]
    %v2529 = vld [vmem:[%s2521 + $0x1c] sm:$0xf]
    %v2530 = vld [vmem:[%s2521 + $0x20] sm:$0xf]
    %v2531 = vld [vmem:[%s2521 + $0x24] sm:$0xf]
    %v2532 = vld [vmem:[%s2521 + $0x28] sm:$0xf]
    %v2533 = vld [vmem:[%s2521 + $0x2c] sm:$0xf]
    %v2534 = vld [vmem:[%s2521 + $0x30] sm:$0xf]
    %v2535 = vld [vmem:[%s2521 + $0x34] sm:$0xf]
    %v2536 = vld [vmem:[%s2521 + $0x38] sm:$0xf]
    %v2537 = vld [vmem:[%s2521 + $0x3c] sm:$0xf]
    %v2538 = vld [vmem:[%s2521 + $0x40] sm:$0xf]
    %v2539 = vld [vmem:[%s2521 + $0x44] sm:$0xf]
    %v2540 = vld [vmem:[%s2521 + $0x48] sm:$0xf]
    %v2541 = vld [vmem:[%s2521 + $0x4c] sm:$0xf]
    %v2542 = vld [vmem:[%s2521 + $0x50] sm:$0xf]
    %v2543 = vld [vmem:[%s2521 + $0x54] sm:$0xf]
    %v2544 = vld [vmem:[%s2521 + $0x58] sm:$0xf]
    %v2545 = vld [vmem:[%s2521 + $0x5c] sm:$0xf]
    %v2546 = vld [vmem:[%s2521 + $0x60] sm:$0xf]
    %v2547 = vld [vmem:[%s2521 + $0x64] sm:$0xf]
    %v2548 = vld [vmem:[%s2521 + $0x68] sm:$0xf]
    %v2549 = vld [vmem:[%s2521 + $0x6c] sm:$0xf]
    %v2550 = vld [vmem:[%s2521 + $0x70] sm:$0xf]
    %v2551 = vld [vmem:[%s2521 + $0x74] sm:$0xf]
    %v2552 = vld [vmem:[%s2521 + $0x78] sm:$0xf]
    %v2553 = vld [vmem:[%s2521 + $0x7c] sm:$0xf]
    %v2554 = vld [vmem:[%s2521 + $0x80] sm:$0xf]
    %v2555 = vld [vmem:[%s2521 + $0x84] sm:$0xf]
    %v2556 = vld [vmem:[%s2521 + $0x88] sm:$0xf]
    %v2557 = vld [vmem:[%s2521 + $0x8c] sm:$0xf]
    %v2558 = vld [vmem:[%s2521 + $0x90] sm:$0xf]
    %v2559 = vld [vmem:[%s2521 + $0x94] sm:$0x3]
    %v2565 = vunpack.c.l.s4 1966171168
    %v2566 = vunpack.c.0.s8 %v2565
    %v2567 = vlaneseq
    %v2568 = vshrl.u32 %v2567, 7
    %v2569 = vsub.s32 %v2566, %v2568
    %v2570 = vrot.slane %v2479, %v2569
    %v2572 = vunpack.c.l.s4 1966171168
    %v2573 = vunpack.c.0.s8 %v2572
    %v2574 = vlaneseq
    %v2575 = vshrl.u32 %v2574, 7
    %v2576 = vsub.s32 %v2573, %v2575
    %v2577 = vrot.slane %v2480, %v2576
    %v2578 = vcombine.low %v2570, %v2577
    %v2579 = vcombine.high %v2570, %v2577
    %v2581 = vunpack.c.l.s4 1966171168
    %v2582 = vunpack.c.0.s8 %v2581
    %v2583 = vlaneseq
    %v2584 = vshrl.u32 %v2583, 7
    %v2585 = vsub.s32 %v2582, %v2584
    %v2586 = vrot.slane %v2578, %v2585
    %v2588 = vunpack.c.l.s4 1966171168
    %v2589 = vunpack.c.0.s8 %v2588
    %v2590 = vlaneseq
    %v2591 = vshrl.u32 %v2590, 7
    %v2592 = vsub.s32 %v2589, %v2591
    %v2593 = vrot.slane %v2579, %v2592
    %v2594 = vcombine.high %v2586, %v2586
    %v2596 = vunpack.c.l.s4 1966171168
    %v2597 = vunpack.c.0.s8 %v2596
    %v2598 = vlaneseq
    %v2599 = vshrl.u32 %v2598, 7
    %v2600 = vsub.s32 %v2597, %v2599
    %v2601 = vrot.slane %v2481, %v2600
    %v2603 = vunpack.c.l.s4 1966171168
    %v2604 = vunpack.c.0.s8 %v2603
    %v2605 = vlaneseq
    %v2606 = vshrl.u32 %v2605, 7
    %v2607 = vsub.s32 %v2604, %v2606
    %v2608 = vrot.slane %v2482, %v2607
    %v2609 = vcombine.low %v2601, %v2608
    %v2610 = vcombine.high %v2601, %v2608
    %v2612 = vunpack.c.l.s4 1966171168
    %v2613 = vunpack.c.0.s8 %v2612
    %v2614 = vlaneseq
    %v2615 = vshrl.u32 %v2614, 7
    %v2616 = vsub.s32 %v2613, %v2615
    %v2617 = vrot.slane %v2609, %v2616
    %v2619 = vunpack.c.l.s4 1966171168
    %v2620 = vunpack.c.0.s8 %v2619
    %v2621 = vlaneseq
    %v2622 = vshrl.u32 %v2621, 7
    %v2623 = vsub.s32 %v2620, %v2622
    %v2624 = vrot.slane %v2610, %v2623
    %v2625 = vcombine.high %v2617, %v2617
    %v2626 = vunpack.i.h.s16 %v2586
    %v2627 = vunpack.i.l.s16 %v2593
    %v2628 = vunpack.i.h.s16 %v2593
    %v2629 = vunpack.i.l.s16 %v2594
    %v2630 = vunpack.i.h.s16 %v2594
    %v2631 = vunpack.i.h.s16 %v2617
    %v2632 = vunpack.i.l.s16 %v2624
    %v2633 = vunpack.i.h.s16 %v2624
    %v2634 = vunpack.i.l.s16 %v2625
    %v2635 = vunpack.i.h.s16 %v2625
    %v2636 = vpack.i.b16 %v2627, %v2626
    %v2637 = vpack.i.b16 %v2629, %v2628
    %v2638 = vpack.i.b16 %v2631, %v2630
    %v2639 = vpack.i.b16 %v2633, %v2632
    %v2640 = vpack.i.b16 %v2635, %v2634
    %v2641 = vcombine.low %v2636, %v2637
    %v2642 = vcombine.low %v2638, %v2639
    %v2644 = vunpack.c.l.s4 1966171168
    %v2645 = vunpack.c.0.s8 %v2644
    %v2646 = vlaneseq
    %v2647 = vshrl.u32 %v2646, 7
    %v2648 = vsub.s32 %v2645, %v2647
    %v2649 = vrot.slane %v2641, %v2648
    %v2651 = vunpack.c.l.s4 1966171168
    %v2652 = vunpack.c.0.s8 %v2651
    %v2653 = vlaneseq
    %v2654 = vshrl.u32 %v2653, 7
    %v2655 = vsub.s32 %v2652, %v2654
    %v2656 = vrot.slane %v2642, %v2655
    %v2658 = vunpack.c.l.s4 1966171168
    %v2659 = vunpack.c.0.s8 %v2658
    %v2660 = vlaneseq
    %v2661 = vshrl.u32 %v2660, 7
    %v2662 = vsub.s32 %v2659, %v2661
    %v2663 = vrot.slane %v2640, %v2662
    %v2664 = vcombine.low %v2649, %v2656
    %v2665 = vcombine.high %v2649, %v2656
    %v2666 = vcombine.high %v2663, %v2663
    %v2668 = vunpack.c.l.s4 1966171168
    %v2669 = vunpack.c.0.s8 %v2668
    %v2670 = vlaneseq
    %v2671 = vshrl.u32 %v2670, 7
    %v2672 = vsub.s32 %v2669, %v2671
    %v2673 = vrot.slane %v2664, %v2672
    %v2675 = vunpack.c.l.s4 1966171168
    %v2676 = vunpack.c.0.s8 %v2675
    %v2677 = vlaneseq
    %v2678 = vshrl.u32 %v2677, 7
    %v2679 = vsub.s32 %v2676, %v2678
    %v2680 = vrot.slane %v2665, %v2679
    %v2682 = vunpack.c.l.s4 1966171168
    %v2683 = vunpack.c.0.s8 %v2682
    %v2684 = vlaneseq
    %v2685 = vshrl.u32 %v2684, 7
    %v2686 = vsub.s32 %v2683, %v2685
    %v2687 = vrot.slane %v2663, %v2686
    %v2689 = vunpack.c.l.s4 1966171168
    %v2690 = vunpack.c.0.s8 %v2689
    %v2691 = vlaneseq
    %v2692 = vshrl.u32 %v2691, 7
    %v2693 = vsub.s32 %v2690, %v2692
    %v2694 = vrot.slane %v2666, %v2693
    %v2695 = vcombine.low %v2673, %v2687
    %v2696 = vcombine.high %v2673, %v2687
    %v2697 = vcombine.low %v2680, %v2694
    %v2738 = vunpack.c.l.b16 %v2522
    %v2739 = vunpack.c.l.b16 %v2523
    %v2740 = vunpack.c.l.b16 %v2524
    %v2741 = vunpack.c.l.b16 %v2525
    %v2742 = vunpack.c.l.b16 %v2526
    %v2743 = vunpack.c.l.b16 %v2527
    %v2744 = vunpack.c.l.b16 %v2528
    %v2745 = vunpack.c.l.b16 %v2529
    %v2746 = vunpack.c.l.b16 %v2530
    %v2747 = vunpack.c.l.b16 %v2531
    %v2748 = vunpack.c.l.b16 %v2532
    %v2749 = vunpack.c.l.b16 %v2533
    %v2750 = vunpack.c.l.b16 %v2534
    %v2751 = vunpack.c.l.b16 %v2535
    %v2752 = vunpack.c.l.b16 %v2536
    %v2753 = vunpack.c.l.b16 %v2537
    %v2754 = vunpack.c.l.b16 %v2538
    %v2755 = vunpack.c.l.b16 %v2539
    %v2756 = vunpack.c.l.b16 %v2540
    %v2757 = vunpack.c.l.b16 %v2541
    %v2758 = vunpack.c.l.b16 %v2542
    %v2759 = vunpack.c.l.b16 %v2543
    %v2760 = vunpack.c.l.b16 %v2544
    %v2761 = vunpack.c.l.b16 %v2545
    %v2762 = vunpack.c.l.b16 %v2546
    %v2763 = vunpack.c.l.b16 %v2547
    %v2764 = vunpack.c.l.b16 %v2548
    %v2765 = vunpack.c.l.b16 %v2549
    %v2766 = vunpack.c.l.b16 %v2550
    %v2767 = vunpack.c.l.b16 %v2551
    %v2768 = vunpack.c.l.b16 %v2552
    %v2769 = vunpack.c.l.b16 %v2553
    %v2770 = vunpack.c.l.b16 %v2554
    %v2771 = vunpack.c.l.b16 %v2555
    %v2772 = vunpack.c.l.b16 %v2556
    %v2773 = vunpack.c.l.b16 %v2557
    %v2774 = vunpack.c.l.b16 %v2558
    %v2775 = vunpack.c.l.b16 %v2559
    %v2776 = vpack.c.b16 %v2739, %v2738
    %v2777 = vpack.c.b16 %v2741, %v2740
    %v2778 = vpack.c.b16 %v2743, %v2742
    %v2779 = vpack.c.b16 %v2745, %v2744
    %v2780 = vpack.c.b16 %v2747, %v2746
    %v2781 = vpack.c.b16 %v2749, %v2748
    %v2782 = vpack.c.b16 %v2751, %v2750
    %v2783 = vpack.c.b16 %v2753, %v2752
    %v2784 = vpack.c.b16 %v2755, %v2754
    %v2785 = vpack.c.b16 %v2757, %v2756
    %v2786 = vpack.c.b16 %v2759, %v2758
    %v2787 = vpack.c.b16 %v2761, %v2760
    %v2788 = vpack.c.b16 %v2763, %v2762
    %v2789 = vpack.c.b16 %v2765, %v2764
    %v2790 = vpack.c.b16 %v2767, %v2766
    %v2791 = vpack.c.b16 %v2769, %v2768
    %v2792 = vpack.c.b16 %v2771, %v2770
    %v2793 = vpack.c.b16 %v2773, %v2772
    %v2794 = vpack.c.b16 %v2775, %v2774
    %v2814 = vsel %vm391, %v2696, 0
    %v2817 = vsel %vm395, %v2794, 0
    %2819 = vmatprep.subr.bf16.mxu0 0
    %2820 = vmatpush1.bf16.msra.mxu0 %v2783
    %2821 = vmatprep.subr.bf16.mxu0 0
    %2822 = vmatpush1.bf16.msra.mxu0 %v2782
    %2823 = vmatprep.subr.bf16.mxu0 0
    %2824 = vmatpush1.bf16.msra.mxu0 %v2781
    %2825 = vmatprep.subr.bf16.mxu0 0
    %2826 = vmatpush1.bf16.msra.mxu0 %v2780
    %2827 = vmatprep.subr.bf16.mxu0 0
    %2828 = vmatpush1.bf16.msra.mxu0 %v2779
    %2829 = vmatprep.subr.bf16.mxu0 0
    %2830 = vmatpush1.bf16.msra.mxu0 %v2778
    %2831 = vmatprep.subr.bf16.mxu0 0
    %2832 = vmatpush1.bf16.msra.mxu0 %v2777
    %2833 = vmatprep.subr.bf16.mxu0 0
    %2834 = vmatpush1.bf16.msra.mxu0 %v2776
    %2835 = vmatprep.subr.bf16.mxu0 0
    %2836 = vmatpush2.bf16.msra.mxu0 %v2791
    %2837 = vmatprep.subr.bf16.mxu0 0
    %2838 = vmatpush2.bf16.msra.mxu0 %v2790
    %2839 = vmatprep.subr.bf16.mxu0 0
    %2840 = vmatpush2.bf16.msra.mxu0 %v2789
    %2841 = vmatprep.subr.bf16.mxu0 0
    %2842 = vmatpush2.bf16.msra.mxu0 %v2788
    %2843 = vmatprep.subr.bf16.mxu0 0
    %2844 = vmatpush2.bf16.msra.mxu0 %v2787
    %2845 = vmatprep.subr.bf16.mxu0 0
    %2846 = vmatpush2.bf16.msra.mxu0 %v2786
    %2847 = vmatprep.subr.bf16.mxu0 0
    %2848 = vmatpush2.bf16.msra.mxu0 %v2785
    %2849 = vmatprep.subr.bf16.mxu0 0
    %2850 = vmatpush2.bf16.msra.mxu0 %v2784
    %2851 = vmatprep.mubr.bf16.mxu0 %v2697
    %2852 = vmatmul.mubr.bf16.gmra.mxu0 %v2695
    %v2853 = vpop.f32.mrf.mxu0
    %v2854 = vadd.f32 0.0, %v2853
    %v2855 = vpop.f32.mrf.mxu0
    %v2856 = vpop.f32.mrf.mxu0
    %v2857 = vadd.f32 0.0, %v2856
    %v2858 = vpop.f32.mrf.mxu0
    %2859 = vdwg.mxu0
    %2860 = vmatprep.subr.bf16.mxu0 0
    %2861 = vmatpush1.bf16.msra.mxu0 0
    %2862 = vmatprep.subr.bf16.mxu0 0
    %2863 = vmatpush1.bf16.msra.mxu0 0
    %2864 = vmatprep.subr.bf16.mxu0 0
    %2865 = vmatpush1.bf16.msra.mxu0 0
    %2866 = vmatprep.subr.bf16.mxu0 0
    %2867 = vmatpush1.bf16.msra.mxu0 0
    %2868 = vmatprep.subr.bf16.mxu0 0
    %2869 = vmatpush1.bf16.msra.mxu0 0
    %2870 = vmatprep.subr.bf16.mxu0 0
    %2871 = vmatpush1.bf16.msra.mxu0 %v2817
    %2872 = vmatprep.subr.bf16.mxu0 0
    %2873 = vmatpush1.bf16.msra.mxu0 %v2793
    %2874 = vmatprep.subr.bf16.mxu0 0
    %2875 = vmatpush1.bf16.msra.mxu0 %v2792
    %2876 = vmatprep.subr.bf16.mxu0 0
    %2877 = vmatpush2.bf16.msra.mxu0 0
    %2878 = vmatprep.subr.bf16.mxu0 0
    %2879 = vmatpush2.bf16.msra.mxu0 0
    %2880 = vmatprep.subr.bf16.mxu0 0
    %2881 = vmatpush2.bf16.msra.mxu0 0
    %2882 = vmatprep.subr.bf16.mxu0 0
    %2883 = vmatpush2.bf16.msra.mxu0 0
    %2884 = vmatprep.subr.bf16.mxu0 0
    %2885 = vmatpush2.bf16.msra.mxu0 0
    %2886 = vmatprep.subr.bf16.mxu0 0
    %2887 = vmatpush2.bf16.msra.mxu0 0
    %2888 = vmatprep.subr.bf16.mxu0 0
    %2889 = vmatpush2.bf16.msra.mxu0 0
    %2890 = vmatprep.subr.bf16.mxu0 0
    %2891 = vmatpush2.bf16.msra.mxu0 0
    %2892 = vmatprep.mubr.bf16.mxu0 0
    %2893 = vmatmul.mubr.bf16.gmra.mxu0 %v2814
    %v2894 = vpop.f32.mrf.mxu0
    %v2895 = vadd.f32 %v2854, %v2894
    %v2896 = vpop.f32.mrf.mxu0
    %v2897 = vpop.f32.mrf.mxu0
    %v2898 = vadd.f32 %v2857, %v2897
    %v2899 = vpop.f32.mrf.mxu0
    %2900 = vdwg.mxu0
    %v2901 = vunpack.i.l.s16 %v2586
    %v2902 = vunpack.i.l.s16 %v2617
    %v2903 = vpack.i.b16 %v2626, %v2901
    %v2904 = vpack.i.b16 %v2628, %v2627
    %v2905 = vpack.i.b16 %v2902, %v2629
    %v2906 = vpack.i.b16 %v2632, %v2631
    %v2907 = vpack.i.b16 %v2634, %v2633
    %v2908 = vcombine.low %v2903, %v2904
    %v2909 = vcombine.low %v2905, %v2906
    %v2911 = vunpack.c.l.s4 1966171168
    %v2912 = vunpack.c.0.s8 %v2911
    %v2913 = vlaneseq
    %v2914 = vshrl.u32 %v2913, 7
    %v2915 = vsub.s32 %v2912, %v2914
    %v2916 = vrot.slane %v2908, %v2915
    %v2918 = vunpack.c.l.s4 1966171168
    %v2919 = vunpack.c.0.s8 %v2918
    %v2920 = vlaneseq
    %v2921 = vshrl.u32 %v2920, 7
    %v2922 = vsub.s32 %v2919, %v2921
    %v2923 = vrot.slane %v2909, %v2922
    %v2925 = vunpack.c.l.s4 1966171168
    %v2926 = vunpack.c.0.s8 %v2925
    %v2927 = vlaneseq
    %v2928 = vshrl.u32 %v2927, 7
    %v2929 = vsub.s32 %v2926, %v2928
    %v2930 = vrot.slane %v2907, %v2929
    %v2931 = vcombine.low %v2916, %v2923
    %v2932 = vcombine.high %v2916, %v2923
    %v2933 = vcombine.high %v2930, %v2930
    %v2935 = vunpack.c.l.s4 1966171168
    %v2936 = vunpack.c.0.s8 %v2935
    %v2937 = vlaneseq
    %v2938 = vshrl.u32 %v2937, 7
    %v2939 = vsub.s32 %v2936, %v2938
    %v2940 = vrot.slane %v2931, %v2939
    %v2942 = vunpack.c.l.s4 1966171168
    %v2943 = vunpack.c.0.s8 %v2942
    %v2944 = vlaneseq
    %v2945 = vshrl.u32 %v2944, 7
    %v2946 = vsub.s32 %v2943, %v2945
    %v2947 = vrot.slane %v2932, %v2946
    %v2949 = vunpack.c.l.s4 1966171168
    %v2950 = vunpack.c.0.s8 %v2949
    %v2951 = vlaneseq
    %v2952 = vshrl.u32 %v2951, 7
    %v2953 = vsub.s32 %v2950, %v2952
    %v2954 = vrot.slane %v2930, %v2953
    %v2956 = vunpack.c.l.s4 1966171168
    %v2957 = vunpack.c.0.s8 %v2956
    %v2958 = vlaneseq
    %v2959 = vshrl.u32 %v2958, 7
    %v2960 = vsub.s32 %v2957, %v2959
    %v2961 = vrot.slane %v2933, %v2960
    %v2962 = vcombine.low %v2940, %v2954
    %v2963 = vcombine.high %v2940, %v2954
    %v2964 = vcombine.low %v2947, %v2961
    %v3005 = vunpack.c.l.b16 %v2483
    %v3006 = vunpack.c.l.b16 %v2484
    %v3007 = vunpack.c.l.b16 %v2485
    %v3008 = vunpack.c.l.b16 %v2486
    %v3009 = vunpack.c.l.b16 %v2487
    %v3010 = vunpack.c.l.b16 %v2488
    %v3011 = vunpack.c.l.b16 %v2489
    %v3012 = vunpack.c.l.b16 %v2490
    %v3013 = vunpack.c.l.b16 %v2491
    %v3014 = vunpack.c.l.b16 %v2492
    %v3015 = vunpack.c.l.b16 %v2493
    %v3016 = vunpack.c.l.b16 %v2494
    %v3017 = vunpack.c.l.b16 %v2495
    %v3018 = vunpack.c.l.b16 %v2496
    %v3019 = vunpack.c.l.b16 %v2497
    %v3020 = vunpack.c.l.b16 %v2498
    %v3021 = vunpack.c.l.b16 %v2499
    %v3022 = vunpack.c.l.b16 %v2500
    %v3023 = vunpack.c.l.b16 %v2501
    %v3024 = vunpack.c.l.b16 %v2502
    %v3025 = vunpack.c.l.b16 %v2503
    %v3026 = vunpack.c.l.b16 %v2504
    %v3027 = vunpack.c.l.b16 %v2505
    %v3028 = vunpack.c.l.b16 %v2506
    %v3029 = vunpack.c.l.b16 %v2507
    %v3030 = vunpack.c.l.b16 %v2508
    %v3031 = vunpack.c.l.b16 %v2509
    %v3032 = vunpack.c.l.b16 %v2510
    %v3033 = vunpack.c.l.b16 %v2511
    %v3034 = vunpack.c.l.b16 %v2512
    %v3035 = vunpack.c.l.b16 %v2513
    %v3036 = vunpack.c.l.b16 %v2514
    %v3037 = vunpack.c.l.b16 %v2515
    %v3038 = vunpack.c.l.b16 %v2516
    %v3039 = vunpack.c.l.b16 %v2517
    %v3040 = vunpack.c.l.b16 %v2518
    %v3041 = vunpack.c.l.b16 %v2519
    %v3042 = vunpack.c.l.b16 %v2520
    %v3043 = vpack.c.b16 %v3006, %v3005
    %v3044 = vpack.c.b16 %v3008, %v3007
    %v3045 = vpack.c.b16 %v3010, %v3009
    %v3046 = vpack.c.b16 %v3012, %v3011
    %v3047 = vpack.c.b16 %v3014, %v3013
    %v3048 = vpack.c.b16 %v3016, %v3015
    %v3049 = vpack.c.b16 %v3018, %v3017
    %v3050 = vpack.c.b16 %v3020, %v3019
    %v3051 = vpack.c.b16 %v3022, %v3021
    %v3052 = vpack.c.b16 %v3024, %v3023
    %v3053 = vpack.c.b16 %v3026, %v3025
    %v3054 = vpack.c.b16 %v3028, %v3027
    %v3055 = vpack.c.b16 %v3030, %v3029
    %v3056 = vpack.c.b16 %v3032, %v3031
    %v3057 = vpack.c.b16 %v3034, %v3033
    %v3058 = vpack.c.b16 %v3036, %v3035
    %v3059 = vpack.c.b16 %v3038, %v3037
    %v3060 = vpack.c.b16 %v3040, %v3039
    %v3061 = vpack.c.b16 %v3042, %v3041
    %v3081 = vsel %vm391, %v2963, 0
    %v3084 = vsel %vm395, %v3061, 0
    %3086 = vmatprep.subr.bf16.mxu0 0
    %3087 = vmatpush1.bf16.msra.mxu0 %v3050
    %3088 = vmatprep.subr.bf16.mxu0 0
    %3089 = vmatpush1.bf16.msra.mxu0 %v3049
    %3090 = vmatprep.subr.bf16.mxu0 0
    %3091 = vmatpush1.bf16.msra.mxu0 %v3048
    %3092 = vmatprep.subr.bf16.mxu0 0
    %3093 = vmatpush1.bf16.msra.mxu0 %v3047
    %3094 = vmatprep.subr.bf16.mxu0 0
    %3095 = vmatpush1.bf16.msra.mxu0 %v3046
    %3096 = vmatprep.subr.bf16.mxu0 0
    %3097 = vmatpush1.bf16.msra.mxu0 %v3045
    %3098 = vmatprep.subr.bf16.mxu0 0
    %3099 = vmatpush1.bf16.msra.mxu0 %v3044
    %3100 = vmatprep.subr.bf16.mxu0 0
    %3101 = vmatpush1.bf16.msra.mxu0 %v3043
    %3102 = vmatprep.subr.bf16.mxu0 0
    %3103 = vmatpush2.bf16.msra.mxu0 %v3058
    %3104 = vmatprep.subr.bf16.mxu0 0
    %3105 = vmatpush2.bf16.msra.mxu0 %v3057
    %3106 = vmatprep.subr.bf16.mxu0 0
    %3107 = vmatpush2.bf16.msra.mxu0 %v3056
    %3108 = vmatprep.subr.bf16.mxu0 0
    %3109 = vmatpush2.bf16.msra.mxu0 %v3055
    %3110 = vmatprep.subr.bf16.mxu0 0
    %3111 = vmatpush2.bf16.msra.mxu0 %v3054
    %3112 = vmatprep.subr.bf16.mxu0 0
    %3113 = vmatpush2.bf16.msra.mxu0 %v3053
    %3114 = vmatprep.subr.bf16.mxu0 0
    %3115 = vmatpush2.bf16.msra.mxu0 %v3052
    %3116 = vmatprep.subr.bf16.mxu0 0
    %3117 = vmatpush2.bf16.msra.mxu0 %v3051
    %3118 = vmatprep.mubr.bf16.mxu0 %v2964
    %3119 = vmatmul.mubr.bf16.gmra.mxu0 %v2962
    %v3120 = vpop.f32.mrf.mxu0
    %v3121 = vadd.f32 %v2895, %v3120
    %v3122 = vpop.f32.mrf.mxu0
    %v3123 = vpop.f32.mrf.mxu0
    %v3124 = vadd.f32 %v2898, %v3123
    %v3125 = vpop.f32.mrf.mxu0
    %3126 = vdwg.mxu0
    %3127 = vmatprep.subr.bf16.mxu0 0
    %3128 = vmatpush1.bf16.msra.mxu0 0
    %3129 = vmatprep.subr.bf16.mxu0 0
    %3130 = vmatpush1.bf16.msra.mxu0 0
    %3131 = vmatprep.subr.bf16.mxu0 0
    %3132 = vmatpush1.bf16.msra.mxu0 0
    %3133 = vmatprep.subr.bf16.mxu0 0
    %3134 = vmatpush1.bf16.msra.mxu0 0
    %3135 = vmatprep.subr.bf16.mxu0 0
    %3136 = vmatpush1.bf16.msra.mxu0 0
    %3137 = vmatprep.subr.bf16.mxu0 0
    %3138 = vmatpush1.bf16.msra.mxu0 %v3084
    %3139 = vmatprep.subr.bf16.mxu0 0
    %3140 = vmatpush1.bf16.msra.mxu0 %v3060
    %3141 = vmatprep.subr.bf16.mxu0 0
    %3142 = vmatpush1.bf16.msra.mxu0 %v3059
    %3143 = vmatprep.subr.bf16.mxu0 0
    %3144 = vmatpush2.bf16.msra.mxu0 0
    %3145 = vmatprep.subr.bf16.mxu0 0
    %3146 = vmatpush2.bf16.msra.mxu0 0
    %3147 = vmatprep.subr.bf16.mxu0 0
    %3148 = vmatpush2.bf16.msra.mxu0 0
    %3149 = vmatprep.subr.bf16.mxu0 0
    %3150 = vmatpush2.bf16.msra.mxu0 0
    %3151 = vmatprep.subr.bf16.mxu0 0
    %3152 = vmatpush2.bf16.msra.mxu0 0
    %3153 = vmatprep.subr.bf16.mxu0 0
    %3154 = vmatpush2.bf16.msra.mxu0 0
    %3155 = vmatprep.subr.bf16.mxu0 0
    %3156 = vmatpush2.bf16.msra.mxu0 0
    %3157 = vmatprep.subr.bf16.mxu0 0
    %3158 = vmatpush2.bf16.msra.mxu0 0
    %3159 = vmatprep.mubr.bf16.mxu0 0
    %3160 = vmatmul.mubr.bf16.gmra.mxu0 %v3081
    %v3161 = vpop.f32.mrf.mxu0
    %v3162 = vadd.f32 %v3121, %v3161
    %v3163 = vpop.f32.mrf.mxu0
    %v3164 = vpop.f32.mrf.mxu0
    %v3165 = vadd.f32 %v3124, %v3164
    %v3166 = vpop.f32.mrf.mxu0
    %3167 = vdwg.mxu0
    %v3170 = vcombine.high %v3162, %v3162
    %v3172 = vunpack.c.l.s4 1966171168
    %v3173 = vunpack.c.0.s8 %v3172
    %v3174 = vlaneseq
    %v3175 = vshrl.u32 %v3174, 7
    %v3176 = vsub.s32 %v3173, %v3175
    %v3177 = vrot.slane %v3162, %v3176
    %v3179 = vunpack.c.l.s4 1966171168
    %v3180 = vunpack.c.0.s8 %v3179
    %v3181 = vlaneseq
    %v3182 = vshrl.u32 %v3181, 7
    %v3183 = vsub.s32 %v3180, %v3182
    %v3184 = vrot.slane %v3170, %v3183
    %v3185 = vcombine.high %v3177, %v3177
    %v3186 = vcombine.high %v3184, %v3184
    %v3188 = vunpack.c.l.s4 1966171168
    %v3189 = vunpack.c.0.s8 %v3188
    %v3190 = vlaneseq
    %v3191 = vshrl.u32 %v3190, 7
    %v3192 = vsub.s32 %v3189, %v3191
    %v3193 = vrot.slane %v3177, %v3192
    %v3195 = vunpack.c.l.s4 1966171168
    %v3196 = vunpack.c.0.s8 %v3195
    %v3197 = vlaneseq
    %v3198 = vshrl.u32 %v3197, 7
    %v3199 = vsub.s32 %v3196, %v3198
    %v3200 = vrot.slane %v3184, %v3199
    %v3202 = vunpack.c.l.s4 1966171168
    %v3203 = vunpack.c.0.s8 %v3202
    %v3204 = vlaneseq
    %v3205 = vshrl.u32 %v3204, 7
    %v3206 = vsub.s32 %v3203, %v3205
    %v3207 = vrot.slane %v3185, %v3206
    %v3209 = vunpack.c.l.s4 1966171168
    %v3210 = vunpack.c.0.s8 %v3209
    %v3211 = vlaneseq
    %v3212 = vshrl.u32 %v3211, 7
    %v3213 = vsub.s32 %v3210, %v3212
    %v3214 = vrot.slane %v3186, %v3213
    %v3215 = vcombine.high %v3193, %v3193
    %v3216 = vcombine.high %v3200, %v3200
    %v3217 = vcombine.high %v3207, %v3207
    %v3218 = vcombine.high %v3214, %v3214
    %v3220 = vunpack.c.l.s4 1966171168
    %v3221 = vunpack.c.0.s8 %v3220
    %v3222 = vlaneseq
    %v3223 = vshrl.u32 %v3222, 7
    %v3224 = vsub.s32 %v3221, %v3223
    %v3225 = vrot.slane %v3165, %v3224
    %v3226 = vcombine.high %v3225, %v3225
    %v3228 = vunpack.c.l.s4 1966171168
    %v3229 = vunpack.c.0.s8 %v3228
    %v3230 = vlaneseq
    %v3231 = vshrl.u32 %v3230, 7
    %v3232 = vsub.s32 %v3229, %v3231
    %v3233 = vrot.slane %v3225, %v3232
    %v3235 = vunpack.c.l.s4 1966171168
    %v3236 = vunpack.c.0.s8 %v3235
    %v3237 = vlaneseq
    %v3238 = vshrl.u32 %v3237, 7
    %v3239 = vsub.s32 %v3236, %v3238
    %v3240 = vrot.slane %v3226, %v3239
    %v3251 = vld [vmem:[%s0] sm:$0xee]
    %v3252 = vld [vmem:[%s0 + $0x8] sm:$0xe]
    %v3253 = vld [vmem:[%s0 + $0xc] sm:$0xee]
    %v3254 = vld [vmem:[%s0 + $0x14] sm:$0xe]
    %s3255 = scalar_lea.vmem %s5, 304
    %v3256 = vld [vmem:[%s3255] sm:$0xf]
    %v3257 = vld [vmem:[%s3255 + $0x4] sm:$0xf]
    %v3258 = vld [vmem:[%s3255 + $0x8] sm:$0xf]
    %v3259 = vld [vmem:[%s3255 + $0xc] sm:$0xf]
    %v3260 = vld [vmem:[%s3255 + $0x10] sm:$0xf]
    %v3261 = vld [vmem:[%s3255 + $0x14] sm:$0xf]
    %v3262 = vld [vmem:[%s3255 + $0x18] sm:$0xf]
    %v3263 = vld [vmem:[%s3255 + $0x1c] sm:$0xf]
    %v3264 = vld [vmem:[%s3255 + $0x20] sm:$0xf]
    %v3265 = vld [vmem:[%s3255 + $0x24] sm:$0xf]
    %v3266 = vld [vmem:[%s3255 + $0x28] sm:$0xf]
    %v3267 = vld [vmem:[%s3255 + $0x2c] sm:$0xf]
    %v3268 = vld [vmem:[%s3255 + $0x30] sm:$0xf]
    %v3269 = vld [vmem:[%s3255 + $0x34] sm:$0xf]
    %v3270 = vld [vmem:[%s3255 + $0x38] sm:$0xf]
    %v3271 = vld [vmem:[%s3255 + $0x3c] sm:$0xf]
    %v3272 = vld [vmem:[%s3255 + $0x40] sm:$0xf]
    %v3273 = vld [vmem:[%s3255 + $0x44] sm:$0xf]
    %v3274 = vld [vmem:[%s3255 + $0x48] sm:$0xf]
    %v3275 = vld [vmem:[%s3255 + $0x4c] sm:$0xf]
    %v3276 = vld [vmem:[%s3255 + $0x50] sm:$0xf]
    %v3277 = vld [vmem:[%s3255 + $0x54] sm:$0xf]
    %v3278 = vld [vmem:[%s3255 + $0x58] sm:$0xf]
    %v3279 = vld [vmem:[%s3255 + $0x5c] sm:$0xf]
    %v3280 = vld [vmem:[%s3255 + $0x60] sm:$0xf]
    %v3281 = vld [vmem:[%s3255 + $0x64] sm:$0xf]
    %v3282 = vld [vmem:[%s3255 + $0x68] sm:$0xf]
    %v3283 = vld [vmem:[%s3255 + $0x6c] sm:$0xf]
    %v3284 = vld [vmem:[%s3255 + $0x70] sm:$0xf]
    %v3285 = vld [vmem:[%s3255 + $0x74] sm:$0xf]
    %v3286 = vld [vmem:[%s3255 + $0x78] sm:$0xf]
    %v3287 = vld [vmem:[%s3255 + $0x7c] sm:$0xf]
    %v3288 = vld [vmem:[%s3255 + $0x80] sm:$0xf]
    %v3289 = vld [vmem:[%s3255 + $0x84] sm:$0xf]
    %v3290 = vld [vmem:[%s3255 + $0x88] sm:$0xf]
    %v3291 = vld [vmem:[%s3255 + $0x8c] sm:$0xf]
    %v3292 = vld [vmem:[%s3255 + $0x90] sm:$0xf]
    %v3293 = vld [vmem:[%s3255 + $0x94] sm:$0x3]
    %v3299 = vunpack.c.l.s4 1966171168
    %v3300 = vunpack.c.0.s8 %v3299
    %v3301 = vlaneseq
    %v3302 = vshrl.u32 %v3301, 7
    %v3303 = vsub.s32 %v3300, %v3302
    %v3304 = vrot.slane %v3251, %v3303
    %v3306 = vunpack.c.l.s4 1966171168
    %v3307 = vunpack.c.0.s8 %v3306
    %v3308 = vlaneseq
    %v3309 = vshrl.u32 %v3308, 7
    %v3310 = vsub.s32 %v3307, %v3309
    %v3311 = vrot.slane %v3252, %v3310
    %v3312 = vcombine.low %v3304, %v3311
    %v3313 = vcombine.high %v3304, %v3311
    %v3315 = vunpack.c.l.s4 1966171168
    %v3316 = vunpack.c.0.s8 %v3315
    %v3317 = vlaneseq
    %v3318 = vshrl.u32 %v3317, 7
    %v3319 = vsub.s32 %v3316, %v3318
    %v3320 = vrot.slane %v3312, %v3319
    %v3322 = vunpack.c.l.s4 1966171168
    %v3323 = vunpack.c.0.s8 %v3322
    %v3324 = vlaneseq
    %v3325 = vshrl.u32 %v3324, 7
    %v3326 = vsub.s32 %v3323, %v3325
    %v3327 = vrot.slane %v3313, %v3326
    %v3328 = vcombine.high %v3320, %v3320
    %v3329 = vcombine.high %v3327, %v3327
    %v3331 = vunpack.c.l.s4 1966171168
    %v3332 = vunpack.c.0.s8 %v3331
    %v3333 = vlaneseq
    %v3334 = vshrl.u32 %v3333, 7
    %v3335 = vsub.s32 %v3332, %v3334
    %v3336 = vrot.slane %v3253, %v3335
    %v3338 = vunpack.c.l.s4 1966171168
    %v3339 = vunpack.c.0.s8 %v3338
    %v3340 = vlaneseq
    %v3341 = vshrl.u32 %v3340, 7
    %v3342 = vsub.s32 %v3339, %v3341
    %v3343 = vrot.slane %v3254, %v3342
    %v3344 = vcombine.low %v3336, %v3343
    %v3345 = vcombine.high %v3336, %v3343
    %v3347 = vunpack.c.l.s4 1966171168
    %v3348 = vunpack.c.0.s8 %v3347
    %v3349 = vlaneseq
    %v3350 = vshrl.u32 %v3349, 7
    %v3351 = vsub.s32 %v3348, %v3350
    %v3352 = vrot.slane %v3344, %v3351
    %v3354 = vunpack.c.l.s4 1966171168
    %v3355 = vunpack.c.0.s8 %v3354
    %v3356 = vlaneseq
    %v3357 = vshrl.u32 %v3356, 7
    %v3358 = vsub.s32 %v3355, %v3357
    %v3359 = vrot.slane %v3345, %v3358
    %v3360 = vcombine.high %v3352, %v3352
    %v3361 = vcombine.high %v3359, %v3359
    %v3362 = vunpack.i.l.s16 %v3327
    %v3363 = vunpack.i.h.s16 %v3327
    %v3364 = vunpack.i.l.s16 %v3328
    %v3365 = vunpack.i.h.s16 %v3328
    %v3366 = vunpack.i.l.s16 %v3329
    %v3367 = vunpack.i.l.s16 %v3359
    %v3368 = vunpack.i.h.s16 %v3359
    %v3369 = vunpack.i.l.s16 %v3360
    %v3370 = vunpack.i.h.s16 %v3360
    %v3371 = vunpack.i.l.s16 %v3361
    %v3372 = vpack.i.b16 %v3363, %v3362
    %v3373 = vpack.i.b16 %v3365, %v3364
    %v3374 = vpack.i.b16 %v3367, %v3366
    %v3375 = vpack.i.b16 %v3369, %v3368
    %v3376 = vpack.i.b16 %v3371, %v3370
    %v3377 = vcombine.low %v3372, %v3373
    %v3378 = vcombine.low %v3374, %v3375
    %v3380 = vunpack.c.l.s4 1966171168
    %v3381 = vunpack.c.0.s8 %v3380
    %v3382 = vlaneseq
    %v3383 = vshrl.u32 %v3382, 7
    %v3384 = vsub.s32 %v3381, %v3383
    %v3385 = vrot.slane %v3377, %v3384
    %v3387 = vunpack.c.l.s4 1966171168
    %v3388 = vunpack.c.0.s8 %v3387
    %v3389 = vlaneseq
    %v3390 = vshrl.u32 %v3389, 7
    %v3391 = vsub.s32 %v3388, %v3390
    %v3392 = vrot.slane %v3378, %v3391
    %v3394 = vunpack.c.l.s4 1966171168
    %v3395 = vunpack.c.0.s8 %v3394
    %v3396 = vlaneseq
    %v3397 = vshrl.u32 %v3396, 7
    %v3398 = vsub.s32 %v3395, %v3397
    %v3399 = vrot.slane %v3376, %v3398
    %v3400 = vcombine.low %v3385, %v3392
    %v3401 = vcombine.high %v3385, %v3392
    %v3402 = vcombine.high %v3399, %v3399
    %v3404 = vunpack.c.l.s4 1966171168
    %v3405 = vunpack.c.0.s8 %v3404
    %v3406 = vlaneseq
    %v3407 = vshrl.u32 %v3406, 7
    %v3408 = vsub.s32 %v3405, %v3407
    %v3409 = vrot.slane %v3400, %v3408
    %v3411 = vunpack.c.l.s4 1966171168
    %v3412 = vunpack.c.0.s8 %v3411
    %v3413 = vlaneseq
    %v3414 = vshrl.u32 %v3413, 7
    %v3415 = vsub.s32 %v3412, %v3414
    %v3416 = vrot.slane %v3401, %v3415
    %v3418 = vunpack.c.l.s4 1966171168
    %v3419 = vunpack.c.0.s8 %v3418
    %v3420 = vlaneseq
    %v3421 = vshrl.u32 %v3420, 7
    %v3422 = vsub.s32 %v3419, %v3421
    %v3423 = vrot.slane %v3399, %v3422
    %v3425 = vunpack.c.l.s4 1966171168
    %v3426 = vunpack.c.0.s8 %v3425
    %v3427 = vlaneseq
    %v3428 = vshrl.u32 %v3427, 7
    %v3429 = vsub.s32 %v3426, %v3428
    %v3430 = vrot.slane %v3402, %v3429
    %v3431 = vcombine.low %v3409, %v3423
    %v3432 = vcombine.high %v3409, %v3423
    %v3433 = vcombine.low %v3416, %v3430
    %v3474 = vunpack.c.l.b16 %v3256
    %v3475 = vunpack.c.l.b16 %v3257
    %v3476 = vunpack.c.l.b16 %v3258
    %v3477 = vunpack.c.l.b16 %v3259
    %v3478 = vunpack.c.l.b16 %v3260
    %v3479 = vunpack.c.l.b16 %v3261
    %v3480 = vunpack.c.l.b16 %v3262
    %v3481 = vunpack.c.l.b16 %v3263
    %v3482 = vunpack.c.l.b16 %v3264
    %v3483 = vunpack.c.l.b16 %v3265
    %v3484 = vunpack.c.l.b16 %v3266
    %v3485 = vunpack.c.l.b16 %v3267
    %v3486 = vunpack.c.l.b16 %v3268
    %v3487 = vunpack.c.l.b16 %v3269
    %v3488 = vunpack.c.l.b16 %v3270
    %v3489 = vunpack.c.l.b16 %v3271
    %v3490 = vunpack.c.l.b16 %v3272
    %v3491 = vunpack.c.l.b16 %v3273
    %v3492 = vunpack.c.l.b16 %v3274
    %v3493 = vunpack.c.l.b16 %v3275
    %v3494 = vunpack.c.l.b16 %v3276
    %v3495 = vunpack.c.l.b16 %v3277
    %v3496 = vunpack.c.l.b16 %v3278
    %v3497 = vunpack.c.l.b16 %v3279
    %v3498 = vunpack.c.l.b16 %v3280
    %v3499 = vunpack.c.l.b16 %v3281
    %v3500 = vunpack.c.l.b16 %v3282
    %v3501 = vunpack.c.l.b16 %v3283
    %v3502 = vunpack.c.l.b16 %v3284
    %v3503 = vunpack.c.l.b16 %v3285
    %v3504 = vunpack.c.l.b16 %v3286
    %v3505 = vunpack.c.l.b16 %v3287
    %v3506 = vunpack.c.l.b16 %v3288
    %v3507 = vunpack.c.l.b16 %v3289
    %v3508 = vunpack.c.l.b16 %v3290
    %v3509 = vunpack.c.l.b16 %v3291
    %v3510 = vunpack.c.l.b16 %v3292
    %v3511 = vunpack.c.l.b16 %v3293
    %v3512 = vpack.c.b16 %v3475, %v3474
    %v3513 = vpack.c.b16 %v3477, %v3476
    %v3514 = vpack.c.b16 %v3479, %v3478
    %v3515 = vpack.c.b16 %v3481, %v3480
    %v3516 = vpack.c.b16 %v3483, %v3482
    %v3517 = vpack.c.b16 %v3485, %v3484
    %v3518 = vpack.c.b16 %v3487, %v3486
    %v3519 = vpack.c.b16 %v3489, %v3488
    %v3520 = vpack.c.b16 %v3491, %v3490
    %v3521 = vpack.c.b16 %v3493, %v3492
    %v3522 = vpack.c.b16 %v3495, %v3494
    %v3523 = vpack.c.b16 %v3497, %v3496
    %v3524 = vpack.c.b16 %v3499, %v3498
    %v3525 = vpack.c.b16 %v3501, %v3500
    %v3526 = vpack.c.b16 %v3503, %v3502
    %v3527 = vpack.c.b16 %v3505, %v3504
    %v3528 = vpack.c.b16 %v3507, %v3506
    %v3529 = vpack.c.b16 %v3509, %v3508
    %v3530 = vpack.c.b16 %v3511, %v3510
    %v3550 = vsel %vm391, %v3432, 0
    %v3553 = vsel %vm395, %v3530, 0
    %3555 = vmatprep.subr.bf16.mxu0 0
    %3556 = vmatpush1.bf16.msra.mxu0 %v3519
    %3557 = vmatprep.subr.bf16.mxu0 0
    %3558 = vmatpush1.bf16.msra.mxu0 %v3518
    %3559 = vmatprep.subr.bf16.mxu0 0
    %3560 = vmatpush1.bf16.msra.mxu0 %v3517
    %3561 = vmatprep.subr.bf16.mxu0 0
    %3562 = vmatpush1.bf16.msra.mxu0 %v3516
    %3563 = vmatprep.subr.bf16.mxu0 0
    %3564 = vmatpush1.bf16.msra.mxu0 %v3515
    %3565 = vmatprep.subr.bf16.mxu0 0
    %3566 = vmatpush1.bf16.msra.mxu0 %v3514
    %3567 = vmatprep.subr.bf16.mxu0 0
    %3568 = vmatpush1.bf16.msra.mxu0 %v3513
    %3569 = vmatprep.subr.bf16.mxu0 0
    %3570 = vmatpush1.bf16.msra.mxu0 %v3512
    %3571 = vmatprep.subr.bf16.mxu0 0
    %3572 = vmatpush2.bf16.msra.mxu0 %v3527
    %3573 = vmatprep.subr.bf16.mxu0 0
    %3574 = vmatpush2.bf16.msra.mxu0 %v3526
    %3575 = vmatprep.subr.bf16.mxu0 0
    %3576 = vmatpush2.bf16.msra.mxu0 %v3525
    %3577 = vmatprep.subr.bf16.mxu0 0
    %3578 = vmatpush2.bf16.msra.mxu0 %v3524
    %3579 = vmatprep.subr.bf16.mxu0 0
    %3580 = vmatpush2.bf16.msra.mxu0 %v3523
    %3581 = vmatprep.subr.bf16.mxu0 0
    %3582 = vmatpush2.bf16.msra.mxu0 %v3522
    %3583 = vmatprep.subr.bf16.mxu0 0
    %3584 = vmatpush2.bf16.msra.mxu0 %v3521
    %3585 = vmatprep.subr.bf16.mxu0 0
    %3586 = vmatpush2.bf16.msra.mxu0 %v3520
    %3587 = vmatprep.mubr.bf16.mxu0 %v3433
    %3588 = vmatmul.mubr.bf16.gmra.mxu0 %v3431
    %v3589 = vpop.f32.mrf.mxu0
    %v3590 = vadd.f32 0.0, %v3589
    %v3591 = vpop.f32.mrf.mxu0
    %v3592 = vpop.f32.mrf.mxu0
    %v3593 = vadd.f32 0.0, %v3592
    %v3594 = vpop.f32.mrf.mxu0
    %3595 = vdwg.mxu0
    %3596 = vmatprep.subr.bf16.mxu0 0
    %3597 = vmatpush1.bf16.msra.mxu0 0
    %3598 = vmatprep.subr.bf16.mxu0 0
    %3599 = vmatpush1.bf16.msra.mxu0 0
    %3600 = vmatprep.subr.bf16.mxu0 0
    %3601 = vmatpush1.bf16.msra.mxu0 0
    %3602 = vmatprep.subr.bf16.mxu0 0
    %3603 = vmatpush1.bf16.msra.mxu0 0
    %3604 = vmatprep.subr.bf16.mxu0 0
    %3605 = vmatpush1.bf16.msra.mxu0 0
    %3606 = vmatprep.subr.bf16.mxu0 0
    %3607 = vmatpush1.bf16.msra.mxu0 %v3553
    %3608 = vmatprep.subr.bf16.mxu0 0
    %3609 = vmatpush1.bf16.msra.mxu0 %v3529
    %3610 = vmatprep.subr.bf16.mxu0 0
    %3611 = vmatpush1.bf16.msra.mxu0 %v3528
    %3612 = vmatprep.subr.bf16.mxu0 0
    %3613 = vmatpush2.bf16.msra.mxu0 0
    %3614 = vmatprep.subr.bf16.mxu0 0
    %3615 = vmatpush2.bf16.msra.mxu0 0
    %3616 = vmatprep.subr.bf16.mxu0 0
    %3617 = vmatpush2.bf16.msra.mxu0 0
    %3618 = vmatprep.subr.bf16.mxu0 0
    %3619 = vmatpush2.bf16.msra.mxu0 0
    %3620 = vmatprep.subr.bf16.mxu0 0
    %3621 = vmatpush2.bf16.msra.mxu0 0
    %3622 = vmatprep.subr.bf16.mxu0 0
    %3623 = vmatpush2.bf16.msra.mxu0 0
    %3624 = vmatprep.subr.bf16.mxu0 0
    %3625 = vmatpush2.bf16.msra.mxu0 0
    %3626 = vmatprep.subr.bf16.mxu0 0
    %3627 = vmatpush2.bf16.msra.mxu0 0
    %3628 = vmatprep.mubr.bf16.mxu0 0
    %3629 = vmatmul.mubr.bf16.gmra.mxu0 %v3550
    %v3630 = vpop.f32.mrf.mxu0
    %v3631 = vadd.f32 %v3590, %v3630
    %v3632 = vpop.f32.mrf.mxu0
    %v3633 = vpop.f32.mrf.mxu0
    %v3634 = vadd.f32 %v3593, %v3633
    %v3635 = vpop.f32.mrf.mxu0
    %3636 = vdwg.mxu0
    %v3639 = vcombine.high %v3631, %v3631
    %v3641 = vunpack.c.l.s4 1966171168
    %v3642 = vunpack.c.0.s8 %v3641
    %v3643 = vlaneseq
    %v3644 = vshrl.u32 %v3643, 7
    %v3645 = vsub.s32 %v3642, %v3644
    %v3646 = vrot.slane %v3631, %v3645
    %v3648 = vunpack.c.l.s4 1966171168
    %v3649 = vunpack.c.0.s8 %v3648
    %v3650 = vlaneseq
    %v3651 = vshrl.u32 %v3650, 7
    %v3652 = vsub.s32 %v3649, %v3651
    %v3653 = vrot.slane %v3639, %v3652
    %v3654 = vcombine.high %v3646, %v3646
    %v3655 = vcombine.high %v3653, %v3653
    %v3657 = vunpack.c.l.s4 1966171168
    %v3658 = vunpack.c.0.s8 %v3657
    %v3659 = vlaneseq
    %v3660 = vshrl.u32 %v3659, 7
    %v3661 = vsub.s32 %v3658, %v3660
    %v3662 = vrot.slane %v3646, %v3661
    %v3664 = vunpack.c.l.s4 1966171168
    %v3665 = vunpack.c.0.s8 %v3664
    %v3666 = vlaneseq
    %v3667 = vshrl.u32 %v3666, 7
    %v3668 = vsub.s32 %v3665, %v3667
    %v3669 = vrot.slane %v3653, %v3668
    %v3671 = vunpack.c.l.s4 1966171168
    %v3672 = vunpack.c.0.s8 %v3671
    %v3673 = vlaneseq
    %v3674 = vshrl.u32 %v3673, 7
    %v3675 = vsub.s32 %v3672, %v3674
    %v3676 = vrot.slane %v3654, %v3675
    %v3678 = vunpack.c.l.s4 1966171168
    %v3679 = vunpack.c.0.s8 %v3678
    %v3680 = vlaneseq
    %v3681 = vshrl.u32 %v3680, 7
    %v3682 = vsub.s32 %v3679, %v3681
    %v3683 = vrot.slane %v3655, %v3682
    %v3684 = vcombine.high %v3662, %v3662
    %v3685 = vcombine.high %v3669, %v3669
    %v3686 = vcombine.high %v3676, %v3676
    %v3687 = vcombine.high %v3683, %v3683
    %v3689 = vunpack.c.l.s4 1966171168
    %v3690 = vunpack.c.0.s8 %v3689
    %v3691 = vlaneseq
    %v3692 = vshrl.u32 %v3691, 7
    %v3693 = vsub.s32 %v3690, %v3692
    %v3694 = vrot.slane %v3634, %v3693
    %v3695 = vcombine.high %v3694, %v3694
    %v3697 = vunpack.c.l.s4 1966171168
    %v3698 = vunpack.c.0.s8 %v3697
    %v3699 = vlaneseq
    %v3700 = vshrl.u32 %v3699, 7
    %v3701 = vsub.s32 %v3698, %v3700
    %v3702 = vrot.slane %v3694, %v3701
    %v3704 = vunpack.c.l.s4 1966171168
    %v3705 = vunpack.c.0.s8 %v3704
    %v3706 = vlaneseq
    %v3707 = vshrl.u32 %v3706, 7
    %v3708 = vsub.s32 %v3705, %v3707
    %v3709 = vrot.slane %v3695, %v3708
    %v3720 = vadd.f32 %v3193, %v3662
    %v3721 = vadd.f32 %v3207, %v3676
    %v3722 = vadd.f32 %v3215, %v3684
    %v3723 = vadd.f32 %v3217, %v3686
    %v3724 = vadd.f32 %v3200, %v3669
    %v3725 = vadd.f32 %v3214, %v3683
    %v3726 = vadd.f32 %v3216, %v3685
    %v3727 = vadd.f32 %v3218, %v3687
    %v3728 = vadd.f32 %v3233, %v3702
    %v3729 = vadd.f32 %v3240, %v3709
    %v3730 = vld [vmem:[%s0] sm:$0xee]
    %v3731 = vld [vmem:[%s0 + $0x8] sm:$0xe]
    %v3732 = vld [vmem:[%s0 + $0xc] sm:$0xee]
    %v3733 = vld [vmem:[%s0 + $0x14] sm:$0xe]
    %s3734 = scalar_lea.vmem %s5, 456
    %v3735 = vld [vmem:[%s3734] sm:$0xf]
    %v3736 = vld [vmem:[%s3734 + $0x4] sm:$0xf]
    %v3737 = vld [vmem:[%s3734 + $0x8] sm:$0xf]
    %v3738 = vld [vmem:[%s3734 + $0xc] sm:$0xf]
    %v3739 = vld [vmem:[%s3734 + $0x10] sm:$0xf]
    %v3740 = vld [vmem:[%s3734 + $0x14] sm:$0xf]
    %v3741 = vld [vmem:[%s3734 + $0x18] sm:$0xf]
    %v3742 = vld [vmem:[%s3734 + $0x1c] sm:$0xf]
    %v3743 = vld [vmem:[%s3734 + $0x20] sm:$0xf]
    %v3744 = vld [vmem:[%s3734 + $0x24] sm:$0xf]
    %v3745 = vld [vmem:[%s3734 + $0x28] sm:$0xf]
    %v3746 = vld [vmem:[%s3734 + $0x2c] sm:$0xf]
    %v3747 = vld [vmem:[%s3734 + $0x30] sm:$0xf]
    %v3748 = vld [vmem:[%s3734 + $0x34] sm:$0xf]
    %v3749 = vld [vmem:[%s3734 + $0x38] sm:$0xf]
    %v3750 = vld [vmem:[%s3734 + $0x3c] sm:$0xf]
    %v3751 = vld [vmem:[%s3734 + $0x40] sm:$0xf]
    %v3752 = vld [vmem:[%s3734 + $0x44] sm:$0xf]
    %v3753 = vld [vmem:[%s3734 + $0x48] sm:$0xf]
    %v3754 = vld [vmem:[%s3734 + $0x4c] sm:$0xf]
    %v3755 = vld [vmem:[%s3734 + $0x50] sm:$0xf]
    %v3756 = vld [vmem:[%s3734 + $0x54] sm:$0xf]
    %v3757 = vld [vmem:[%s3734 + $0x58] sm:$0xf]
    %v3758 = vld [vmem:[%s3734 + $0x5c] sm:$0xf]
    %v3759 = vld [vmem:[%s3734 + $0x60] sm:$0xf]
    %v3760 = vld [vmem:[%s3734 + $0x64] sm:$0xf]
    %v3761 = vld [vmem:[%s3734 + $0x68] sm:$0xf]
    %v3762 = vld [vmem:[%s3734 + $0x6c] sm:$0xf]
    %v3763 = vld [vmem:[%s3734 + $0x70] sm:$0xf]
    %v3764 = vld [vmem:[%s3734 + $0x74] sm:$0xf]
    %v3765 = vld [vmem:[%s3734 + $0x78] sm:$0xf]
    %v3766 = vld [vmem:[%s3734 + $0x7c] sm:$0xf]
    %v3767 = vld [vmem:[%s3734 + $0x80] sm:$0xf]
    %v3768 = vld [vmem:[%s3734 + $0x84] sm:$0xf]
    %v3769 = vld [vmem:[%s3734 + $0x88] sm:$0xf]
    %v3770 = vld [vmem:[%s3734 + $0x8c] sm:$0xf]
    %v3771 = vld [vmem:[%s3734 + $0x90] sm:$0xf]
    %v3772 = vld [vmem:[%s3734 + $0x94] sm:$0x3]
    %v3778 = vunpack.c.l.s4 1966171168
    %v3779 = vunpack.c.0.s8 %v3778
    %v3780 = vlaneseq
    %v3781 = vshrl.u32 %v3780, 7
    %v3782 = vsub.s32 %v3779, %v3781
    %v3783 = vrot.slane %v3730, %v3782
    %v3785 = vunpack.c.l.s4 1966171168
    %v3786 = vunpack.c.0.s8 %v3785
    %v3787 = vlaneseq
    %v3788 = vshrl.u32 %v3787, 7
    %v3789 = vsub.s32 %v3786, %v3788
    %v3790 = vrot.slane %v3731, %v3789
    %v3791 = vcombine.low %v3783, %v3790
    %v3792 = vcombine.high %v3783, %v3790
    %v3794 = vunpack.c.l.s4 1966171168
    %v3795 = vunpack.c.0.s8 %v3794
    %v3796 = vlaneseq
    %v3797 = vshrl.u32 %v3796, 7
    %v3798 = vsub.s32 %v3795, %v3797
    %v3799 = vrot.slane %v3791, %v3798
    %v3801 = vunpack.c.l.s4 1966171168
    %v3802 = vunpack.c.0.s8 %v3801
    %v3803 = vlaneseq
    %v3804 = vshrl.u32 %v3803, 7
    %v3805 = vsub.s32 %v3802, %v3804
    %v3806 = vrot.slane %v3792, %v3805
    %v3807 = vcombine.high %v3799, %v3799
    %v3808 = vcombine.high %v3806, %v3806
    %v3810 = vunpack.c.l.s4 1966171168
    %v3811 = vunpack.c.0.s8 %v3810
    %v3812 = vlaneseq
    %v3813 = vshrl.u32 %v3812, 7
    %v3814 = vsub.s32 %v3811, %v3813
    %v3815 = vrot.slane %v3732, %v3814
    %v3817 = vunpack.c.l.s4 1966171168
    %v3818 = vunpack.c.0.s8 %v3817
    %v3819 = vlaneseq
    %v3820 = vshrl.u32 %v3819, 7
    %v3821 = vsub.s32 %v3818, %v3820
    %v3822 = vrot.slane %v3733, %v3821
    %v3823 = vcombine.low %v3815, %v3822
    %v3824 = vcombine.high %v3815, %v3822
    %v3826 = vunpack.c.l.s4 1966171168
    %v3827 = vunpack.c.0.s8 %v3826
    %v3828 = vlaneseq
    %v3829 = vshrl.u32 %v3828, 7
    %v3830 = vsub.s32 %v3827, %v3829
    %v3831 = vrot.slane %v3823, %v3830
    %v3833 = vunpack.c.l.s4 1966171168
    %v3834 = vunpack.c.0.s8 %v3833
    %v3835 = vlaneseq
    %v3836 = vshrl.u32 %v3835, 7
    %v3837 = vsub.s32 %v3834, %v3836
    %v3838 = vrot.slane %v3824, %v3837
    %v3839 = vcombine.high %v3831, %v3831
    %v3840 = vcombine.high %v3838, %v3838
    %v3841 = vunpack.i.h.s16 %v3806
    %v3842 = vunpack.i.l.s16 %v3807
    %v3843 = vunpack.i.h.s16 %v3807
    %v3844 = vunpack.i.l.s16 %v3808
    %v3845 = vunpack.i.h.s16 %v3808
    %v3846 = vunpack.i.h.s16 %v3838
    %v3847 = vunpack.i.l.s16 %v3839
    %v3848 = vunpack.i.h.s16 %v3839
    %v3849 = vunpack.i.l.s16 %v3840
    %v3850 = vunpack.i.h.s16 %v3840
    %v3851 = vpack.i.b16 %v3842, %v3841
    %v3852 = vpack.i.b16 %v3844, %v3843
    %v3853 = vpack.i.b16 %v3846, %v3845
    %v3854 = vpack.i.b16 %v3848, %v3847
    %v3855 = vpack.i.b16 %v3850, %v3849
    %v3856 = vcombine.low %v3851, %v3852
    %v3857 = vcombine.low %v3853, %v3854
    %v3859 = vunpack.c.l.s4 1966171168
    %v3860 = vunpack.c.0.s8 %v3859
    %v3861 = vlaneseq
    %v3862 = vshrl.u32 %v3861, 7
    %v3863 = vsub.s32 %v3860, %v3862
    %v3864 = vrot.slane %v3856, %v3863
    %v3866 = vunpack.c.l.s4 1966171168
    %v3867 = vunpack.c.0.s8 %v3866
    %v3868 = vlaneseq
    %v3869 = vshrl.u32 %v3868, 7
    %v3870 = vsub.s32 %v3867, %v3869
    %v3871 = vrot.slane %v3857, %v3870
    %v3873 = vunpack.c.l.s4 1966171168
    %v3874 = vunpack.c.0.s8 %v3873
    %v3875 = vlaneseq
    %v3876 = vshrl.u32 %v3875, 7
    %v3877 = vsub.s32 %v3874, %v3876
    %v3878 = vrot.slane %v3855, %v3877
    %v3879 = vcombine.low %v3864, %v3871
    %v3880 = vcombine.high %v3864, %v3871
    %v3881 = vcombine.high %v3878, %v3878
    %v3883 = vunpack.c.l.s4 1966171168
    %v3884 = vunpack.c.0.s8 %v3883
    %v3885 = vlaneseq
    %v3886 = vshrl.u32 %v3885, 7
    %v3887 = vsub.s32 %v3884, %v3886
    %v3888 = vrot.slane %v3879, %v3887
    %v3890 = vunpack.c.l.s4 1966171168
    %v3891 = vunpack.c.0.s8 %v3890
    %v3892 = vlaneseq
    %v3893 = vshrl.u32 %v3892, 7
    %v3894 = vsub.s32 %v3891, %v3893
    %v3895 = vrot.slane %v3880, %v3894
    %v3897 = vunpack.c.l.s4 1966171168
    %v3898 = vunpack.c.0.s8 %v3897
    %v3899 = vlaneseq
    %v3900 = vshrl.u32 %v3899, 7
    %v3901 = vsub.s32 %v3898, %v3900
    %v3902 = vrot.slane %v3878, %v3901
    %v3904 = vunpack.c.l.s4 1966171168
    %v3905 = vunpack.c.0.s8 %v3904
    %v3906 = vlaneseq
    %v3907 = vshrl.u32 %v3906, 7
    %v3908 = vsub.s32 %v3905, %v3907
    %v3909 = vrot.slane %v3881, %v3908
    %v3910 = vcombine.low %v3888, %v3902
    %v3911 = vcombine.high %v3888, %v3902
    %v3912 = vcombine.low %v3895, %v3909
    %v3953 = vunpack.c.l.b16 %v3735
    %v3954 = vunpack.c.l.b16 %v3736
    %v3955 = vunpack.c.l.b16 %v3737
    %v3956 = vunpack.c.l.b16 %v3738
    %v3957 = vunpack.c.l.b16 %v3739
    %v3958 = vunpack.c.l.b16 %v3740
    %v3959 = vunpack.c.l.b16 %v3741
    %v3960 = vunpack.c.l.b16 %v3742
    %v3961 = vunpack.c.l.b16 %v3743
    %v3962 = vunpack.c.l.b16 %v3744
    %v3963 = vunpack.c.l.b16 %v3745
    %v3964 = vunpack.c.l.b16 %v3746
    %v3965 = vunpack.c.l.b16 %v3747
    %v3966 = vunpack.c.l.b16 %v3748
    %v3967 = vunpack.c.l.b16 %v3749
    %v3968 = vunpack.c.l.b16 %v3750
    %v3969 = vunpack.c.l.b16 %v3751
    %v3970 = vunpack.c.l.b16 %v3752
    %v3971 = vunpack.c.l.b16 %v3753
    %v3972 = vunpack.c.l.b16 %v3754
    %v3973 = vunpack.c.l.b16 %v3755
    %v3974 = vunpack.c.l.b16 %v3756
    %v3975 = vunpack.c.l.b16 %v3757
    %v3976 = vunpack.c.l.b16 %v3758
    %v3977 = vunpack.c.l.b16 %v3759
    %v3978 = vunpack.c.l.b16 %v3760
    %v3979 = vunpack.c.l.b16 %v3761
    %v3980 = vunpack.c.l.b16 %v3762
    %v3981 = vunpack.c.l.b16 %v3763
    %v3982 = vunpack.c.l.b16 %v3764
    %v3983 = vunpack.c.l.b16 %v3765
    %v3984 = vunpack.c.l.b16 %v3766
    %v3985 = vunpack.c.l.b16 %v3767
    %v3986 = vunpack.c.l.b16 %v3768
    %v3987 = vunpack.c.l.b16 %v3769
    %v3988 = vunpack.c.l.b16 %v3770
    %v3989 = vunpack.c.l.b16 %v3771
    %v3990 = vunpack.c.l.b16 %v3772
    %v3991 = vpack.c.b16 %v3954, %v3953
    %v3992 = vpack.c.b16 %v3956, %v3955
    %v3993 = vpack.c.b16 %v3958, %v3957
    %v3994 = vpack.c.b16 %v3960, %v3959
    %v3995 = vpack.c.b16 %v3962, %v3961
    %v3996 = vpack.c.b16 %v3964, %v3963
    %v3997 = vpack.c.b16 %v3966, %v3965
    %v3998 = vpack.c.b16 %v3968, %v3967
    %v3999 = vpack.c.b16 %v3970, %v3969
    %v4000 = vpack.c.b16 %v3972, %v3971
    %v4001 = vpack.c.b16 %v3974, %v3973
    %v4002 = vpack.c.b16 %v3976, %v3975
    %v4003 = vpack.c.b16 %v3978, %v3977
    %v4004 = vpack.c.b16 %v3980, %v3979
    %v4005 = vpack.c.b16 %v3982, %v3981
    %v4006 = vpack.c.b16 %v3984, %v3983
    %v4007 = vpack.c.b16 %v3986, %v3985
    %v4008 = vpack.c.b16 %v3988, %v3987
    %v4009 = vpack.c.b16 %v3990, %v3989
    %v4029 = vsel %vm391, %v3911, 0
    %v4032 = vsel %vm395, %v4009, 0
    %4034 = vmatprep.subr.bf16.mxu0 0
    %4035 = vmatpush1.bf16.msra.mxu0 %v3998
    %4036 = vmatprep.subr.bf16.mxu0 0
    %4037 = vmatpush1.bf16.msra.mxu0 %v3997
    %4038 = vmatprep.subr.bf16.mxu0 0
    %4039 = vmatpush1.bf16.msra.mxu0 %v3996
    %4040 = vmatprep.subr.bf16.mxu0 0
    %4041 = vmatpush1.bf16.msra.mxu0 %v3995
    %4042 = vmatprep.subr.bf16.mxu0 0
    %4043 = vmatpush1.bf16.msra.mxu0 %v3994
    %4044 = vmatprep.subr.bf16.mxu0 0
    %4045 = vmatpush1.bf16.msra.mxu0 %v3993
    %4046 = vmatprep.subr.bf16.mxu0 0
    %4047 = vmatpush1.bf16.msra.mxu0 %v3992
    %4048 = vmatprep.subr.bf16.mxu0 0
    %4049 = vmatpush1.bf16.msra.mxu0 %v3991
    %4050 = vmatprep.subr.bf16.mxu0 0
    %4051 = vmatpush2.bf16.msra.mxu0 %v4006
    %4052 = vmatprep.subr.bf16.mxu0 0
    %4053 = vmatpush2.bf16.msra.mxu0 %v4005
    %4054 = vmatprep.subr.bf16.mxu0 0
    %4055 = vmatpush2.bf16.msra.mxu0 %v4004
    %4056 = vmatprep.subr.bf16.mxu0 0
    %4057 = vmatpush2.bf16.msra.mxu0 %v4003
    %4058 = vmatprep.subr.bf16.mxu0 0
    %4059 = vmatpush2.bf16.msra.mxu0 %v4002
    %4060 = vmatprep.subr.bf16.mxu0 0
    %4061 = vmatpush2.bf16.msra.mxu0 %v4001
    %4062 = vmatprep.subr.bf16.mxu0 0
    %4063 = vmatpush2.bf16.msra.mxu0 %v4000
    %4064 = vmatprep.subr.bf16.mxu0 0
    %4065 = vmatpush2.bf16.msra.mxu0 %v3999
    %4066 = vmatprep.mubr.bf16.mxu0 %v3912
    %4067 = vmatmul.mubr.bf16.gmra.mxu0 %v3910
    %v4068 = vpop.f32.mrf.mxu0
    %v4069 = vadd.f32 0.0, %v4068
    %v4070 = vpop.f32.mrf.mxu0
    %v4071 = vpop.f32.mrf.mxu0
    %v4072 = vadd.f32 0.0, %v4071
    %v4073 = vpop.f32.mrf.mxu0
    %4074 = vdwg.mxu0
    %4075 = vmatprep.subr.bf16.mxu0 0
    %4076 = vmatpush1.bf16.msra.mxu0 0
    %4077 = vmatprep.subr.bf16.mxu0 0
    %4078 = vmatpush1.bf16.msra.mxu0 0
    %4079 = vmatprep.subr.bf16.mxu0 0
    %4080 = vmatpush1.bf16.msra.mxu0 0
    %4081 = vmatprep.subr.bf16.mxu0 0
    %4082 = vmatpush1.bf16.msra.mxu0 0
    %4083 = vmatprep.subr.bf16.mxu0 0
    %4084 = vmatpush1.bf16.msra.mxu0 0
    %4085 = vmatprep.subr.bf16.mxu0 0
    %4086 = vmatpush1.bf16.msra.mxu0 %v4032
    %4087 = vmatprep.subr.bf16.mxu0 0
    %4088 = vmatpush1.bf16.msra.mxu0 %v4008
    %4089 = vmatprep.subr.bf16.mxu0 0
    %4090 = vmatpush1.bf16.msra.mxu0 %v4007
    %4091 = vmatprep.subr.bf16.mxu0 0
    %4092 = vmatpush2.bf16.msra.mxu0 0
    %4093 = vmatprep.subr.bf16.mxu0 0
    %4094 = vmatpush2.bf16.msra.mxu0 0
    %4095 = vmatprep.subr.bf16.mxu0 0
    %4096 = vmatpush2.bf16.msra.mxu0 0
    %4097 = vmatprep.subr.bf16.mxu0 0
    %4098 = vmatpush2.bf16.msra.mxu0 0
    %4099 = vmatprep.subr.bf16.mxu0 0
    %4100 = vmatpush2.bf16.msra.mxu0 0
    %4101 = vmatprep.subr.bf16.mxu0 0
    %4102 = vmatpush2.bf16.msra.mxu0 0
    %4103 = vmatprep.subr.bf16.mxu0 0
    %4104 = vmatpush2.bf16.msra.mxu0 0
    %4105 = vmatprep.subr.bf16.mxu0 0
    %4106 = vmatpush2.bf16.msra.mxu0 0
    %4107 = vmatprep.mubr.bf16.mxu0 0
    %4108 = vmatmul.mubr.bf16.gmra.mxu0 %v4029
    %v4109 = vpop.f32.mrf.mxu0
    %v4110 = vadd.f32 %v4069, %v4109
    %v4111 = vpop.f32.mrf.mxu0
    %v4112 = vpop.f32.mrf.mxu0
    %v4113 = vadd.f32 %v4072, %v4112
    %v4114 = vpop.f32.mrf.mxu0
    %4115 = vdwg.mxu0
    %v4118 = vcombine.high %v4110, %v4110
    %v4120 = vunpack.c.l.s4 1966171168
    %v4121 = vunpack.c.0.s8 %v4120
    %v4122 = vlaneseq
    %v4123 = vshrl.u32 %v4122, 7
    %v4124 = vsub.s32 %v4121, %v4123
    %v4125 = vrot.slane %v4110, %v4124
    %v4127 = vunpack.c.l.s4 1966171168
    %v4128 = vunpack.c.0.s8 %v4127
    %v4129 = vlaneseq
    %v4130 = vshrl.u32 %v4129, 7
    %v4131 = vsub.s32 %v4128, %v4130
    %v4132 = vrot.slane %v4118, %v4131
    %v4133 = vcombine.high %v4125, %v4125
    %v4134 = vcombine.high %v4132, %v4132
    %v4136 = vunpack.c.l.s4 1966171168
    %v4137 = vunpack.c.0.s8 %v4136
    %v4138 = vlaneseq
    %v4139 = vshrl.u32 %v4138, 7
    %v4140 = vsub.s32 %v4137, %v4139
    %v4141 = vrot.slane %v4125, %v4140
    %v4143 = vunpack.c.l.s4 1966171168
    %v4144 = vunpack.c.0.s8 %v4143
    %v4145 = vlaneseq
    %v4146 = vshrl.u32 %v4145, 7
    %v4147 = vsub.s32 %v4144, %v4146
    %v4148 = vrot.slane %v4132, %v4147
    %v4150 = vunpack.c.l.s4 1966171168
    %v4151 = vunpack.c.0.s8 %v4150
    %v4152 = vlaneseq
    %v4153 = vshrl.u32 %v4152, 7
    %v4154 = vsub.s32 %v4151, %v4153
    %v4155 = vrot.slane %v4133, %v4154
    %v4157 = vunpack.c.l.s4 1966171168
    %v4158 = vunpack.c.0.s8 %v4157
    %v4159 = vlaneseq
    %v4160 = vshrl.u32 %v4159, 7
    %v4161 = vsub.s32 %v4158, %v4160
    %v4162 = vrot.slane %v4134, %v4161
    %v4163 = vcombine.high %v4141, %v4141
    %v4164 = vcombine.high %v4148, %v4148
    %v4165 = vcombine.high %v4155, %v4155
    %v4166 = vcombine.high %v4162, %v4162
    %v4168 = vunpack.c.l.s4 1966171168
    %v4169 = vunpack.c.0.s8 %v4168
    %v4170 = vlaneseq
    %v4171 = vshrl.u32 %v4170, 7
    %v4172 = vsub.s32 %v4169, %v4171
    %v4173 = vrot.slane %v4113, %v4172
    %v4174 = vcombine.high %v4173, %v4173
    %v4176 = vunpack.c.l.s4 1966171168
    %v4177 = vunpack.c.0.s8 %v4176
    %v4178 = vlaneseq
    %v4179 = vshrl.u32 %v4178, 7
    %v4180 = vsub.s32 %v4177, %v4179
    %v4181 = vrot.slane %v4173, %v4180
    %v4183 = vunpack.c.l.s4 1966171168
    %v4184 = vunpack.c.0.s8 %v4183
    %v4185 = vlaneseq
    %v4186 = vshrl.u32 %v4185, 7
    %v4187 = vsub.s32 %v4184, %v4186
    %v4188 = vrot.slane %v4174, %v4187
    %v4199 = vadd.f32 %v3720, %v4141
    %v4200 = vadd.f32 %v3721, %v4155
    %v4201 = vadd.f32 %v3722, %v4163
    %v4202 = vadd.f32 %v3723, %v4165
    %v4203 = vadd.f32 %v3724, %v4148
    %v4204 = vadd.f32 %v3725, %v4162
    %v4205 = vadd.f32 %v3726, %v4164
    %v4206 = vadd.f32 %v3727, %v4166
    %v4207 = vadd.f32 %v3728, %v4181
    %v4208 = vadd.f32 %v3729, %v4188
    %v4219 = vcombine.low %v4199, %v4200
    %v4220 = vcombine.low %v4201, %v4202
    %v4222 = vunpack.c.l.s4 1966171168
    %v4223 = vunpack.c.0.s8 %v4222
    %v4224 = vlaneseq
    %v4225 = vshrl.u32 %v4224, 7
    %v4226 = vsub.s32 %v4223, %v4225
    %v4227 = vrot.slane %v4219, %v4226
    %v4229 = vunpack.c.l.s4 1966171168
    %v4230 = vunpack.c.0.s8 %v4229
    %v4231 = vlaneseq
    %v4232 = vshrl.u32 %v4231, 7
    %v4233 = vsub.s32 %v4230, %v4232
    %v4234 = vrot.slane %v4220, %v4233
    %v4236 = vunpack.c.l.s4 1966171168
    %v4237 = vunpack.c.0.s8 %v4236
    %v4238 = vlaneseq
    %v4239 = vshrl.u32 %v4238, 7
    %v4240 = vsub.s32 %v4237, %v4239
    %v4241 = vrot.slane %v4203, %v4240
    %v4242 = vcombine.low %v4227, %v4234
    %v4244 = vunpack.c.l.s4 1966171168
    %v4245 = vunpack.c.0.s8 %v4244
    %v4246 = vlaneseq
    %v4247 = vshrl.u32 %v4246, 7
    %v4248 = vsub.s32 %v4245, %v4247
    %v4249 = vrot.slane %v4242, %v4248
    %v4251 = vunpack.c.l.s4 1966171168
    %v4252 = vunpack.c.0.s8 %v4251
    %v4253 = vlaneseq
    %v4254 = vshrl.u32 %v4253, 7
    %v4255 = vsub.s32 %v4252, %v4254
    %v4256 = vrot.slane %v4241, %v4255
    %v4257 = vcombine.low %v4249, %v4256
    %v4258 = vcombine.low %v4204, %v4205
    %v4259 = vcombine.low %v4206, %v4207
    %v4261 = vunpack.c.l.s4 1966171168
    %v4262 = vunpack.c.0.s8 %v4261
    %v4263 = vlaneseq
    %v4264 = vshrl.u32 %v4263, 7
    %v4265 = vsub.s32 %v4262, %v4264
    %v4266 = vrot.slane %v4258, %v4265
    %v4268 = vunpack.c.l.s4 1966171168
    %v4269 = vunpack.c.0.s8 %v4268
    %v4270 = vlaneseq
    %v4271 = vshrl.u32 %v4270, 7
    %v4272 = vsub.s32 %v4269, %v4271
    %v4273 = vrot.slane %v4259, %v4272
    %v4275 = vunpack.c.l.s4 1966171168
    %v4276 = vunpack.c.0.s8 %v4275
    %v4277 = vlaneseq
    %v4278 = vshrl.u32 %v4277, 7
    %v4279 = vsub.s32 %v4276, %v4278
    %v4280 = vrot.slane %v4208, %v4279
    %v4281 = vcombine.low %v4266, %v4273
    %v4283 = vunpack.c.l.s4 1966171168
    %v4284 = vunpack.c.0.s8 %v4283
    %v4285 = vlaneseq
    %v4286 = vshrl.u32 %v4285, 7
    %v4287 = vsub.s32 %v4284, %v4286
    %v4288 = vrot.slane %v4281, %v4287
    %v4290 = vunpack.c.l.s4 1966171168
    %v4291 = vunpack.c.0.s8 %v4290
    %v4292 = vlaneseq
    %v4293 = vshrl.u32 %v4292, 7
    %v4294 = vsub.s32 %v4291, %v4293
    %v4295 = vrot.slane %v4280, %v4294
    %v4296 = vcombine.low %v4288, %v4295
    %vm4299 = vcmask 1044480
    %v4300 = vsel %vm4299, %v4257, -inf
    %v4301 = vrot.slane %v4300, 4
    %v4302 = vmax.f32 %v4300, %v4301
    %v4303 = vrot.slane %v4302, 2
    %v4304 = vmax.f32 %v4302, %v4303
    %v4305 = vrot.slane %v4304, 1
    %v4306 = vmax.f32 %v4304, %v4305
    %v4307 = vsel %vm4299, %v4296, -inf
    %v4308 = vrot.slane %v4307, 4
    %v4309 = vmax.f32 %v4307, %v4308
    %v4310 = vrot.slane %v4309, 2
    %v4311 = vmax.f32 %v4309, %v4310
    %v4312 = vrot.slane %v4311, 1
    %v4313 = vmax.f32 %v4311, %v4312
    %v4314 = vld [vmem:[%s6] sm:$0x1]
    %v4316 = vlaneseq
    %v4317 = vshrl.u32 %v4316, 7
    %v4318 = vsub.s32 0, %v4317
    %v4319 = vrot.slane %v4314, %v4318
    %v4321 = vadd.f32 %v4306, %v4319
    %v4322 = vadd.f32 %v4313, %v4319
    %v4323 = vmax.f32 %v4321, 0.0
    %v4324 = vmax.f32 %v4322, 0.0
    %v4325 = vld [vmem:[%s9] sm:$0xff]
    %v4326 = vld [vmem:[%s9 + $0x8] sm:$0xff]
    %v4327 = vld [vmem:[%s9 + $0x10] sm:$0xff]
    %v4328 = vld [vmem:[%s9 + $0x18] sm:$0xff]
    %v4329 = vld [vmem:[%s9 + $0x20] sm:$0xff]
    %v4330 = vld [vmem:[%s9 + $0x28] sm:$0xff]
    %v4331 = vld [vmem:[%s9 + $0x30] sm:$0xff]
    %v4332 = vld [vmem:[%s9 + $0x38] sm:$0xff]
    %v4333 = vld [vmem:[%s9 + $0x40] sm:$0xff]
    %v4334 = vld [vmem:[%s9 + $0x48] sm:$0xff]
    %v4335 = vld [vmem:[%s9 + $0x50] sm:$0xff]
    %v4336 = vld [vmem:[%s9 + $0x58] sm:$0xff]
    %v4337 = vld [vmem:[%s9 + $0x60] sm:$0xff]
    %v4338 = vld [vmem:[%s9 + $0x68] sm:$0xff]
    %v4339 = vld [vmem:[%s9 + $0x70] sm:$0xff]
    %v4340 = vld [vmem:[%s9 + $0x78] sm:$0xff]
    %v4343 = vrot.slane %v4324, 7
    %v4344 = vsel %vm2331, %v4343, %v4323
    %4346 = vmatprep.subr.mxu0 0.0
    %4347 = vmatpush1.msra.mxu0 %v4340
    %4348 = vmatprep.subr.mxu0 0.0
    %4349 = vmatpush1.msra.mxu0 %v4339
    %4350 = vmatprep.subr.mxu0 0.0
    %4351 = vmatpush1.msra.mxu0 %v4338
    %4352 = vmatprep.subr.mxu0 0.0
    %4353 = vmatpush1.msra.mxu0 %v4337
    %4354 = vmatprep.subr.mxu0 0.0
    %4355 = vmatpush1.msra.mxu0 %v4336
    %4356 = vmatprep.subr.mxu0 0.0
    %4357 = vmatpush1.msra.mxu0 %v4335
    %4358 = vmatprep.subr.mxu0 0.0
    %4359 = vmatpush1.msra.mxu0 %v4334
    %4360 = vmatprep.subr.mxu0 0.0
    %4361 = vmatpush1.msra.mxu0 %v4333
    %4362 = vmatprep.subr.mxu0 0.0
    %4363 = vmatpush1.msra.mxu0 %v4332
    %4364 = vmatprep.subr.mxu0 0.0
    %4365 = vmatpush1.msra.mxu0 %v4331
    %4366 = vmatprep.subr.mxu0 0.0
    %4367 = vmatpush1.msra.mxu0 %v4330
    %4368 = vmatprep.subr.mxu0 0.0
    %4369 = vmatpush1.msra.mxu0 %v4329
    %4370 = vmatprep.subr.mxu0 0.0
    %4371 = vmatpush1.msra.mxu0 %v4328
    %4372 = vmatprep.subr.mxu0 0.0
    %4373 = vmatpush1.msra.mxu0 %v4327
    %4374 = vmatprep.subr.mxu0 0.0
    %4375 = vmatpush1.msra.mxu0 %v4326
    %4376 = vmatprep.subr.mxu0 0.0
    %4377 = vmatpush1.msra.mxu0 %v4325
    %4378 = vmatprep.subr.mxu0 0.0
    %4379 = vmatpush2.msra.mxu0 0.0
    %4380 = vmatprep.subr.mxu0 0.0
    %4381 = vmatpush2.msra.mxu0 0.0
    %4382 = vmatprep.subr.mxu0 0.0
    %4383 = vmatpush2.msra.mxu0 0.0
    %4384 = vmatprep.subr.mxu0 0.0
    %4385 = vmatpush2.msra.mxu0 0.0
    %4386 = vmatprep.subr.mxu0 0.0
    %4387 = vmatpush2.msra.mxu0 0.0
    %4388 = vmatprep.subr.mxu0 0.0
    %4389 = vmatpush2.msra.mxu0 0.0
    %4390 = vmatprep.subr.mxu0 0.0
    %4391 = vmatpush2.msra.mxu0 0.0
    %4392 = vmatprep.subr.mxu0 0.0
    %4393 = vmatpush2.msra.mxu0 0.0
    %4394 = vmatprep.subr.mxu0 0.0
    %4395 = vmatpush2.msra.mxu0 0.0
    %4396 = vmatprep.subr.mxu0 0.0
    %4397 = vmatpush2.msra.mxu0 0.0
    %4398 = vmatprep.subr.mxu0 0.0
    %4399 = vmatpush2.msra.mxu0 0.0
    %4400 = vmatprep.subr.mxu0 0.0
    %4401 = vmatpush2.msra.mxu0 0.0
    %4402 = vmatprep.subr.mxu0 0.0
    %4403 = vmatpush2.msra.mxu0 0.0
    %4404 = vmatprep.subr.mxu0 0.0
    %4405 = vmatpush2.msra.mxu0 0.0
    %4406 = vmatprep.subr.mxu0 0.0
    %4407 = vmatpush2.msra.mxu0 0.0
    %4408 = vmatprep.subr.mxu0 0.0
    %4409 = vmatpush2.msra.mxu0 0.0
    %4410 = vmatprep.mubr.f32.mxu0 0.0
    %4411 = vmatmul.mubr.f32.gmra.mxu0 %v4344
    %v4412 = vpop.f32.mrf.mxu0
    %v4413 = vadd.f32 0.0, %v4412
    %v4414 = vpop.f32.mrf.mxu0
    %4415 = vdwg.mxu0
    %v4416 = vadd.f32 %v2476, %v4413
    %v4417 = vld [vmem:[%s10] sm:$0x1]
    %v4419 = vlaneseq
    %v4420 = vshrl.u32 %v4419, 7
    %v4421 = vsub.s32 0, %v4420
    %v4422 = vrot.slane %v4417, %v4421
    %v4424 = vadd.f32 %v4416, %v4422
    %4425 = vst [vmem:[#allocation2] sm:$0x3] %v4424
    // Predicated region
    $region46: #{tpu_custom_call.1} parent=1 // pred_check
      _
    $region47: #{tpu_custom_call.1} parent=1 // pred_check_branch
      %4427 = sbr.rel (0) target = $region49
    $region48: #{tpu_custom_call.1} parent=1 // pred_region
      %s4429 = ssub.s32 32, 32
      %4430 = vsyncadd [#allocation3], %s4429
      %s4432 = sshll.u32 [#allocation2], 4
      %s4433 = int_to_ptr.vmem [resolvable:$true] %s4432
      %4435 = dma.vmem_to_hbm [thread:$0]  %s4433, 32, %s11, [#allocation3]
    $region49: #{tpu_custom_call.1} parent=1 // pred_fallthru
      _
    // Predicated region
    $region50: #{tpu_custom_call.1} parent=1 // pred_check
      _
    $region51: #{tpu_custom_call.1} parent=1 // pred_check_branch
      %4437 = sbr.rel (0) target = $region53
    $region52: #{tpu_custom_call.1} parent=1 // pred_region
      %4438 = dma.done [#allocation3], 32
    $region53: #{tpu_custom_call.1} parent=1 // pred_fallthru
      _
    %4439 = vsyncpa [#allocation3], 1

</llo_original>
